<compile_context>
chip_gen: v5e
topology: v5e:2x2
jax: 0.10.0
libtpu: 0.0.40
codegen_flags: <defaults>
</compile_context>

<pallas_src>
import jax
import jax.numpy as jnp
from jax import lax
from jax.experimental import pallas as pl
from jax.experimental.pallas import tpu as pltpu

N_EMBD = 128          # n_embd in the PyTorch module
BLOCK_SIZE = 128      # block_size (max T)
HEAD_SIZE = 32        # head_size chosen for this synthetic instance

_NEG = -1e30          # plain Python float -> inlined literal, never a captured const
_PREC = lax.Precision.HIGHEST


def _causal_attend(q, k, v, T):
    """Single-sequence causal attention on (T,H) tiles. Scale already in q."""
    # q @ k^T without materializing a transpose: contract head dim of both.
    wei = lax.dot_general(
        q, k,
        dimension_numbers=(((1,), (1,)), ((), ())),
        preferred_element_type=jnp.float32,
        precision=_PREC,
    )                                                          # (T, T)
    row = lax.broadcasted_iota(jnp.int32, (T, T), 0)
    col = lax.broadcasted_iota(jnp.int32, (T, T), 1)
    wei = jnp.where(col <= row, wei, _NEG)                     # causal mask

    # Numerically-stable softmax, normalization deferred to after PV matmul.
    wei = wei - jnp.max(wei, axis=-1, keepdims=True)
    p = jnp.exp(wei)                                           # (T, T) unnormalized
    s = jnp.sum(p, axis=-1, keepdims=True)                     # (T, 1)
    pv = jnp.dot(p, v, preferred_element_type=jnp.float32,
                 precision=_PREC)                              # (T, H)
    return pv / s                                              # divide on small tensor


def head_kernel_fused(x_ref, wkqv_ref, o_ref):
    """Whole-batch kernel (single grid step): x (B,T,C), wkqv (C,3H), out (B,T,H)."""
    B, T, C = x_ref.shape
    H = o_ref.shape[2]

    # Fold batch into the MXU M dimension: (B*T, C) @ (C, 3H).
    x2d = x_ref[...].reshape(B * T, C)
    kqv = jnp.dot(x2d, wkqv_ref[...],
                  preferred_element_type=jnp.float32, precision=_PREC)  # (B*T, 3H)

    for b in range(B):  # tiny static unroll
        blk = kqv[b * T:(b + 1) * T, :]
        k = blk[:, 0 * H:1 * H]
        q = blk[:, 1 * H:2 * H]        # 1/sqrt(H) already folded into Wq columns
        v = blk[:, 2 * H:3 * H]
        o_ref[b] = _causal_attend(q, k, v, T)


def head_kernel_per_batch(x_ref, wkqv_ref, o_ref):
    """Per-batch kernel (grid=(B,), one batch per TensorCore on v7x)."""
    T = x_ref.shape[1]
    H = o_ref.shape[2]
    x = x_ref[0]                                               # (T, C)
    kqv = jnp.dot(x, wkqv_ref[...],
                  preferred_element_type=jnp.float32, precision=_PREC)  # (T, 3H)
    k = kqv[:, 0 * H:1 * H]
    q = kqv[:, 1 * H:2 * H]
    v = kqv[:, 2 * H:3 * H]
    o_ref[0] = _causal_attend(q, k, v, T)


def prepare_wkqv(wk, wq, wv):
    """Fuse projection weights once (init time): [Wk | Wq * H^-0.5 | Wv] -> (C, 3H)."""
    H = wq.shape[1]
    scale = float(H) ** -0.5
    return jnp.concatenate([wk, wq * scale, wv], axis=1)


def _is_dual_core_tpu():
    """v7x-class chips have 2 TensorCores; keep the B-split grid only there."""
    try:
        kind = jax.devices()[0].device_kind.lower().replace(" ", "")
    except Exception:
        return False
    return "v7" in kind or "tpu7" in kind


def head_forward(x, wkqv, use_batch_grid=None):
    """x: (B, T, C) f32; wkqv: (C, 3H) f32 fused weight from prepare_wkqv."""
    B, T, C = x.shape
    H3 = wkqv.shape[1]
    H = H3 // 3
    if use_batch_grid is None:
        use_batch_grid = _is_dual_core_tpu() and B >= 2

    if use_batch_grid:
        # v7x: one batch element per grid step, sharded across the two TCs.
        return pl.pallas_call(
            head_kernel_per_batch,
            out_shape=jax.ShapeDtypeStruct((B, T, H), jnp.float32),
            grid=(B,),
            in_specs=[
                pl.BlockSpec((1, T, C), lambda b: (b, 0, 0)),
                pl.BlockSpec((C, H3), lambda b: (0, 0)),
            ],
            out_specs=pl.BlockSpec((1, T, H), lambda b: (b, 0, 0)),
            compiler_params=pltpu.CompilerParams(
                dimension_semantics=("parallel",)),
        )(x, wkqv)

    # v5e / v6e / default: single grid step over the whole (tiny) batch.
    return pl.pallas_call(
        head_kernel_fused,
        out_shape=jax.ShapeDtypeStruct((B, T, H), jnp.float32),
        grid=(1,),
        in_specs=[
            pl.BlockSpec((B, T, C), lambda i: (0, 0, 0)),
            pl.BlockSpec((C, H3), lambda i: (0, 0)),
        ],
        out_specs=pl.BlockSpec((B, T, H), lambda i: (0, 0, 0)),
        compiler_params=pltpu.CompilerParams(
            dimension_semantics=("arbitrary",)),
    )(x, wkqv)


def reference_forward(x, wk, wq, wv):
    prec = lax.Precision.HIGHEST
    k = jnp.matmul(x, wk, precision=prec)
    q = jnp.matmul(x, wq, precision=prec)
    v = jnp.matmul(x, wv, precision=prec)
    T = x.shape[1]
    wei = jnp.matmul(q, jnp.swapaxes(k, -2, -1), precision=prec)
    wei = wei * (wk.shape[1] ** -0.5)
    mask = jnp.tril(jnp.ones((T, T), dtype=bool))
    wei = jnp.where(mask, wei, -jnp.inf)
    wei = jax.nn.softmax(wei, axis=-1)
    return jnp.matmul(wei, v, precision=prec)


if __name__ == "__main__":
    key = jax.random.PRNGKey(0)
    kx, kk, kq, kv = jax.random.split(key, 4)

    B, T, C, H = 2, BLOCK_SIZE, N_EMBD, HEAD_SIZE

    x = jax.random.normal(kx, (B, T, C), dtype=jnp.float32)
    # nn.Linear(n_embd, head_size, bias=False) weight has shape (H, C);
    # initialize deterministically (uniform like PyTorch default) and transpose.
    bound = 1.0 / (C ** 0.5)
    wk = jax.random.uniform(kk, (H, C), jnp.float32, -bound, bound).T
    wq = jax.random.uniform(kq, (H, C), jnp.float32, -bound, bound).T
    wv = jax.random.uniform(kv, (H, C), jnp.float32, -bound, bound).T

    # Build the fused/pre-scaled weight ONCE (init-time), outside the hot path.
    wkqv = prepare_wkqv(wk, wq, wv)

    out = head_forward(x, wkqv)
    out = jax.block_until_ready(out)

    ref = reference_forward(x, wk, wq, wv)
    assert out.shape == (B, T, H)
    assert jnp.allclose(out, ref, atol=1e-4, rtol=1e-4)

    print("KERNEL_OK")
</pallas_src>

<mosaic_0001>
module attributes {stable_mosaic.version = 11 : i64} {
  func.func @head_kernel_fused(%arg0: i32, %arg1: memref<2x128x128xf32, #tpu.memory_space<vmem>>, %arg2: memref<128x96xf32, #tpu.memory_space<vmem>>, %arg3: memref<2x128x32xf32, #tpu.memory_space<vmem>>) attributes {dimension_semantics = [#tpu.dimension_semantics<arbitrary>], iteration_bounds = array<i64: 1>, scalar_prefetch = 0 : i64, scratch_operands = 0 : i64, tpu.core_type = #tpu.core_type<tc>, window_params = [{pipeline_mode = #tpu.pipeline_mode<synchronous>, transform_indices = @transform_0, window_bounds = array<i64: 2, 128, 128>}, {pipeline_mode = #tpu.pipeline_mode<synchronous>, transform_indices = @transform_1, window_bounds = array<i64: 128, 96>}, {pipeline_mode = #tpu.pipeline_mode<synchronous>, transform_indices = @transform_2, window_bounds = array<i64: 2, 128, 32>}]} {
    %c0 = arith.constant 0 : index
    %c0_0 = arith.constant 0 : index
    %c0_1 = arith.constant 0 : index
    %0 = vector.load %arg1[%c0, %c0_0, %c0_1] : memref<2x128x128xf32, #tpu.memory_space<vmem>>, vector<2x128x128xf32>
    %1 = vector.shape_cast %0 : vector<2x128x128xf32> to vector<256x128xf32>
    %c0_2 = arith.constant 0 : index
    %c0_3 = arith.constant 0 : index
    %2 = vector.load %arg2[%c0_2, %c0_3] : memref<128x96xf32, #tpu.memory_space<vmem>>, vector<128x96xf32>
    %cst = arith.constant dense<0.000000e+00> : vector<256x96xf32>
    %3 = tpu.matmul %1, %2, %cst {dimension_numbers = #tpu.dot_dimension_numbers<[1], [0], [0], [1], [0, 0, 1, 1], [], []>, precision = #tpu.contract_precision<fp32>} : vector<256x128xf32>, vector<128x96xf32>, vector<256x96xf32> -> vector<256x96xf32>
    %4 = vector.extract_strided_slice %3 {offsets = [0, 0], sizes = [128, 96], strides = [1, 1]} : vector<256x96xf32> to vector<128x96xf32>
    %5 = vector.extract_strided_slice %4 {offsets = [0, 0], sizes = [128, 32], strides = [1, 1]} : vector<128x96xf32> to vector<128x32xf32>
    %6 = vector.extract_strided_slice %4 {offsets = [0, 32], sizes = [128, 32], strides = [1, 1]} : vector<128x96xf32> to vector<128x32xf32>
    %7 = vector.extract_strided_slice %4 {offsets = [0, 64], sizes = [128, 32], strides = [1, 1]} : vector<128x96xf32> to vector<128x32xf32>
    %cst_4 = arith.constant dense<0.000000e+00> : vector<128x128xf32>
    %8 = tpu.matmul %6, %5, %cst_4 {dimension_numbers = #tpu.dot_dimension_numbers<[1], [1], [0], [0], [0, 0, 1, 0], [], []>, precision = #tpu.contract_precision<fp32>} : vector<128x32xf32>, vector<128x32xf32>, vector<128x128xf32> -> vector<128x128xf32>
    %9 = tpu.iota {dimensions = array<i32: 0>} : vector<128x128xi32>
    %10 = tpu.iota {dimensions = array<i32: 1>} : vector<128x128xi32>
    %11 = arith.cmpi sle, %10, %9 : vector<128x128xi32>
    %cst_5 = arith.constant -1.000000e+30 : f32
    %12 = vector.broadcast %cst_5 : f32 to vector<128x128xf32>
    %13 = arith.select %11, %8, %12 : vector<128x128xi1>, vector<128x128xf32>
    %cst_6 = arith.constant dense<0xFF800000> : vector<128xf32>
    %14 = vector.multi_reduction <maximumf>, %13, %cst_6 [1] : vector<128x128xf32> to vector<128xf32>
    %15 = vector.shape_cast %14 : vector<128xf32> to vector<128x1xf32>
    %16 = vector.broadcast %15 : vector<128x1xf32> to vector<128x128xf32>
    %17 = arith.subf %13, %16 : vector<128x128xf32>
    %18 = math.exp %17 : vector<128x128xf32>
    %cst_7 = arith.constant dense<0.000000e+00> : vector<128xf32>
    %19 = vector.multi_reduction <add>, %18, %cst_7 [1] : vector<128x128xf32> to vector<128xf32>
    %20 = vector.shape_cast %19 : vector<128xf32> to vector<128x1xf32>
    %cst_8 = arith.constant dense<0.000000e+00> : vector<128x32xf32>
    %21 = tpu.matmul %18, %7, %cst_8 {dimension_numbers = #tpu.dot_dimension_numbers<[1], [0], [0], [1], [0, 0, 1, 1], [], []>, precision = #tpu.contract_precision<fp32>} : vector<128x128xf32>, vector<128x32xf32>, vector<128x32xf32> -> vector<128x32xf32>
    %22 = vector.broadcast %20 : vector<128x1xf32> to vector<128x32xf32>
    %23 = arith.divf %21, %22 : vector<128x32xf32>
    %c0_9 = arith.constant 0 : index
    %c0_10 = arith.constant 0 : index
    %c0_11 = arith.constant 0 : index
    %24 = vector.load %arg3[%c0_9, %c0_10, %c0_11] : memref<2x128x32xf32, #tpu.memory_space<vmem>>, vector<1x128x32xf32>
    %25 = vector.shape_cast %24 : vector<1x128x32xf32> to vector<128x32xf32>
    %26 = vector.shape_cast %23 : vector<128x32xf32> to vector<1x128x32xf32>
    tpu.vector_store %arg3[%c0_9, %c0_10, %c0_11], %26 {strides = array<i32>} : memref<2x128x32xf32, #tpu.memory_space<vmem>>, vector<1x128x32xf32>,
    %27 = vector.extract_strided_slice %3 {offsets = [128, 0], sizes = [128, 96], strides = [1, 1]} : vector<256x96xf32> to vector<128x96xf32>
    %28 = vector.extract_strided_slice %27 {offsets = [0, 0], sizes = [128, 32], strides = [1, 1]} : vector<128x96xf32> to vector<128x32xf32>
    %29 = vector.extract_strided_slice %27 {offsets = [0, 32], sizes = [128, 32], strides = [1, 1]} : vector<128x96xf32> to vector<128x32xf32>
    %30 = vector.extract_strided_slice %27 {offsets = [0, 64], sizes = [128, 32], strides = [1, 1]} : vector<128x96xf32> to vector<128x32xf32>
    %cst_12 = arith.constant dense<0.000000e+00> : vector<128x128xf32>
    %31 = tpu.matmul %29, %28, %cst_12 {dimension_numbers = #tpu.dot_dimension_numbers<[1], [1], [0], [0], [0, 0, 1, 0], [], []>, precision = #tpu.contract_precision<fp32>} : vector<128x32xf32>, vector<128x32xf32>, vector<128x128xf32> -> vector<128x128xf32>
    %32 = tpu.iota {dimensions = array<i32: 0>} : vector<128x128xi32>
    %33 = tpu.iota {dimensions = array<i32: 1>} : vector<128x128xi32>
    %34 = arith.cmpi sle, %33, %32 : vector<128x128xi32>
    %cst_13 = arith.constant -1.000000e+30 : f32
    %35 = vector.broadcast %cst_13 : f32 to vector<128x128xf32>
    %36 = arith.select %34, %31, %35 : vector<128x128xi1>, vector<128x128xf32>
    %cst_14 = arith.constant dense<0xFF800000> : vector<128xf32>
    %37 = vector.multi_reduction <maximumf>, %36, %cst_14 [1] : vector<128x128xf32> to vector<128xf32>
    %38 = vector.shape_cast %37 : vector<128xf32> to vector<128x1xf32>
    %39 = vector.broadcast %38 : vector<128x1xf32> to vector<128x128xf32>
    %40 = arith.subf %36, %39 : vector<128x128xf32>
    %41 = math.exp %40 : vector<128x128xf32>
    %cst_15 = arith.constant dense<0.000000e+00> : vector<128xf32>
    %42 = vector.multi_reduction <add>, %41, %cst_15 [1] : vector<128x128xf32> to vector<128xf32>
    %43 = vector.shape_cast %42 : vector<128xf32> to vector<128x1xf32>
    %cst_16 = arith.constant dense<0.000000e+00> : vector<128x32xf32>
    %44 = tpu.matmul %41, %30, %cst_16 {dimension_numbers = #tpu.dot_dimension_numbers<[1], [0], [0], [1], [0, 0, 1, 1], [], []>, precision = #tpu.contract_precision<fp32>} : vector<128x128xf32>, vector<128x32xf32>, vector<128x32xf32> -> vector<128x32xf32>
    %45 = vector.broadcast %43 : vector<128x1xf32> to vector<128x32xf32>
    %46 = arith.divf %44, %45 : vector<128x32xf32>
    %c1 = arith.constant 1 : index
    %c0_17 = arith.constant 0 : index
    %c0_18 = arith.constant 0 : index
    %47 = vector.load %arg3[%c1, %c0_17, %c0_18] : memref<2x128x32xf32, #tpu.memory_space<vmem>>, vector<1x128x32xf32>
    %48 = vector.shape_cast %47 : vector<1x128x32xf32> to vector<128x32xf32>
    %49 = vector.shape_cast %46 : vector<128x32xf32> to vector<1x128x32xf32>
    tpu.vector_store %arg3[%c1, %c0_17, %c0_18], %49 {strides = array<i32>} : memref<2x128x32xf32, #tpu.memory_space<vmem>>, vector<1x128x32xf32>,
    return
  }
  func.func @transform_0(%arg0: i32) -> (i32, i32, i32) {
    %c0_i32 = arith.constant 0 : i32
    %c0_i32_0 = arith.constant 0 : i32
    %c0_i32_1 = arith.constant 0 : i32
    %c0_i32_2 = arith.constant 0 : i32
    return %c0_i32, %c0_i32_0, %c0_i32_1 : i32, i32, i32
  }
  func.func @transform_1(%arg0: i32) -> (i32, i32) {
    %c0_i32 = arith.constant 0 : i32
    %c0_i32_0 = arith.constant 0 : i32
    %c0_i32_1 = arith.constant 0 : i32
    return %c0_i32, %c0_i32_0 : i32, i32
  }
  func.func @transform_2(%arg0: i32) -> (i32, i32, i32) {
    %c0_i32 = arith.constant 0 : i32
    %c0_i32_0 = arith.constant 0 : i32
    %c0_i32_1 = arith.constant 0 : i32
    %c0_i32_2 = arith.constant 0 : i32
    return %c0_i32, %c0_i32_0, %c0_i32_1 : i32, i32, i32
  }
}

</mosaic_0001>

<llo_original>
// kernel: tpu_custom_call.1
$region0: #{tpu_custom_call.1}
  #allocation0 [shape = 'u32[]', space=smem, size = 0x4, offset = 0x4, fixed_abs, tag = 'smem constant byte address 0x4 - core index']
  #allocation1 [shape = 'u32[72,128]{1,0:T(1,128)}', space=vmem, size = 0x9000, scoped, tag = 'internal scratch']
  %s0 = inlined_call_operand.hbm [shape: f32[2,128,128], index: 0, kind: input, shape index: {}]
  %s1 = inlined_call_operand.vmem [shape: f32[128,96], index: 1, kind: input, shape index: {}]
  %s2 = inlined_call_operand.vmem [shape: f32[2,128,32], index: 2, kind: output, shape index: {}]
  %s3 = sld [smem:[#allocation0]]
  $region22: #{tpu_custom_call.1} parent=0
    _
  %s5 = ssub.s32 1, %s3
  %s6 = scalar_select 0, %s5, %s3
  $region1: #{tpu_custom_call.1} parent=0
    #allocation2 [shape = 'u8[131072]{0}', space=vmem, size = 0x20000, scoped, tag = 'input window, operand 0, single buffered']
    #allocation3 [shape = 's32[1]{0}', space=sflag, size = 0x4, scoped, tag = 'scoped memory for tpu_custom_call.1']
    %7 = vsyncpa [#allocation3], 0
    // Predicated region
    $region2: #{tpu_custom_call.1} parent=1 // pred_check
      _
    $region3: #{tpu_custom_call.1} parent=1 // pred_check_branch
      %9 = sbr.rel (0) target = $region5
    $region4: #{tpu_custom_call.1} parent=1 // pred_region
      %11 = vsyncadd [#allocation3], 0
      %s12 = sshll.u32 %s0, 4
      %s13 = int_to_ptr.hbm [resolvable:$true] %s12
      %s14 = sshll.u32 [#allocation2], 4
      %s15 = int_to_ptr.vmem [resolvable:$true] %s14
      %20 = dma.hbm_to_vmem [thread:$0]  %s13, 4096, %s15, [#allocation3], 128, 128, 8
    $region5: #{tpu_custom_call.1} parent=1 // pred_fallthru
      _
    // Predicated region
    $region6: #{tpu_custom_call.1} parent=1 // pred_check
      _
    $region7: #{tpu_custom_call.1} parent=1 // pred_check_branch
      %22 = sbr.rel (0) target = $region9
    $region8: #{tpu_custom_call.1} parent=1 // pred_region
      _
    $region9: #{tpu_custom_call.1} parent=1 // pred_fallthru
      _
    // Predicated region
    $region10: #{tpu_custom_call.1} parent=1 // pred_check
      _
    $region11: #{tpu_custom_call.1} parent=1 // pred_check_branch
      %24 = sbr.rel (0) target = $region13
    $region12: #{tpu_custom_call.1} parent=1 // pred_region
      %26 = dma.done [#allocation3], 4096
    $region13: #{tpu_custom_call.1} parent=1 // pred_fallthru
      _
    %v27 = vld [vmem:[#allocation2] sm:$0xff]
    %v28 = vld [vmem:[#allocation2 + $0x8] sm:$0xff]
    %v29 = vld [vmem:[#allocation2 + $0x10] sm:$0xff]
    %v30 = vld [vmem:[#allocation2 + $0x18] sm:$0xff]
    %v31 = vld [vmem:[#allocation2 + $0x20] sm:$0xff]
    %v32 = vld [vmem:[#allocation2 + $0x28] sm:$0xff]
    %v33 = vld [vmem:[#allocation2 + $0x30] sm:$0xff]
    %v34 = vld [vmem:[#allocation2 + $0x38] sm:$0xff]
    %v35 = vld [vmem:[#allocation2 + $0x40] sm:$0xff]
    %v36 = vld [vmem:[#allocation2 + $0x48] sm:$0xff]
    %v37 = vld [vmem:[#allocation2 + $0x50] sm:$0xff]
    %v38 = vld [vmem:[#allocation2 + $0x58] sm:$0xff]
    %v39 = vld [vmem:[#allocation2 + $0x60] sm:$0xff]
    %v40 = vld [vmem:[#allocation2 + $0x68] sm:$0xff]
    %v41 = vld [vmem:[#allocation2 + $0x70] sm:$0xff]
    %v42 = vld [vmem:[#allocation2 + $0x78] sm:$0xff]
    %v43 = vld [vmem:[#allocation2 + $0x80] sm:$0xff]
    %v44 = vld [vmem:[#allocation2 + $0x88] sm:$0xff]
    %v45 = vld [vmem:[#allocation2 + $0x90] sm:$0xff]
    %v46 = vld [vmem:[#allocation2 + $0x98] sm:$0xff]
    %v47 = vld [vmem:[#allocation2 + $0xa0] sm:$0xff]
    %v48 = vld [vmem:[#allocation2 + $0xa8] sm:$0xff]
    %v49 = vld [vmem:[#allocation2 + $0xb0] sm:$0xff]
    %v50 = vld [vmem:[#allocation2 + $0xb8] sm:$0xff]
    %v51 = vld [vmem:[#allocation2 + $0xc0] sm:$0xff]
    %v52 = vld [vmem:[#allocation2 + $0xc8] sm:$0xff]
    %v53 = vld [vmem:[#allocation2 + $0xd0] sm:$0xff]
    %v54 = vld [vmem:[#allocation2 + $0xd8] sm:$0xff]
    %v55 = vld [vmem:[#allocation2 + $0xe0] sm:$0xff]
    %v56 = vld [vmem:[#allocation2 + $0xe8] sm:$0xff]
    %v57 = vld [vmem:[#allocation2 + $0xf0] sm:$0xff]
    %v58 = vld [vmem:[#allocation2 + $0xf8] sm:$0xff]
    %v59 = vld [vmem:[%s1] sm:$0xff]
    %v60 = vld [vmem:[%s1 + $0x8] sm:$0xff]
    %v61 = vld [vmem:[%s1 + $0x10] sm:$0xff]
    %v62 = vld [vmem:[%s1 + $0x18] sm:$0xff]
    %v63 = vld [vmem:[%s1 + $0x20] sm:$0xff]
    %v64 = vld [vmem:[%s1 + $0x28] sm:$0xff]
    %v65 = vld [vmem:[%s1 + $0x30] sm:$0xff]
    %v66 = vld [vmem:[%s1 + $0x38] sm:$0xff]
    %v67 = vld [vmem:[%s1 + $0x40] sm:$0xff]
    %v68 = vld [vmem:[%s1 + $0x48] sm:$0xff]
    %v69 = vld [vmem:[%s1 + $0x50] sm:$0xff]
    %v70 = vld [vmem:[%s1 + $0x58] sm:$0xff]
    %v71 = vld [vmem:[%s1 + $0x60] sm:$0xff]
    %v72 = vld [vmem:[%s1 + $0x68] sm:$0xff]
    %v73 = vld [vmem:[%s1 + $0x70] sm:$0xff]
    %v74 = vld [vmem:[%s1 + $0x78] sm:$0xff]
    %v75 = vand.u32 %v74, 4294901760
    %76 = vmatpush.msra.mxu0 %v75
    %v77 = vand.u32 %v73, 4294901760
    %78 = vmatpush.msra.mxu0 %v77
    %v79 = vand.u32 %v72, 4294901760
    %80 = vmatpush.msra.mxu0 %v79
    %v81 = vand.u32 %v71, 4294901760
    %82 = vmatpush.msra.mxu0 %v81
    %v83 = vand.u32 %v70, 4294901760
    %84 = vmatpush.msra.mxu0 %v83
    %v85 = vand.u32 %v69, 4294901760
    %86 = vmatpush.msra.mxu0 %v85
    %v87 = vand.u32 %v68, 4294901760
    %88 = vmatpush.msra.mxu0 %v87
    %v89 = vand.u32 %v67, 4294901760
    %90 = vmatpush.msra.mxu0 %v89
    %v91 = vand.u32 %v66, 4294901760
    %92 = vmatpush.msra.mxu0 %v91
    %v93 = vand.u32 %v65, 4294901760
    %94 = vmatpush.msra.mxu0 %v93
    %v95 = vand.u32 %v64, 4294901760
    %96 = vmatpush.msra.mxu0 %v95
    %v97 = vand.u32 %v63, 4294901760
    %98 = vmatpush.msra.mxu0 %v97
    %v99 = vand.u32 %v62, 4294901760
    %100 = vmatpush.msra.mxu0 %v99
    %v101 = vand.u32 %v61, 4294901760
    %102 = vmatpush.msra.mxu0 %v101
    %v103 = vand.u32 %v60, 4294901760
    %104 = vmatpush.msra.mxu0 %v103
    %v105 = vand.u32 %v59, 4294901760
    %106 = vmatpush.msra.mxu0 %v105
    %v107 = vand.u32 %v27, 4294901760
    %v108 = vsub.f32 %v27, %v107
    %v109 = vand.u32 %v108, 4294901760
    %v110 = vsub.f32 %v108, %v109
    %v111 = vand.u32 %v110, 4294901760
    %112 = vmatmul.f32.gmra.mxu0 %v111
    %v113 = vpop.f32.mrf.mxu0
    %v114 = vadd.f32 0.0, %v113
    %v115 = vand.u32 %v28, 4294901760
    %v116 = vsub.f32 %v28, %v115
    %v117 = vand.u32 %v116, 4294901760
    %v118 = vsub.f32 %v116, %v117
    %v119 = vand.u32 %v118, 4294901760
    %120 = vmatmul.f32.gmra.mxu0 %v119
    %v121 = vpop.f32.mrf.mxu0
    %v122 = vadd.f32 0.0, %v121
    %v123 = vand.u32 %v29, 4294901760
    %v124 = vsub.f32 %v29, %v123
    %v125 = vand.u32 %v124, 4294901760
    %v126 = vsub.f32 %v124, %v125
    %v127 = vand.u32 %v126, 4294901760
    %128 = vmatmul.f32.gmra.mxu0 %v127
    %v129 = vpop.f32.mrf.mxu0
    %v130 = vadd.f32 0.0, %v129
    %v131 = vand.u32 %v30, 4294901760
    %v132 = vsub.f32 %v30, %v131
    %v133 = vand.u32 %v132, 4294901760
    %v134 = vsub.f32 %v132, %v133
    %v135 = vand.u32 %v134, 4294901760
    %136 = vmatmul.f32.gmra.mxu0 %v135
    %v137 = vpop.f32.mrf.mxu0
    %v138 = vadd.f32 0.0, %v137
    %v139 = vand.u32 %v31, 4294901760
    %v140 = vsub.f32 %v31, %v139
    %v141 = vand.u32 %v140, 4294901760
    %v142 = vsub.f32 %v140, %v141
    %v143 = vand.u32 %v142, 4294901760
    %144 = vmatmul.f32.gmra.mxu0 %v143
    %v145 = vpop.f32.mrf.mxu0
    %v146 = vadd.f32 0.0, %v145
    %v147 = vand.u32 %v32, 4294901760
    %v148 = vsub.f32 %v32, %v147
    %v149 = vand.u32 %v148, 4294901760
    %v150 = vsub.f32 %v148, %v149
    %v151 = vand.u32 %v150, 4294901760
    %152 = vmatmul.f32.gmra.mxu0 %v151
    %v153 = vpop.f32.mrf.mxu0
    %v154 = vadd.f32 0.0, %v153
    %v155 = vand.u32 %v33, 4294901760
    %v156 = vsub.f32 %v33, %v155
    %v157 = vand.u32 %v156, 4294901760
    %v158 = vsub.f32 %v156, %v157
    %v159 = vand.u32 %v158, 4294901760
    %160 = vmatmul.f32.gmra.mxu0 %v159
    %v161 = vpop.f32.mrf.mxu0
    %v162 = vadd.f32 0.0, %v161
    %v163 = vand.u32 %v34, 4294901760
    %v164 = vsub.f32 %v34, %v163
    %v165 = vand.u32 %v164, 4294901760
    %v166 = vsub.f32 %v164, %v165
    %v167 = vand.u32 %v166, 4294901760
    %168 = vmatmul.f32.gmra.mxu0 %v167
    %v169 = vpop.f32.mrf.mxu0
    %v170 = vadd.f32 0.0, %v169
    %v171 = vand.u32 %v35, 4294901760
    %v172 = vsub.f32 %v35, %v171
    %v173 = vand.u32 %v172, 4294901760
    %v174 = vsub.f32 %v172, %v173
    %v175 = vand.u32 %v174, 4294901760
    %176 = vmatmul.f32.gmra.mxu0 %v175
    %v177 = vpop.f32.mrf.mxu0
    %v178 = vadd.f32 0.0, %v177
    %v179 = vand.u32 %v36, 4294901760
    %v180 = vsub.f32 %v36, %v179
    %v181 = vand.u32 %v180, 4294901760
    %v182 = vsub.f32 %v180, %v181
    %v183 = vand.u32 %v182, 4294901760
    %184 = vmatmul.f32.gmra.mxu0 %v183
    %v185 = vpop.f32.mrf.mxu0
    %v186 = vadd.f32 0.0, %v185
    %v187 = vand.u32 %v37, 4294901760
    %v188 = vsub.f32 %v37, %v187
    %v189 = vand.u32 %v188, 4294901760
    %v190 = vsub.f32 %v188, %v189
    %v191 = vand.u32 %v190, 4294901760
    %192 = vmatmul.f32.gmra.mxu0 %v191
    %v193 = vpop.f32.mrf.mxu0
    %v194 = vadd.f32 0.0, %v193
    %v195 = vand.u32 %v38, 4294901760
    %v196 = vsub.f32 %v38, %v195
    %v197 = vand.u32 %v196, 4294901760
    %v198 = vsub.f32 %v196, %v197
    %v199 = vand.u32 %v198, 4294901760
    %200 = vmatmul.f32.gmra.mxu0 %v199
    %v201 = vpop.f32.mrf.mxu0
    %v202 = vadd.f32 0.0, %v201
    %v203 = vand.u32 %v39, 4294901760
    %v204 = vsub.f32 %v39, %v203
    %v205 = vand.u32 %v204, 4294901760
    %v206 = vsub.f32 %v204, %v205
    %v207 = vand.u32 %v206, 4294901760
    %208 = vmatmul.f32.gmra.mxu0 %v207
    %v209 = vpop.f32.mrf.mxu0
    %v210 = vadd.f32 0.0, %v209
    %v211 = vand.u32 %v40, 4294901760
    %v212 = vsub.f32 %v40, %v211
    %v213 = vand.u32 %v212, 4294901760
    %v214 = vsub.f32 %v212, %v213
    %v215 = vand.u32 %v214, 4294901760
    %216 = vmatmul.f32.gmra.mxu0 %v215
    %v217 = vpop.f32.mrf.mxu0
    %v218 = vadd.f32 0.0, %v217
    %v219 = vand.u32 %v41, 4294901760
    %v220 = vsub.f32 %v41, %v219
    %v221 = vand.u32 %v220, 4294901760
    %v222 = vsub.f32 %v220, %v221
    %v223 = vand.u32 %v222, 4294901760
    %224 = vmatmul.f32.gmra.mxu0 %v223
    %v225 = vpop.f32.mrf.mxu0
    %v226 = vadd.f32 0.0, %v225
    %v227 = vand.u32 %v42, 4294901760
    %v228 = vsub.f32 %v42, %v227
    %v229 = vand.u32 %v228, 4294901760
    %v230 = vsub.f32 %v228, %v229
    %v231 = vand.u32 %v230, 4294901760
    %232 = vmatmul.f32.gmra.mxu0 %v231
    %v233 = vpop.f32.mrf.mxu0
    %v234 = vadd.f32 0.0, %v233
    %v235 = vand.u32 %v43, 4294901760
    %v236 = vsub.f32 %v43, %v235
    %v237 = vand.u32 %v236, 4294901760
    %v238 = vsub.f32 %v236, %v237
    %v239 = vand.u32 %v238, 4294901760
    %240 = vmatmul.f32.gmra.mxu0 %v239
    %v241 = vpop.f32.mrf.mxu0
    %v242 = vadd.f32 0.0, %v241
    %v243 = vand.u32 %v44, 4294901760
    %v244 = vsub.f32 %v44, %v243
    %v245 = vand.u32 %v244, 4294901760
    %v246 = vsub.f32 %v244, %v245
    %v247 = vand.u32 %v246, 4294901760
    %248 = vmatmul.f32.gmra.mxu0 %v247
    %v249 = vpop.f32.mrf.mxu0
    %v250 = vadd.f32 0.0, %v249
    %v251 = vand.u32 %v45, 4294901760
    %v252 = vsub.f32 %v45, %v251
    %v253 = vand.u32 %v252, 4294901760
    %v254 = vsub.f32 %v252, %v253
    %v255 = vand.u32 %v254, 4294901760
    %256 = vmatmul.f32.gmra.mxu0 %v255
    %v257 = vpop.f32.mrf.mxu0
    %v258 = vadd.f32 0.0, %v257
    %v259 = vand.u32 %v46, 4294901760
    %v260 = vsub.f32 %v46, %v259
    %v261 = vand.u32 %v260, 4294901760
    %v262 = vsub.f32 %v260, %v261
    %v263 = vand.u32 %v262, 4294901760
    %264 = vmatmul.f32.gmra.mxu0 %v263
    %v265 = vpop.f32.mrf.mxu0
    %v266 = vadd.f32 0.0, %v265
    %v267 = vand.u32 %v47, 4294901760
    %v268 = vsub.f32 %v47, %v267
    %v269 = vand.u32 %v268, 4294901760
    %v270 = vsub.f32 %v268, %v269
    %v271 = vand.u32 %v270, 4294901760
    %272 = vmatmul.f32.gmra.mxu0 %v271
    %v273 = vpop.f32.mrf.mxu0
    %v274 = vadd.f32 0.0, %v273
    %v275 = vand.u32 %v48, 4294901760
    %v276 = vsub.f32 %v48, %v275
    %v277 = vand.u32 %v276, 4294901760
    %v278 = vsub.f32 %v276, %v277
    %v279 = vand.u32 %v278, 4294901760
    %280 = vmatmul.f32.gmra.mxu0 %v279
    %v281 = vpop.f32.mrf.mxu0
    %v282 = vadd.f32 0.0, %v281
    %v283 = vand.u32 %v49, 4294901760
    %v284 = vsub.f32 %v49, %v283
    %v285 = vand.u32 %v284, 4294901760
    %v286 = vsub.f32 %v284, %v285
    %v287 = vand.u32 %v286, 4294901760
    %288 = vmatmul.f32.gmra.mxu0 %v287
    %v289 = vpop.f32.mrf.mxu0
    %v290 = vadd.f32 0.0, %v289
    %v291 = vand.u32 %v50, 4294901760
    %v292 = vsub.f32 %v50, %v291
    %v293 = vand.u32 %v292, 4294901760
    %v294 = vsub.f32 %v292, %v293
    %v295 = vand.u32 %v294, 4294901760
    %296 = vmatmul.f32.gmra.mxu0 %v295
    %v297 = vpop.f32.mrf.mxu0
    %v298 = vadd.f32 0.0, %v297
    %v299 = vand.u32 %v51, 4294901760
    %v300 = vsub.f32 %v51, %v299
    %v301 = vand.u32 %v300, 4294901760
    %v302 = vsub.f32 %v300, %v301
    %v303 = vand.u32 %v302, 4294901760
    %304 = vmatmul.f32.gmra.mxu0 %v303
    %v305 = vpop.f32.mrf.mxu0
    %v306 = vadd.f32 0.0, %v305
    %v307 = vand.u32 %v52, 4294901760
    %v308 = vsub.f32 %v52, %v307
    %v309 = vand.u32 %v308, 4294901760
    %v310 = vsub.f32 %v308, %v309
    %v311 = vand.u32 %v310, 4294901760
    %312 = vmatmul.f32.gmra.mxu0 %v311
    %v313 = vpop.f32.mrf.mxu0
    %v314 = vadd.f32 0.0, %v313
    %v315 = vand.u32 %v53, 4294901760
    %v316 = vsub.f32 %v53, %v315
    %v317 = vand.u32 %v316, 4294901760
    %v318 = vsub.f32 %v316, %v317
    %v319 = vand.u32 %v318, 4294901760
    %320 = vmatmul.f32.gmra.mxu0 %v319
    %v321 = vpop.f32.mrf.mxu0
    %v322 = vadd.f32 0.0, %v321
    %v323 = vand.u32 %v54, 4294901760
    %v324 = vsub.f32 %v54, %v323
    %v325 = vand.u32 %v324, 4294901760
    %v326 = vsub.f32 %v324, %v325
    %v327 = vand.u32 %v326, 4294901760
    %328 = vmatmul.f32.gmra.mxu0 %v327
    %v329 = vpop.f32.mrf.mxu0
    %v330 = vadd.f32 0.0, %v329
    %v331 = vand.u32 %v55, 4294901760
    %v332 = vsub.f32 %v55, %v331
    %v333 = vand.u32 %v332, 4294901760
    %v334 = vsub.f32 %v332, %v333
    %v335 = vand.u32 %v334, 4294901760
    %336 = vmatmul.f32.gmra.mxu0 %v335
    %v337 = vpop.f32.mrf.mxu0
    %v338 = vadd.f32 0.0, %v337
    %v339 = vand.u32 %v56, 4294901760
    %v340 = vsub.f32 %v56, %v339
    %v341 = vand.u32 %v340, 4294901760
    %v342 = vsub.f32 %v340, %v341
    %v343 = vand.u32 %v342, 4294901760
    %344 = vmatmul.f32.gmra.mxu0 %v343
    %v345 = vpop.f32.mrf.mxu0
    %v346 = vadd.f32 0.0, %v345
    %v347 = vand.u32 %v57, 4294901760
    %v348 = vsub.f32 %v57, %v347
    %v349 = vand.u32 %v348, 4294901760
    %v350 = vsub.f32 %v348, %v349
    %v351 = vand.u32 %v350, 4294901760
    %352 = vmatmul.f32.gmra.mxu0 %v351
    %v353 = vpop.f32.mrf.mxu0
    %v354 = vadd.f32 0.0, %v353
    %v355 = vand.u32 %v58, 4294901760
    %v356 = vsub.f32 %v58, %v355
    %v357 = vand.u32 %v356, 4294901760
    %v358 = vsub.f32 %v356, %v357
    %v359 = vand.u32 %v358, 4294901760
    %360 = vmatmul.f32.gmra.mxu0 %v359
    %v361 = vpop.f32.mrf.mxu0
    %v362 = vadd.f32 0.0, %v361
    %363 = vdwg.mxu0
    %v364 = vand.u32 %v74, 4294901760
    %v365 = vsub.f32 %v74, %v364
    %v366 = vand.u32 %v365, 4294901760
    %v367 = vsub.f32 %v365, %v366
    %v368 = vand.u32 %v367, 4294901760
    %369 = vmatpush.msra.mxu0 %v368
    %v370 = vand.u32 %v73, 4294901760
    %v371 = vsub.f32 %v73, %v370
    %v372 = vand.u32 %v371, 4294901760
    %v373 = vsub.f32 %v371, %v372
    %v374 = vand.u32 %v373, 4294901760
    %375 = vmatpush.msra.mxu0 %v374
    %v376 = vand.u32 %v72, 4294901760
    %v377 = vsub.f32 %v72, %v376
    %v378 = vand.u32 %v377, 4294901760
    %v379 = vsub.f32 %v377, %v378
    %v380 = vand.u32 %v379, 4294901760
    %381 = vmatpush.msra.mxu0 %v380
    %v382 = vand.u32 %v71, 4294901760
    %v383 = vsub.f32 %v71, %v382
    %v384 = vand.u32 %v383, 4294901760
    %v385 = vsub.f32 %v383, %v384
    %v386 = vand.u32 %v385, 4294901760
    %387 = vmatpush.msra.mxu0 %v386
    %v388 = vand.u32 %v70, 4294901760
    %v389 = vsub.f32 %v70, %v388
    %v390 = vand.u32 %v389, 4294901760
    %v391 = vsub.f32 %v389, %v390
    %v392 = vand.u32 %v391, 4294901760
    %393 = vmatpush.msra.mxu0 %v392
    %v394 = vand.u32 %v69, 4294901760
    %v395 = vsub.f32 %v69, %v394
    %v396 = vand.u32 %v395, 4294901760
    %v397 = vsub.f32 %v395, %v396
    %v398 = vand.u32 %v397, 4294901760
    %399 = vmatpush.msra.mxu0 %v398
    %v400 = vand.u32 %v68, 4294901760
    %v401 = vsub.f32 %v68, %v400
    %v402 = vand.u32 %v401, 4294901760
    %v403 = vsub.f32 %v401, %v402
    %v404 = vand.u32 %v403, 4294901760
    %405 = vmatpush.msra.mxu0 %v404
    %v406 = vand.u32 %v67, 4294901760
    %v407 = vsub.f32 %v67, %v406
    %v408 = vand.u32 %v407, 4294901760
    %v409 = vsub.f32 %v407, %v408
    %v410 = vand.u32 %v409, 4294901760
    %411 = vmatpush.msra.mxu0 %v410
    %v412 = vand.u32 %v66, 4294901760
    %v413 = vsub.f32 %v66, %v412
    %v414 = vand.u32 %v413, 4294901760
    %v415 = vsub.f32 %v413, %v414
    %v416 = vand.u32 %v415, 4294901760
    %417 = vmatpush.msra.mxu0 %v416
    %v418 = vand.u32 %v65, 4294901760
    %v419 = vsub.f32 %v65, %v418
    %v420 = vand.u32 %v419, 4294901760
    %v421 = vsub.f32 %v419, %v420
    %v422 = vand.u32 %v421, 4294901760
    %423 = vmatpush.msra.mxu0 %v422
    %v424 = vand.u32 %v64, 4294901760
    %v425 = vsub.f32 %v64, %v424
    %v426 = vand.u32 %v425, 4294901760
    %v427 = vsub.f32 %v425, %v426
    %v428 = vand.u32 %v427, 4294901760
    %429 = vmatpush.msra.mxu0 %v428
    %v430 = vand.u32 %v63, 4294901760
    %v431 = vsub.f32 %v63, %v430
    %v432 = vand.u32 %v431, 4294901760
    %v433 = vsub.f32 %v431, %v432
    %v434 = vand.u32 %v433, 4294901760
    %435 = vmatpush.msra.mxu0 %v434
    %v436 = vand.u32 %v62, 4294901760
    %v437 = vsub.f32 %v62, %v436
    %v438 = vand.u32 %v437, 4294901760
    %v439 = vsub.f32 %v437, %v438
    %v440 = vand.u32 %v439, 4294901760
    %441 = vmatpush.msra.mxu0 %v440
    %v442 = vand.u32 %v61, 4294901760
    %v443 = vsub.f32 %v61, %v442
    %v444 = vand.u32 %v443, 4294901760
    %v445 = vsub.f32 %v443, %v444
    %v446 = vand.u32 %v445, 4294901760
    %447 = vmatpush.msra.mxu0 %v446
    %v448 = vand.u32 %v60, 4294901760
    %v449 = vsub.f32 %v60, %v448
    %v450 = vand.u32 %v449, 4294901760
    %v451 = vsub.f32 %v449, %v450
    %v452 = vand.u32 %v451, 4294901760
    %453 = vmatpush.msra.mxu0 %v452
    %v454 = vand.u32 %v59, 4294901760
    %v455 = vsub.f32 %v59, %v454
    %v456 = vand.u32 %v455, 4294901760
    %v457 = vsub.f32 %v455, %v456
    %v458 = vand.u32 %v457, 4294901760
    %459 = vmatpush.msra.mxu0 %v458
    %v460 = vand.u32 %v27, 4294901760
    %461 = vmatmul.f32.gmra.mxu0 %v460
    %v462 = vpop.f32.mrf.mxu0
    %v463 = vadd.f32 %v114, %v462
    %v464 = vand.u32 %v28, 4294901760
    %465 = vmatmul.f32.gmra.mxu0 %v464
    %v466 = vpop.f32.mrf.mxu0
    %v467 = vadd.f32 %v122, %v466
    %v468 = vand.u32 %v29, 4294901760
    %469 = vmatmul.f32.gmra.mxu0 %v468
    %v470 = vpop.f32.mrf.mxu0
    %v471 = vadd.f32 %v130, %v470
    %v472 = vand.u32 %v30, 4294901760
    %473 = vmatmul.f32.gmra.mxu0 %v472
    %v474 = vpop.f32.mrf.mxu0
    %v475 = vadd.f32 %v138, %v474
    %v476 = vand.u32 %v31, 4294901760
    %477 = vmatmul.f32.gmra.mxu0 %v476
    %v478 = vpop.f32.mrf.mxu0
    %v479 = vadd.f32 %v146, %v478
    %v480 = vand.u32 %v32, 4294901760
    %481 = vmatmul.f32.gmra.mxu0 %v480
    %v482 = vpop.f32.mrf.mxu0
    %v483 = vadd.f32 %v154, %v482
    %v484 = vand.u32 %v33, 4294901760
    %485 = vmatmul.f32.gmra.mxu0 %v484
    %v486 = vpop.f32.mrf.mxu0
    %v487 = vadd.f32 %v162, %v486
    %v488 = vand.u32 %v34, 4294901760
    %489 = vmatmul.f32.gmra.mxu0 %v488
    %v490 = vpop.f32.mrf.mxu0
    %v491 = vadd.f32 %v170, %v490
    %v492 = vand.u32 %v35, 4294901760
    %493 = vmatmul.f32.gmra.mxu0 %v492
    %v494 = vpop.f32.mrf.mxu0
    %v495 = vadd.f32 %v178, %v494
    %v496 = vand.u32 %v36, 4294901760
    %497 = vmatmul.f32.gmra.mxu0 %v496
    %v498 = vpop.f32.mrf.mxu0
    %v499 = vadd.f32 %v186, %v498
    %v500 = vand.u32 %v37, 4294901760
    %501 = vmatmul.f32.gmra.mxu0 %v500
    %v502 = vpop.f32.mrf.mxu0
    %v503 = vadd.f32 %v194, %v502
    %v504 = vand.u32 %v38, 4294901760
    %505 = vmatmul.f32.gmra.mxu0 %v504
    %v506 = vpop.f32.mrf.mxu0
    %v507 = vadd.f32 %v202, %v506
    %v508 = vand.u32 %v39, 4294901760
    %509 = vmatmul.f32.gmra.mxu0 %v508
    %v510 = vpop.f32.mrf.mxu0
    %v511 = vadd.f32 %v210, %v510
    %v512 = vand.u32 %v40, 4294901760
    %513 = vmatmul.f32.gmra.mxu0 %v512
    %v514 = vpop.f32.mrf.mxu0
    %v515 = vadd.f32 %v218, %v514
    %v516 = vand.u32 %v41, 4294901760
    %517 = vmatmul.f32.gmra.mxu0 %v516
    %v518 = vpop.f32.mrf.mxu0
    %v519 = vadd.f32 %v226, %v518
    %v520 = vand.u32 %v42, 4294901760
    %521 = vmatmul.f32.gmra.mxu0 %v520
    %v522 = vpop.f32.mrf.mxu0
    %v523 = vadd.f32 %v234, %v522
    %v524 = vand.u32 %v43, 4294901760
    %525 = vmatmul.f32.gmra.mxu0 %v524
    %v526 = vpop.f32.mrf.mxu0
    %v527 = vadd.f32 %v242, %v526
    %v528 = vand.u32 %v44, 4294901760
    %529 = vmatmul.f32.gmra.mxu0 %v528
    %v530 = vpop.f32.mrf.mxu0
    %v531 = vadd.f32 %v250, %v530
    %v532 = vand.u32 %v45, 4294901760
    %533 = vmatmul.f32.gmra.mxu0 %v532
    %v534 = vpop.f32.mrf.mxu0
    %v535 = vadd.f32 %v258, %v534
    %v536 = vand.u32 %v46, 4294901760
    %537 = vmatmul.f32.gmra.mxu0 %v536
    %v538 = vpop.f32.mrf.mxu0
    %v539 = vadd.f32 %v266, %v538
    %v540 = vand.u32 %v47, 4294901760
    %541 = vmatmul.f32.gmra.mxu0 %v540
    %v542 = vpop.f32.mrf.mxu0
    %v543 = vadd.f32 %v274, %v542
    %v544 = vand.u32 %v48, 4294901760
    %545 = vmatmul.f32.gmra.mxu0 %v544
    %v546 = vpop.f32.mrf.mxu0
    %v547 = vadd.f32 %v282, %v546
    %v548 = vand.u32 %v49, 4294901760
    %549 = vmatmul.f32.gmra.mxu0 %v548
    %v550 = vpop.f32.mrf.mxu0
    %v551 = vadd.f32 %v290, %v550
    %v552 = vand.u32 %v50, 4294901760
    %553 = vmatmul.f32.gmra.mxu0 %v552
    %v554 = vpop.f32.mrf.mxu0
    %v555 = vadd.f32 %v298, %v554
    %v556 = vand.u32 %v51, 4294901760
    %557 = vmatmul.f32.gmra.mxu0 %v556
    %v558 = vpop.f32.mrf.mxu0
    %v559 = vadd.f32 %v306, %v558
    %v560 = vand.u32 %v52, 4294901760
    %561 = vmatmul.f32.gmra.mxu0 %v560
    %v562 = vpop.f32.mrf.mxu0
    %v563 = vadd.f32 %v314, %v562
    %v564 = vand.u32 %v53, 4294901760
    %565 = vmatmul.f32.gmra.mxu0 %v564
    %v566 = vpop.f32.mrf.mxu0
    %v567 = vadd.f32 %v322, %v566
    %v568 = vand.u32 %v54, 4294901760
    %569 = vmatmul.f32.gmra.mxu0 %v568
    %v570 = vpop.f32.mrf.mxu0
    %v571 = vadd.f32 %v330, %v570
    %v572 = vand.u32 %v55, 4294901760
    %573 = vmatmul.f32.gmra.mxu0 %v572
    %v574 = vpop.f32.mrf.mxu0
    %v575 = vadd.f32 %v338, %v574
    %v576 = vand.u32 %v56, 4294901760
    %577 = vmatmul.f32.gmra.mxu0 %v576
    %v578 = vpop.f32.mrf.mxu0
    %v579 = vadd.f32 %v346, %v578
    %v580 = vand.u32 %v57, 4294901760
    %581 = vmatmul.f32.gmra.mxu0 %v580
    %v582 = vpop.f32.mrf.mxu0
    %v583 = vadd.f32 %v354, %v582
    %v584 = vand.u32 %v58, 4294901760
    %585 = vmatmul.f32.gmra.mxu0 %v584
    %v586 = vpop.f32.mrf.mxu0
    %v587 = vadd.f32 %v362, %v586
    %588 = vdwg.mxu0
    %v589 = vand.u32 %v74, 4294901760
    %v590 = vsub.f32 %v74, %v589
    %591 = vmatpush.msra.mxu0 %v590
    %v592 = vand.u32 %v73, 4294901760
    %v593 = vsub.f32 %v73, %v592
    %594 = vmatpush.msra.mxu0 %v593
    %v595 = vand.u32 %v72, 4294901760
    %v596 = vsub.f32 %v72, %v595
    %597 = vmatpush.msra.mxu0 %v596
    %v598 = vand.u32 %v71, 4294901760
    %v599 = vsub.f32 %v71, %v598
    %600 = vmatpush.msra.mxu0 %v599
    %v601 = vand.u32 %v70, 4294901760
    %v602 = vsub.f32 %v70, %v601
    %603 = vmatpush.msra.mxu0 %v602
    %v604 = vand.u32 %v69, 4294901760
    %v605 = vsub.f32 %v69, %v604
    %606 = vmatpush.msra.mxu0 %v605
    %v607 = vand.u32 %v68, 4294901760
    %v608 = vsub.f32 %v68, %v607
    %609 = vmatpush.msra.mxu0 %v608
    %v610 = vand.u32 %v67, 4294901760
    %v611 = vsub.f32 %v67, %v610
    %612 = vmatpush.msra.mxu0 %v611
    %v613 = vand.u32 %v66, 4294901760
    %v614 = vsub.f32 %v66, %v613
    %615 = vmatpush.msra.mxu0 %v614
    %v616 = vand.u32 %v65, 4294901760
    %v617 = vsub.f32 %v65, %v616
    %618 = vmatpush.msra.mxu0 %v617
    %v619 = vand.u32 %v64, 4294901760
    %v620 = vsub.f32 %v64, %v619
    %621 = vmatpush.msra.mxu0 %v620
    %v622 = vand.u32 %v63, 4294901760
    %v623 = vsub.f32 %v63, %v622
    %624 = vmatpush.msra.mxu0 %v623
    %v625 = vand.u32 %v62, 4294901760
    %v626 = vsub.f32 %v62, %v625
    %627 = vmatpush.msra.mxu0 %v626
    %v628 = vand.u32 %v61, 4294901760
    %v629 = vsub.f32 %v61, %v628
    %630 = vmatpush.msra.mxu0 %v629
    %v631 = vand.u32 %v60, 4294901760
    %v632 = vsub.f32 %v60, %v631
    %633 = vmatpush.msra.mxu0 %v632
    %v634 = vand.u32 %v59, 4294901760
    %v635 = vsub.f32 %v59, %v634
    %636 = vmatpush.msra.mxu0 %v635
    %v637 = vand.u32 %v27, 4294901760
    %v638 = vsub.f32 %v27, %v637
    %639 = vmatmul.f32.gmra.mxu0 %v638
    %v640 = vpop.f32.mrf.mxu0
    %v641 = vadd.f32 %v463, %v640
    %v642 = vand.u32 %v28, 4294901760
    %v643 = vsub.f32 %v28, %v642
    %644 = vmatmul.f32.gmra.mxu0 %v643
    %v645 = vpop.f32.mrf.mxu0
    %v646 = vadd.f32 %v467, %v645
    %v647 = vand.u32 %v29, 4294901760
    %v648 = vsub.f32 %v29, %v647
    %649 = vmatmul.f32.gmra.mxu0 %v648
    %v650 = vpop.f32.mrf.mxu0
    %v651 = vadd.f32 %v471, %v650
    %v652 = vand.u32 %v30, 4294901760
    %v653 = vsub.f32 %v30, %v652
    %654 = vmatmul.f32.gmra.mxu0 %v653
    %v655 = vpop.f32.mrf.mxu0
    %v656 = vadd.f32 %v475, %v655
    %v657 = vand.u32 %v31, 4294901760
    %v658 = vsub.f32 %v31, %v657
    %659 = vmatmul.f32.gmra.mxu0 %v658
    %v660 = vpop.f32.mrf.mxu0
    %v661 = vadd.f32 %v479, %v660
    %v662 = vand.u32 %v32, 4294901760
    %v663 = vsub.f32 %v32, %v662
    %664 = vmatmul.f32.gmra.mxu0 %v663
    %v665 = vpop.f32.mrf.mxu0
    %v666 = vadd.f32 %v483, %v665
    %v667 = vand.u32 %v33, 4294901760
    %v668 = vsub.f32 %v33, %v667
    %669 = vmatmul.f32.gmra.mxu0 %v668
    %v670 = vpop.f32.mrf.mxu0
    %v671 = vadd.f32 %v487, %v670
    %v672 = vand.u32 %v34, 4294901760
    %v673 = vsub.f32 %v34, %v672
    %674 = vmatmul.f32.gmra.mxu0 %v673
    %v675 = vpop.f32.mrf.mxu0
    %v676 = vadd.f32 %v491, %v675
    %v677 = vand.u32 %v35, 4294901760
    %v678 = vsub.f32 %v35, %v677
    %679 = vmatmul.f32.gmra.mxu0 %v678
    %v680 = vpop.f32.mrf.mxu0
    %v681 = vadd.f32 %v495, %v680
    %v682 = vand.u32 %v36, 4294901760
    %v683 = vsub.f32 %v36, %v682
    %684 = vmatmul.f32.gmra.mxu0 %v683
    %v685 = vpop.f32.mrf.mxu0
    %v686 = vadd.f32 %v499, %v685
    %v687 = vand.u32 %v37, 4294901760
    %v688 = vsub.f32 %v37, %v687
    %689 = vmatmul.f32.gmra.mxu0 %v688
    %v690 = vpop.f32.mrf.mxu0
    %v691 = vadd.f32 %v503, %v690
    %v692 = vand.u32 %v38, 4294901760
    %v693 = vsub.f32 %v38, %v692
    %694 = vmatmul.f32.gmra.mxu0 %v693
    %v695 = vpop.f32.mrf.mxu0
    %v696 = vadd.f32 %v507, %v695
    %v697 = vand.u32 %v39, 4294901760
    %v698 = vsub.f32 %v39, %v697
    %699 = vmatmul.f32.gmra.mxu0 %v698
    %v700 = vpop.f32.mrf.mxu0
    %v701 = vadd.f32 %v511, %v700
    %v702 = vand.u32 %v40, 4294901760
    %v703 = vsub.f32 %v40, %v702
    %704 = vmatmul.f32.gmra.mxu0 %v703
    %v705 = vpop.f32.mrf.mxu0
    %v706 = vadd.f32 %v515, %v705
    %v707 = vand.u32 %v41, 4294901760
    %v708 = vsub.f32 %v41, %v707
    %709 = vmatmul.f32.gmra.mxu0 %v708
    %v710 = vpop.f32.mrf.mxu0
    %v711 = vadd.f32 %v519, %v710
    %v712 = vand.u32 %v42, 4294901760
    %v713 = vsub.f32 %v42, %v712
    %714 = vmatmul.f32.gmra.mxu0 %v713
    %v715 = vpop.f32.mrf.mxu0
    %v716 = vadd.f32 %v523, %v715
    %v717 = vand.u32 %v43, 4294901760
    %v718 = vsub.f32 %v43, %v717
    %719 = vmatmul.f32.gmra.mxu0 %v718
    %v720 = vpop.f32.mrf.mxu0
    %v721 = vadd.f32 %v527, %v720
    %v722 = vand.u32 %v44, 4294901760
    %v723 = vsub.f32 %v44, %v722
    %724 = vmatmul.f32.gmra.mxu0 %v723
    %v725 = vpop.f32.mrf.mxu0
    %v726 = vadd.f32 %v531, %v725
    %v727 = vand.u32 %v45, 4294901760
    %v728 = vsub.f32 %v45, %v727
    %729 = vmatmul.f32.gmra.mxu0 %v728
    %v730 = vpop.f32.mrf.mxu0
    %v731 = vadd.f32 %v535, %v730
    %v732 = vand.u32 %v46, 4294901760
    %v733 = vsub.f32 %v46, %v732
    %734 = vmatmul.f32.gmra.mxu0 %v733
    %v735 = vpop.f32.mrf.mxu0
    %v736 = vadd.f32 %v539, %v735
    %v737 = vand.u32 %v47, 4294901760
    %v738 = vsub.f32 %v47, %v737
    %739 = vmatmul.f32.gmra.mxu0 %v738
    %v740 = vpop.f32.mrf.mxu0
    %v741 = vadd.f32 %v543, %v740
    %v742 = vand.u32 %v48, 4294901760
    %v743 = vsub.f32 %v48, %v742
    %744 = vmatmul.f32.gmra.mxu0 %v743
    %v745 = vpop.f32.mrf.mxu0
    %v746 = vadd.f32 %v547, %v745
    %v747 = vand.u32 %v49, 4294901760
    %v748 = vsub.f32 %v49, %v747
    %749 = vmatmul.f32.gmra.mxu0 %v748
    %v750 = vpop.f32.mrf.mxu0
    %v751 = vadd.f32 %v551, %v750
    %v752 = vand.u32 %v50, 4294901760
    %v753 = vsub.f32 %v50, %v752
    %754 = vmatmul.f32.gmra.mxu0 %v753
    %v755 = vpop.f32.mrf.mxu0
    %v756 = vadd.f32 %v555, %v755
    %v757 = vand.u32 %v51, 4294901760
    %v758 = vsub.f32 %v51, %v757
    %759 = vmatmul.f32.gmra.mxu0 %v758
    %v760 = vpop.f32.mrf.mxu0
    %v761 = vadd.f32 %v559, %v760
    %v762 = vand.u32 %v52, 4294901760
    %v763 = vsub.f32 %v52, %v762
    %764 = vmatmul.f32.gmra.mxu0 %v763
    %v765 = vpop.f32.mrf.mxu0
    %v766 = vadd.f32 %v563, %v765
    %v767 = vand.u32 %v53, 4294901760
    %v768 = vsub.f32 %v53, %v767
    %769 = vmatmul.f32.gmra.mxu0 %v768
    %v770 = vpop.f32.mrf.mxu0
    %v771 = vadd.f32 %v567, %v770
    %v772 = vand.u32 %v54, 4294901760
    %v773 = vsub.f32 %v54, %v772
    %774 = vmatmul.f32.gmra.mxu0 %v773
    %v775 = vpop.f32.mrf.mxu0
    %v776 = vadd.f32 %v571, %v775
    %v777 = vand.u32 %v55, 4294901760
    %v778 = vsub.f32 %v55, %v777
    %779 = vmatmul.f32.gmra.mxu0 %v778
    %v780 = vpop.f32.mrf.mxu0
    %v781 = vadd.f32 %v575, %v780
    %v782 = vand.u32 %v56, 4294901760
    %v783 = vsub.f32 %v56, %v782
    %784 = vmatmul.f32.gmra.mxu0 %v783
    %v785 = vpop.f32.mrf.mxu0
    %v786 = vadd.f32 %v579, %v785
    %v787 = vand.u32 %v57, 4294901760
    %v788 = vsub.f32 %v57, %v787
    %789 = vmatmul.f32.gmra.mxu0 %v788
    %v790 = vpop.f32.mrf.mxu0
    %v791 = vadd.f32 %v583, %v790
    %v792 = vand.u32 %v58, 4294901760
    %v793 = vsub.f32 %v58, %v792
    %794 = vmatmul.f32.gmra.mxu0 %v793
    %v795 = vpop.f32.mrf.mxu0
    %v796 = vadd.f32 %v587, %v795
    %797 = vdwg.mxu0
    %v798 = vand.u32 %v74, 4294901760
    %799 = vmatpush.msra.mxu0 %v798
    %v800 = vand.u32 %v73, 4294901760
    %801 = vmatpush.msra.mxu0 %v800
    %v802 = vand.u32 %v72, 4294901760
    %803 = vmatpush.msra.mxu0 %v802
    %v804 = vand.u32 %v71, 4294901760
    %805 = vmatpush.msra.mxu0 %v804
    %v806 = vand.u32 %v70, 4294901760
    %807 = vmatpush.msra.mxu0 %v806
    %v808 = vand.u32 %v69, 4294901760
    %809 = vmatpush.msra.mxu0 %v808
    %v810 = vand.u32 %v68, 4294901760
    %811 = vmatpush.msra.mxu0 %v810
    %v812 = vand.u32 %v67, 4294901760
    %813 = vmatpush.msra.mxu0 %v812
    %v814 = vand.u32 %v66, 4294901760
    %815 = vmatpush.msra.mxu0 %v814
    %v816 = vand.u32 %v65, 4294901760
    %817 = vmatpush.msra.mxu0 %v816
    %v818 = vand.u32 %v64, 4294901760
    %819 = vmatpush.msra.mxu0 %v818
    %v820 = vand.u32 %v63, 4294901760
    %821 = vmatpush.msra.mxu0 %v820
    %v822 = vand.u32 %v62, 4294901760
    %823 = vmatpush.msra.mxu0 %v822
    %v824 = vand.u32 %v61, 4294901760
    %825 = vmatpush.msra.mxu0 %v824
    %v826 = vand.u32 %v60, 4294901760
    %827 = vmatpush.msra.mxu0 %v826
    %v828 = vand.u32 %v59, 4294901760
    %829 = vmatpush.msra.mxu0 %v828
    %v830 = vand.u32 %v27, 4294901760
    %v831 = vsub.f32 %v27, %v830
    %v832 = vand.u32 %v831, 4294901760
    %833 = vmatmul.f32.gmra.mxu0 %v832
    %v834 = vpop.f32.mrf.mxu0
    %v835 = vadd.f32 %v641, %v834
    %v836 = vand.u32 %v28, 4294901760
    %v837 = vsub.f32 %v28, %v836
    %v838 = vand.u32 %v837, 4294901760
    %839 = vmatmul.f32.gmra.mxu0 %v838
    %v840 = vpop.f32.mrf.mxu0
    %v841 = vadd.f32 %v646, %v840
    %v842 = vand.u32 %v29, 4294901760
    %v843 = vsub.f32 %v29, %v842
    %v844 = vand.u32 %v843, 4294901760
    %845 = vmatmul.f32.gmra.mxu0 %v844
    %v846 = vpop.f32.mrf.mxu0
    %v847 = vadd.f32 %v651, %v846
    %v848 = vand.u32 %v30, 4294901760
    %v849 = vsub.f32 %v30, %v848
    %v850 = vand.u32 %v849, 4294901760
    %851 = vmatmul.f32.gmra.mxu0 %v850
    %v852 = vpop.f32.mrf.mxu0
    %v853 = vadd.f32 %v656, %v852
    %v854 = vand.u32 %v31, 4294901760
    %v855 = vsub.f32 %v31, %v854
    %v856 = vand.u32 %v855, 4294901760
    %857 = vmatmul.f32.gmra.mxu0 %v856
    %v858 = vpop.f32.mrf.mxu0
    %v859 = vadd.f32 %v661, %v858
    %v860 = vand.u32 %v32, 4294901760
    %v861 = vsub.f32 %v32, %v860
    %v862 = vand.u32 %v861, 4294901760
    %863 = vmatmul.f32.gmra.mxu0 %v862
    %v864 = vpop.f32.mrf.mxu0
    %v865 = vadd.f32 %v666, %v864
    %v866 = vand.u32 %v33, 4294901760
    %v867 = vsub.f32 %v33, %v866
    %v868 = vand.u32 %v867, 4294901760
    %869 = vmatmul.f32.gmra.mxu0 %v868
    %v870 = vpop.f32.mrf.mxu0
    %v871 = vadd.f32 %v671, %v870
    %v872 = vand.u32 %v34, 4294901760
    %v873 = vsub.f32 %v34, %v872
    %v874 = vand.u32 %v873, 4294901760
    %875 = vmatmul.f32.gmra.mxu0 %v874
    %v876 = vpop.f32.mrf.mxu0
    %v877 = vadd.f32 %v676, %v876
    %v878 = vand.u32 %v35, 4294901760
    %v879 = vsub.f32 %v35, %v878
    %v880 = vand.u32 %v879, 4294901760
    %881 = vmatmul.f32.gmra.mxu0 %v880
    %v882 = vpop.f32.mrf.mxu0
    %v883 = vadd.f32 %v681, %v882
    %v884 = vand.u32 %v36, 4294901760
    %v885 = vsub.f32 %v36, %v884
    %v886 = vand.u32 %v885, 4294901760
    %887 = vmatmul.f32.gmra.mxu0 %v886
    %v888 = vpop.f32.mrf.mxu0
    %v889 = vadd.f32 %v686, %v888
    %v890 = vand.u32 %v37, 4294901760
    %v891 = vsub.f32 %v37, %v890
    %v892 = vand.u32 %v891, 4294901760
    %893 = vmatmul.f32.gmra.mxu0 %v892
    %v894 = vpop.f32.mrf.mxu0
    %v895 = vadd.f32 %v691, %v894
    %v896 = vand.u32 %v38, 4294901760
    %v897 = vsub.f32 %v38, %v896
    %v898 = vand.u32 %v897, 4294901760
    %899 = vmatmul.f32.gmra.mxu0 %v898
    %v900 = vpop.f32.mrf.mxu0
    %v901 = vadd.f32 %v696, %v900
    %v902 = vand.u32 %v39, 4294901760
    %v903 = vsub.f32 %v39, %v902
    %v904 = vand.u32 %v903, 4294901760
    %905 = vmatmul.f32.gmra.mxu0 %v904
    %v906 = vpop.f32.mrf.mxu0
    %v907 = vadd.f32 %v701, %v906
    %v908 = vand.u32 %v40, 4294901760
    %v909 = vsub.f32 %v40, %v908
    %v910 = vand.u32 %v909, 4294901760
    %911 = vmatmul.f32.gmra.mxu0 %v910
    %v912 = vpop.f32.mrf.mxu0
    %v913 = vadd.f32 %v706, %v912
    %v914 = vand.u32 %v41, 4294901760
    %v915 = vsub.f32 %v41, %v914
    %v916 = vand.u32 %v915, 4294901760
    %917 = vmatmul.f32.gmra.mxu0 %v916
    %v918 = vpop.f32.mrf.mxu0
    %v919 = vadd.f32 %v711, %v918
    %v920 = vand.u32 %v42, 4294901760
    %v921 = vsub.f32 %v42, %v920
    %v922 = vand.u32 %v921, 4294901760
    %923 = vmatmul.f32.gmra.mxu0 %v922
    %v924 = vpop.f32.mrf.mxu0
    %v925 = vadd.f32 %v716, %v924
    %v926 = vand.u32 %v43, 4294901760
    %v927 = vsub.f32 %v43, %v926
    %v928 = vand.u32 %v927, 4294901760
    %929 = vmatmul.f32.gmra.mxu0 %v928
    %v930 = vpop.f32.mrf.mxu0
    %v931 = vadd.f32 %v721, %v930
    %v932 = vand.u32 %v44, 4294901760
    %v933 = vsub.f32 %v44, %v932
    %v934 = vand.u32 %v933, 4294901760
    %935 = vmatmul.f32.gmra.mxu0 %v934
    %v936 = vpop.f32.mrf.mxu0
    %v937 = vadd.f32 %v726, %v936
    %v938 = vand.u32 %v45, 4294901760
    %v939 = vsub.f32 %v45, %v938
    %v940 = vand.u32 %v939, 4294901760
    %941 = vmatmul.f32.gmra.mxu0 %v940
    %v942 = vpop.f32.mrf.mxu0
    %v943 = vadd.f32 %v731, %v942
    %v944 = vand.u32 %v46, 4294901760
    %v945 = vsub.f32 %v46, %v944
    %v946 = vand.u32 %v945, 4294901760
    %947 = vmatmul.f32.gmra.mxu0 %v946
    %v948 = vpop.f32.mrf.mxu0
    %v949 = vadd.f32 %v736, %v948
    %v950 = vand.u32 %v47, 4294901760
    %v951 = vsub.f32 %v47, %v950
    %v952 = vand.u32 %v951, 4294901760
    %953 = vmatmul.f32.gmra.mxu0 %v952
    %v954 = vpop.f32.mrf.mxu0
    %v955 = vadd.f32 %v741, %v954
    %v956 = vand.u32 %v48, 4294901760
    %v957 = vsub.f32 %v48, %v956
    %v958 = vand.u32 %v957, 4294901760
    %959 = vmatmul.f32.gmra.mxu0 %v958
    %v960 = vpop.f32.mrf.mxu0
    %v961 = vadd.f32 %v746, %v960
    %v962 = vand.u32 %v49, 4294901760
    %v963 = vsub.f32 %v49, %v962
    %v964 = vand.u32 %v963, 4294901760
    %965 = vmatmul.f32.gmra.mxu0 %v964
    %v966 = vpop.f32.mrf.mxu0
    %v967 = vadd.f32 %v751, %v966
    %v968 = vand.u32 %v50, 4294901760
    %v969 = vsub.f32 %v50, %v968
    %v970 = vand.u32 %v969, 4294901760
    %971 = vmatmul.f32.gmra.mxu0 %v970
    %v972 = vpop.f32.mrf.mxu0
    %v973 = vadd.f32 %v756, %v972
    %v974 = vand.u32 %v51, 4294901760
    %v975 = vsub.f32 %v51, %v974
    %v976 = vand.u32 %v975, 4294901760
    %977 = vmatmul.f32.gmra.mxu0 %v976
    %v978 = vpop.f32.mrf.mxu0
    %v979 = vadd.f32 %v761, %v978
    %v980 = vand.u32 %v52, 4294901760
    %v981 = vsub.f32 %v52, %v980
    %v982 = vand.u32 %v981, 4294901760
    %983 = vmatmul.f32.gmra.mxu0 %v982
    %v984 = vpop.f32.mrf.mxu0
    %v985 = vadd.f32 %v766, %v984
    %v986 = vand.u32 %v53, 4294901760
    %v987 = vsub.f32 %v53, %v986
    %v988 = vand.u32 %v987, 4294901760
    %989 = vmatmul.f32.gmra.mxu0 %v988
    %v990 = vpop.f32.mrf.mxu0
    %v991 = vadd.f32 %v771, %v990
    %v992 = vand.u32 %v54, 4294901760
    %v993 = vsub.f32 %v54, %v992
    %v994 = vand.u32 %v993, 4294901760
    %995 = vmatmul.f32.gmra.mxu0 %v994
    %v996 = vpop.f32.mrf.mxu0
    %v997 = vadd.f32 %v776, %v996
    %v998 = vand.u32 %v55, 4294901760
    %v999 = vsub.f32 %v55, %v998
    %v1000 = vand.u32 %v999, 4294901760
    %1001 = vmatmul.f32.gmra.mxu0 %v1000
    %v1002 = vpop.f32.mrf.mxu0
    %v1003 = vadd.f32 %v781, %v1002
    %v1004 = vand.u32 %v56, 4294901760
    %v1005 = vsub.f32 %v56, %v1004
    %v1006 = vand.u32 %v1005, 4294901760
    %1007 = vmatmul.f32.gmra.mxu0 %v1006
    %v1008 = vpop.f32.mrf.mxu0
    %v1009 = vadd.f32 %v786, %v1008
    %v1010 = vand.u32 %v57, 4294901760
    %v1011 = vsub.f32 %v57, %v1010
    %v1012 = vand.u32 %v1011, 4294901760
    %1013 = vmatmul.f32.gmra.mxu0 %v1012
    %v1014 = vpop.f32.mrf.mxu0
    %v1015 = vadd.f32 %v791, %v1014
    %v1016 = vand.u32 %v58, 4294901760
    %v1017 = vsub.f32 %v58, %v1016
    %v1018 = vand.u32 %v1017, 4294901760
    %1019 = vmatmul.f32.gmra.mxu0 %v1018
    %v1020 = vpop.f32.mrf.mxu0
    %v1021 = vadd.f32 %v796, %v1020
    %1022 = vdwg.mxu0
    %v1023 = vand.u32 %v74, 4294901760
    %v1024 = vsub.f32 %v74, %v1023
    %v1025 = vand.u32 %v1024, 4294901760
    %1026 = vmatpush.msra.mxu0 %v1025
    %v1027 = vand.u32 %v73, 4294901760
    %v1028 = vsub.f32 %v73, %v1027
    %v1029 = vand.u32 %v1028, 4294901760
    %1030 = vmatpush.msra.mxu0 %v1029
    %v1031 = vand.u32 %v72, 4294901760
    %v1032 = vsub.f32 %v72, %v1031
    %v1033 = vand.u32 %v1032, 4294901760
    %1034 = vmatpush.msra.mxu0 %v1033
    %v1035 = vand.u32 %v71, 4294901760
    %v1036 = vsub.f32 %v71, %v1035
    %v1037 = vand.u32 %v1036, 4294901760
    %1038 = vmatpush.msra.mxu0 %v1037
    %v1039 = vand.u32 %v70, 4294901760
    %v1040 = vsub.f32 %v70, %v1039
    %v1041 = vand.u32 %v1040, 4294901760
    %1042 = vmatpush.msra.mxu0 %v1041
    %v1043 = vand.u32 %v69, 4294901760
    %v1044 = vsub.f32 %v69, %v1043
    %v1045 = vand.u32 %v1044, 4294901760
    %1046 = vmatpush.msra.mxu0 %v1045
    %v1047 = vand.u32 %v68, 4294901760
    %v1048 = vsub.f32 %v68, %v1047
    %v1049 = vand.u32 %v1048, 4294901760
    %1050 = vmatpush.msra.mxu0 %v1049
    %v1051 = vand.u32 %v67, 4294901760
    %v1052 = vsub.f32 %v67, %v1051
    %v1053 = vand.u32 %v1052, 4294901760
    %1054 = vmatpush.msra.mxu0 %v1053
    %v1055 = vand.u32 %v66, 4294901760
    %v1056 = vsub.f32 %v66, %v1055
    %v1057 = vand.u32 %v1056, 4294901760
    %1058 = vmatpush.msra.mxu0 %v1057
    %v1059 = vand.u32 %v65, 4294901760
    %v1060 = vsub.f32 %v65, %v1059
    %v1061 = vand.u32 %v1060, 4294901760
    %1062 = vmatpush.msra.mxu0 %v1061
    %v1063 = vand.u32 %v64, 4294901760
    %v1064 = vsub.f32 %v64, %v1063
    %v1065 = vand.u32 %v1064, 4294901760
    %1066 = vmatpush.msra.mxu0 %v1065
    %v1067 = vand.u32 %v63, 4294901760
    %v1068 = vsub.f32 %v63, %v1067
    %v1069 = vand.u32 %v1068, 4294901760
    %1070 = vmatpush.msra.mxu0 %v1069
    %v1071 = vand.u32 %v62, 4294901760
    %v1072 = vsub.f32 %v62, %v1071
    %v1073 = vand.u32 %v1072, 4294901760
    %1074 = vmatpush.msra.mxu0 %v1073
    %v1075 = vand.u32 %v61, 4294901760
    %v1076 = vsub.f32 %v61, %v1075
    %v1077 = vand.u32 %v1076, 4294901760
    %1078 = vmatpush.msra.mxu0 %v1077
    %v1079 = vand.u32 %v60, 4294901760
    %v1080 = vsub.f32 %v60, %v1079
    %v1081 = vand.u32 %v1080, 4294901760
    %1082 = vmatpush.msra.mxu0 %v1081
    %v1083 = vand.u32 %v59, 4294901760
    %v1084 = vsub.f32 %v59, %v1083
    %v1085 = vand.u32 %v1084, 4294901760
    %1086 = vmatpush.msra.mxu0 %v1085
    %v1087 = vand.u32 %v27, 4294901760
    %1088 = vmatmul.f32.gmra.mxu0 %v1087
    %v1089 = vpop.f32.mrf.mxu0
    %v1090 = vadd.f32 %v835, %v1089
    %v1091 = vand.u32 %v28, 4294901760
    %1092 = vmatmul.f32.gmra.mxu0 %v1091
    %v1093 = vpop.f32.mrf.mxu0
    %v1094 = vadd.f32 %v841, %v1093
    %v1095 = vand.u32 %v29, 4294901760
    %1096 = vmatmul.f32.gmra.mxu0 %v1095
    %v1097 = vpop.f32.mrf.mxu0
    %v1098 = vadd.f32 %v847, %v1097
    %v1099 = vand.u32 %v30, 4294901760
    %1100 = vmatmul.f32.gmra.mxu0 %v1099
    %v1101 = vpop.f32.mrf.mxu0
    %v1102 = vadd.f32 %v853, %v1101
    %v1103 = vand.u32 %v31, 4294901760
    %1104 = vmatmul.f32.gmra.mxu0 %v1103
    %v1105 = vpop.f32.mrf.mxu0
    %v1106 = vadd.f32 %v859, %v1105
    %v1107 = vand.u32 %v32, 4294901760
    %1108 = vmatmul.f32.gmra.mxu0 %v1107
    %v1109 = vpop.f32.mrf.mxu0
    %v1110 = vadd.f32 %v865, %v1109
    %v1111 = vand.u32 %v33, 4294901760
    %1112 = vmatmul.f32.gmra.mxu0 %v1111
    %v1113 = vpop.f32.mrf.mxu0
    %v1114 = vadd.f32 %v871, %v1113
    %v1115 = vand.u32 %v34, 4294901760
    %1116 = vmatmul.f32.gmra.mxu0 %v1115
    %v1117 = vpop.f32.mrf.mxu0
    %v1118 = vadd.f32 %v877, %v1117
    %v1119 = vand.u32 %v35, 4294901760
    %1120 = vmatmul.f32.gmra.mxu0 %v1119
    %v1121 = vpop.f32.mrf.mxu0
    %v1122 = vadd.f32 %v883, %v1121
    %v1123 = vand.u32 %v36, 4294901760
    %1124 = vmatmul.f32.gmra.mxu0 %v1123
    %v1125 = vpop.f32.mrf.mxu0
    %v1126 = vadd.f32 %v889, %v1125
    %v1127 = vand.u32 %v37, 4294901760
    %1128 = vmatmul.f32.gmra.mxu0 %v1127
    %v1129 = vpop.f32.mrf.mxu0
    %v1130 = vadd.f32 %v895, %v1129
    %v1131 = vand.u32 %v38, 4294901760
    %1132 = vmatmul.f32.gmra.mxu0 %v1131
    %v1133 = vpop.f32.mrf.mxu0
    %v1134 = vadd.f32 %v901, %v1133
    %v1135 = vand.u32 %v39, 4294901760
    %1136 = vmatmul.f32.gmra.mxu0 %v1135
    %v1137 = vpop.f32.mrf.mxu0
    %v1138 = vadd.f32 %v907, %v1137
    %v1139 = vand.u32 %v40, 4294901760
    %1140 = vmatmul.f32.gmra.mxu0 %v1139
    %v1141 = vpop.f32.mrf.mxu0
    %v1142 = vadd.f32 %v913, %v1141
    %v1143 = vand.u32 %v41, 4294901760
    %1144 = vmatmul.f32.gmra.mxu0 %v1143
    %v1145 = vpop.f32.mrf.mxu0
    %v1146 = vadd.f32 %v919, %v1145
    %v1147 = vand.u32 %v42, 4294901760
    %1148 = vmatmul.f32.gmra.mxu0 %v1147
    %v1149 = vpop.f32.mrf.mxu0
    %v1150 = vadd.f32 %v925, %v1149
    %v1151 = vand.u32 %v43, 4294901760
    %1152 = vmatmul.f32.gmra.mxu0 %v1151
    %v1153 = vpop.f32.mrf.mxu0
    %v1154 = vadd.f32 %v931, %v1153
    %v1155 = vand.u32 %v44, 4294901760
    %1156 = vmatmul.f32.gmra.mxu0 %v1155
    %v1157 = vpop.f32.mrf.mxu0
    %v1158 = vadd.f32 %v937, %v1157
    %v1159 = vand.u32 %v45, 4294901760
    %1160 = vmatmul.f32.gmra.mxu0 %v1159
    %v1161 = vpop.f32.mrf.mxu0
    %v1162 = vadd.f32 %v943, %v1161
    %v1163 = vand.u32 %v46, 4294901760
    %1164 = vmatmul.f32.gmra.mxu0 %v1163
    %v1165 = vpop.f32.mrf.mxu0
    %v1166 = vadd.f32 %v949, %v1165
    %v1167 = vand.u32 %v47, 4294901760
    %1168 = vmatmul.f32.gmra.mxu0 %v1167
    %v1169 = vpop.f32.mrf.mxu0
    %v1170 = vadd.f32 %v955, %v1169
    %v1171 = vand.u32 %v48, 4294901760
    %1172 = vmatmul.f32.gmra.mxu0 %v1171
    %v1173 = vpop.f32.mrf.mxu0
    %v1174 = vadd.f32 %v961, %v1173
    %v1175 = vand.u32 %v49, 4294901760
    %1176 = vmatmul.f32.gmra.mxu0 %v1175
    %v1177 = vpop.f32.mrf.mxu0
    %v1178 = vadd.f32 %v967, %v1177
    %v1179 = vand.u32 %v50, 4294901760
    %1180 = vmatmul.f32.gmra.mxu0 %v1179
    %v1181 = vpop.f32.mrf.mxu0
    %v1182 = vadd.f32 %v973, %v1181
    %v1183 = vand.u32 %v51, 4294901760
    %1184 = vmatmul.f32.gmra.mxu0 %v1183
    %v1185 = vpop.f32.mrf.mxu0
    %v1186 = vadd.f32 %v979, %v1185
    %v1187 = vand.u32 %v52, 4294901760
    %1188 = vmatmul.f32.gmra.mxu0 %v1187
    %v1189 = vpop.f32.mrf.mxu0
    %v1190 = vadd.f32 %v985, %v1189
    %v1191 = vand.u32 %v53, 4294901760
    %1192 = vmatmul.f32.gmra.mxu0 %v1191
    %v1193 = vpop.f32.mrf.mxu0
    %v1194 = vadd.f32 %v991, %v1193
    %v1195 = vand.u32 %v54, 4294901760
    %1196 = vmatmul.f32.gmra.mxu0 %v1195
    %v1197 = vpop.f32.mrf.mxu0
    %v1198 = vadd.f32 %v997, %v1197
    %v1199 = vand.u32 %v55, 4294901760
    %1200 = vmatmul.f32.gmra.mxu0 %v1199
    %v1201 = vpop.f32.mrf.mxu0
    %v1202 = vadd.f32 %v1003, %v1201
    %v1203 = vand.u32 %v56, 4294901760
    %1204 = vmatmul.f32.gmra.mxu0 %v1203
    %v1205 = vpop.f32.mrf.mxu0
    %v1206 = vadd.f32 %v1009, %v1205
    %v1207 = vand.u32 %v57, 4294901760
    %1208 = vmatmul.f32.gmra.mxu0 %v1207
    %v1209 = vpop.f32.mrf.mxu0
    %v1210 = vadd.f32 %v1015, %v1209
    %v1211 = vand.u32 %v58, 4294901760
    %1212 = vmatmul.f32.gmra.mxu0 %v1211
    %v1213 = vpop.f32.mrf.mxu0
    %v1214 = vadd.f32 %v1021, %v1213
    %1215 = vdwg.mxu0
    %v1216 = vand.u32 %v74, 4294901760
    %1217 = vmatpush.msra.mxu0 %v1216
    %v1218 = vand.u32 %v73, 4294901760
    %1219 = vmatpush.msra.mxu0 %v1218
    %v1220 = vand.u32 %v72, 4294901760
    %1221 = vmatpush.msra.mxu0 %v1220
    %v1222 = vand.u32 %v71, 4294901760
    %1223 = vmatpush.msra.mxu0 %v1222
    %v1224 = vand.u32 %v70, 4294901760
    %1225 = vmatpush.msra.mxu0 %v1224
    %v1226 = vand.u32 %v69, 4294901760
    %1227 = vmatpush.msra.mxu0 %v1226
    %v1228 = vand.u32 %v68, 4294901760
    %1229 = vmatpush.msra.mxu0 %v1228
    %v1230 = vand.u32 %v67, 4294901760
    %1231 = vmatpush.msra.mxu0 %v1230
    %v1232 = vand.u32 %v66, 4294901760
    %1233 = vmatpush.msra.mxu0 %v1232
    %v1234 = vand.u32 %v65, 4294901760
    %1235 = vmatpush.msra.mxu0 %v1234
    %v1236 = vand.u32 %v64, 4294901760
    %1237 = vmatpush.msra.mxu0 %v1236
    %v1238 = vand.u32 %v63, 4294901760
    %1239 = vmatpush.msra.mxu0 %v1238
    %v1240 = vand.u32 %v62, 4294901760
    %1241 = vmatpush.msra.mxu0 %v1240
    %v1242 = vand.u32 %v61, 4294901760
    %1243 = vmatpush.msra.mxu0 %v1242
    %v1244 = vand.u32 %v60, 4294901760
    %1245 = vmatpush.msra.mxu0 %v1244
    %v1246 = vand.u32 %v59, 4294901760
    %1247 = vmatpush.msra.mxu0 %v1246
    %v1248 = vand.u32 %v27, 4294901760
    %1249 = vmatmul.f32.gmra.mxu0 %v1248
    %v1250 = vpop.f32.mrf.mxu0
    %v1251 = vadd.f32 %v1090, %v1250
    %v1252 = vand.u32 %v28, 4294901760
    %1253 = vmatmul.f32.gmra.mxu0 %v1252
    %v1254 = vpop.f32.mrf.mxu0
    %v1255 = vadd.f32 %v1094, %v1254
    %v1256 = vand.u32 %v29, 4294901760
    %1257 = vmatmul.f32.gmra.mxu0 %v1256
    %v1258 = vpop.f32.mrf.mxu0
    %v1259 = vadd.f32 %v1098, %v1258
    %v1260 = vand.u32 %v30, 4294901760
    %1261 = vmatmul.f32.gmra.mxu0 %v1260
    %v1262 = vpop.f32.mrf.mxu0
    %v1263 = vadd.f32 %v1102, %v1262
    %v1264 = vand.u32 %v31, 4294901760
    %1265 = vmatmul.f32.gmra.mxu0 %v1264
    %v1266 = vpop.f32.mrf.mxu0
    %v1267 = vadd.f32 %v1106, %v1266
    %v1268 = vand.u32 %v32, 4294901760
    %1269 = vmatmul.f32.gmra.mxu0 %v1268
    %v1270 = vpop.f32.mrf.mxu0
    %v1271 = vadd.f32 %v1110, %v1270
    %v1272 = vand.u32 %v33, 4294901760
    %1273 = vmatmul.f32.gmra.mxu0 %v1272
    %v1274 = vpop.f32.mrf.mxu0
    %v1275 = vadd.f32 %v1114, %v1274
    %v1276 = vand.u32 %v34, 4294901760
    %1277 = vmatmul.f32.gmra.mxu0 %v1276
    %v1278 = vpop.f32.mrf.mxu0
    %v1279 = vadd.f32 %v1118, %v1278
    %v1280 = vand.u32 %v35, 4294901760
    %1281 = vmatmul.f32.gmra.mxu0 %v1280
    %v1282 = vpop.f32.mrf.mxu0
    %v1283 = vadd.f32 %v1122, %v1282
    %v1284 = vand.u32 %v36, 4294901760
    %1285 = vmatmul.f32.gmra.mxu0 %v1284
    %v1286 = vpop.f32.mrf.mxu0
    %v1287 = vadd.f32 %v1126, %v1286
    %v1288 = vand.u32 %v37, 4294901760
    %1289 = vmatmul.f32.gmra.mxu0 %v1288
    %v1290 = vpop.f32.mrf.mxu0
    %v1291 = vadd.f32 %v1130, %v1290
    %v1292 = vand.u32 %v38, 4294901760
    %1293 = vmatmul.f32.gmra.mxu0 %v1292
    %v1294 = vpop.f32.mrf.mxu0
    %v1295 = vadd.f32 %v1134, %v1294
    %v1296 = vand.u32 %v39, 4294901760
    %1297 = vmatmul.f32.gmra.mxu0 %v1296
    %v1298 = vpop.f32.mrf.mxu0
    %v1299 = vadd.f32 %v1138, %v1298
    %v1300 = vand.u32 %v40, 4294901760
    %1301 = vmatmul.f32.gmra.mxu0 %v1300
    %v1302 = vpop.f32.mrf.mxu0
    %v1303 = vadd.f32 %v1142, %v1302
    %v1304 = vand.u32 %v41, 4294901760
    %1305 = vmatmul.f32.gmra.mxu0 %v1304
    %v1306 = vpop.f32.mrf.mxu0
    %v1307 = vadd.f32 %v1146, %v1306
    %v1308 = vand.u32 %v42, 4294901760
    %1309 = vmatmul.f32.gmra.mxu0 %v1308
    %v1310 = vpop.f32.mrf.mxu0
    %v1311 = vadd.f32 %v1150, %v1310
    %v1312 = vand.u32 %v43, 4294901760
    %1313 = vmatmul.f32.gmra.mxu0 %v1312
    %v1314 = vpop.f32.mrf.mxu0
    %v1315 = vadd.f32 %v1154, %v1314
    %v1316 = vand.u32 %v44, 4294901760
    %1317 = vmatmul.f32.gmra.mxu0 %v1316
    %v1318 = vpop.f32.mrf.mxu0
    %v1319 = vadd.f32 %v1158, %v1318
    %v1320 = vand.u32 %v45, 4294901760
    %1321 = vmatmul.f32.gmra.mxu0 %v1320
    %v1322 = vpop.f32.mrf.mxu0
    %v1323 = vadd.f32 %v1162, %v1322
    %v1324 = vand.u32 %v46, 4294901760
    %1325 = vmatmul.f32.gmra.mxu0 %v1324
    %v1326 = vpop.f32.mrf.mxu0
    %v1327 = vadd.f32 %v1166, %v1326
    %v1328 = vand.u32 %v47, 4294901760
    %1329 = vmatmul.f32.gmra.mxu0 %v1328
    %v1330 = vpop.f32.mrf.mxu0
    %v1331 = vadd.f32 %v1170, %v1330
    %v1332 = vand.u32 %v48, 4294901760
    %1333 = vmatmul.f32.gmra.mxu0 %v1332
    %v1334 = vpop.f32.mrf.mxu0
    %v1335 = vadd.f32 %v1174, %v1334
    %v1336 = vand.u32 %v49, 4294901760
    %1337 = vmatmul.f32.gmra.mxu0 %v1336
    %v1338 = vpop.f32.mrf.mxu0
    %v1339 = vadd.f32 %v1178, %v1338
    %v1340 = vand.u32 %v50, 4294901760
    %1341 = vmatmul.f32.gmra.mxu0 %v1340
    %v1342 = vpop.f32.mrf.mxu0
    %v1343 = vadd.f32 %v1182, %v1342
    %v1344 = vand.u32 %v51, 4294901760
    %1345 = vmatmul.f32.gmra.mxu0 %v1344
    %v1346 = vpop.f32.mrf.mxu0
    %v1347 = vadd.f32 %v1186, %v1346
    %v1348 = vand.u32 %v52, 4294901760
    %1349 = vmatmul.f32.gmra.mxu0 %v1348
    %v1350 = vpop.f32.mrf.mxu0
    %v1351 = vadd.f32 %v1190, %v1350
    %v1352 = vand.u32 %v53, 4294901760
    %1353 = vmatmul.f32.gmra.mxu0 %v1352
    %v1354 = vpop.f32.mrf.mxu0
    %v1355 = vadd.f32 %v1194, %v1354
    %v1356 = vand.u32 %v54, 4294901760
    %1357 = vmatmul.f32.gmra.mxu0 %v1356
    %v1358 = vpop.f32.mrf.mxu0
    %v1359 = vadd.f32 %v1198, %v1358
    %v1360 = vand.u32 %v55, 4294901760
    %1361 = vmatmul.f32.gmra.mxu0 %v1360
    %v1362 = vpop.f32.mrf.mxu0
    %v1363 = vadd.f32 %v1202, %v1362
    %v1364 = vand.u32 %v56, 4294901760
    %1365 = vmatmul.f32.gmra.mxu0 %v1364
    %v1366 = vpop.f32.mrf.mxu0
    %v1367 = vadd.f32 %v1206, %v1366
    %v1368 = vand.u32 %v57, 4294901760
    %1369 = vmatmul.f32.gmra.mxu0 %v1368
    %v1370 = vpop.f32.mrf.mxu0
    %v1371 = vadd.f32 %v1210, %v1370
    %v1372 = vand.u32 %v58, 4294901760
    %1373 = vmatmul.f32.gmra.mxu0 %v1372
    %v1374 = vpop.f32.mrf.mxu0
    %v1375 = vadd.f32 %v1214, %v1374
    %1376 = vdwg.mxu0
    %1393 = vrot.lane.b32.xlu0 %v1251, 96
    %v1394 = vpop.permute.xlu0 %1393
    %1395 = vrot.lane.b32.xlu0 %v1255, 96
    %v1396 = vpop.permute.xlu0 %1395
    %1397 = vrot.lane.b32.xlu0 %v1259, 96
    %v1398 = vpop.permute.xlu0 %1397
    %1399 = vrot.lane.b32.xlu0 %v1263, 96
    %v1400 = vpop.permute.xlu0 %1399
    %1401 = vrot.lane.b32.xlu0 %v1267, 96
    %v1402 = vpop.permute.xlu0 %1401
    %1403 = vrot.lane.b32.xlu0 %v1271, 96
    %v1404 = vpop.permute.xlu0 %1403
    %1405 = vrot.lane.b32.xlu0 %v1275, 96
    %v1406 = vpop.permute.xlu0 %1405
    %1407 = vrot.lane.b32.xlu0 %v1279, 96
    %v1408 = vpop.permute.xlu0 %1407
    %1409 = vrot.lane.b32.xlu0 %v1283, 96
    %v1410 = vpop.permute.xlu0 %1409
    %1411 = vrot.lane.b32.xlu0 %v1287, 96
    %v1412 = vpop.permute.xlu0 %1411
    %1413 = vrot.lane.b32.xlu0 %v1291, 96
    %v1414 = vpop.permute.xlu0 %1413
    %1415 = vrot.lane.b32.xlu0 %v1295, 96
    %v1416 = vpop.permute.xlu0 %1415
    %1417 = vrot.lane.b32.xlu0 %v1299, 96
    %v1418 = vpop.permute.xlu0 %1417
    %1419 = vrot.lane.b32.xlu0 %v1303, 96
    %v1420 = vpop.permute.xlu0 %1419
    %1421 = vrot.lane.b32.xlu0 %v1307, 96
    %v1422 = vpop.permute.xlu0 %1421
    %1423 = vrot.lane.b32.xlu0 %v1311, 96
    %v1424 = vpop.permute.xlu0 %1423
    %vm1425 = vcmask 261120
    %v1426 = vsel %vm1425, %v1394, 0
    %v1428 = vsel %vm1425, %v1396, 0
    %v1430 = vsel %vm1425, %v1398, 0
    %v1432 = vsel %vm1425, %v1400, 0
    %v1434 = vsel %vm1425, %v1402, 0
    %v1436 = vsel %vm1425, %v1404, 0
    %v1438 = vsel %vm1425, %v1406, 0
    %v1440 = vsel %vm1425, %v1408, 0
    %v1442 = vsel %vm1425, %v1410, 0
    %v1444 = vsel %vm1425, %v1412, 0
    %v1446 = vsel %vm1425, %v1414, 0
    %v1448 = vsel %vm1425, %v1416, 0
    %v1450 = vsel %vm1425, %v1418, 0
    %v1452 = vsel %vm1425, %v1420, 0
    %v1454 = vsel %vm1425, %v1422, 0
    %v1456 = vsel %vm1425, %v1424, 0
    %v1458 = vsel %vm1425, %v1251, 0
    %v1460 = vsel %vm1425, %v1255, 0
    %v1462 = vsel %vm1425, %v1259, 0
    %v1464 = vsel %vm1425, %v1263, 0
    %v1466 = vsel %vm1425, %v1267, 0
    %v1468 = vsel %vm1425, %v1271, 0
    %v1470 = vsel %vm1425, %v1275, 0
    %v1472 = vsel %vm1425, %v1279, 0
    %v1474 = vsel %vm1425, %v1283, 0
    %v1476 = vsel %vm1425, %v1287, 0
    %v1478 = vsel %vm1425, %v1291, 0
    %v1480 = vsel %vm1425, %v1295, 0
    %v1482 = vsel %vm1425, %v1299, 0
    %v1484 = vsel %vm1425, %v1303, 0
    %v1486 = vsel %vm1425, %v1307, 0
    %v1488 = vsel %vm1425, %v1311, 0
    %v1490 = vand.u32 %v1488, 4294901760
    %1491 = vmatpush.xpose.msra.mxu0 %v1490
    %v1492 = vand.u32 %v1486, 4294901760
    %1493 = vmatpush.xpose.msra.mxu0 %v1492
    %v1494 = vand.u32 %v1484, 4294901760
    %1495 = vmatpush.xpose.msra.mxu0 %v1494
    %v1496 = vand.u32 %v1482, 4294901760
    %1497 = vmatpush.xpose.msra.mxu0 %v1496
    %v1498 = vand.u32 %v1480, 4294901760
    %1499 = vmatpush.xpose.msra.mxu0 %v1498
    %v1500 = vand.u32 %v1478, 4294901760
    %1501 = vmatpush.xpose.msra.mxu0 %v1500
    %v1502 = vand.u32 %v1476, 4294901760
    %1503 = vmatpush.xpose.msra.mxu0 %v1502
    %v1504 = vand.u32 %v1474, 4294901760
    %1505 = vmatpush.xpose.msra.mxu0 %v1504
    %v1506 = vand.u32 %v1472, 4294901760
    %1507 = vmatpush.xpose.msra.mxu0 %v1506
    %v1508 = vand.u32 %v1470, 4294901760
    %1509 = vmatpush.xpose.msra.mxu0 %v1508
    %v1510 = vand.u32 %v1468, 4294901760
    %1511 = vmatpush.xpose.msra.mxu0 %v1510
    %v1512 = vand.u32 %v1466, 4294901760
    %1513 = vmatpush.xpose.msra.mxu0 %v1512
    %v1514 = vand.u32 %v1464, 4294901760
    %1515 = vmatpush.xpose.msra.mxu0 %v1514
    %v1516 = vand.u32 %v1462, 4294901760
    %1517 = vmatpush.xpose.msra.mxu0 %v1516
    %v1518 = vand.u32 %v1460, 4294901760
    %1519 = vmatpush.xpose.msra.mxu0 %v1518
    %v1520 = vand.u32 %v1458, 4294901760
    %1521 = vmatpush.xpose.msra.mxu0 %v1520
    %v1522 = vand.u32 %v1426, 4294901760
    %v1523 = vsub.f32 %v1426, %v1522
    %v1524 = vand.u32 %v1523, 4294901760
    %v1525 = vsub.f32 %v1523, %v1524
    %v1526 = vand.u32 %v1525, 4294901760
    %1527 = vmatmul.f32.gmra.mxu0 %v1526
    %v1528 = vpop.f32.mrf.mxu0
    %v1529 = vadd.f32 0.0, %v1528
    %v1530 = vand.u32 %v1428, 4294901760
    %v1531 = vsub.f32 %v1428, %v1530
    %v1532 = vand.u32 %v1531, 4294901760
    %v1533 = vsub.f32 %v1531, %v1532
    %v1534 = vand.u32 %v1533, 4294901760
    %1535 = vmatmul.f32.gmra.mxu0 %v1534
    %v1536 = vpop.f32.mrf.mxu0
    %v1537 = vadd.f32 0.0, %v1536
    %v1538 = vand.u32 %v1430, 4294901760
    %v1539 = vsub.f32 %v1430, %v1538
    %v1540 = vand.u32 %v1539, 4294901760
    %v1541 = vsub.f32 %v1539, %v1540
    %v1542 = vand.u32 %v1541, 4294901760
    %1543 = vmatmul.f32.gmra.mxu0 %v1542
    %v1544 = vpop.f32.mrf.mxu0
    %v1545 = vadd.f32 0.0, %v1544
    %v1546 = vand.u32 %v1432, 4294901760
    %v1547 = vsub.f32 %v1432, %v1546
    %v1548 = vand.u32 %v1547, 4294901760
    %v1549 = vsub.f32 %v1547, %v1548
    %v1550 = vand.u32 %v1549, 4294901760
    %1551 = vmatmul.f32.gmra.mxu0 %v1550
    %v1552 = vpop.f32.mrf.mxu0
    %v1553 = vadd.f32 0.0, %v1552
    %v1554 = vand.u32 %v1434, 4294901760
    %v1555 = vsub.f32 %v1434, %v1554
    %v1556 = vand.u32 %v1555, 4294901760
    %v1557 = vsub.f32 %v1555, %v1556
    %v1558 = vand.u32 %v1557, 4294901760
    %1559 = vmatmul.f32.gmra.mxu0 %v1558
    %v1560 = vpop.f32.mrf.mxu0
    %v1561 = vadd.f32 0.0, %v1560
    %v1562 = vand.u32 %v1436, 4294901760
    %v1563 = vsub.f32 %v1436, %v1562
    %v1564 = vand.u32 %v1563, 4294901760
    %v1565 = vsub.f32 %v1563, %v1564
    %v1566 = vand.u32 %v1565, 4294901760
    %1567 = vmatmul.f32.gmra.mxu0 %v1566
    %v1568 = vpop.f32.mrf.mxu0
    %v1569 = vadd.f32 0.0, %v1568
    %v1570 = vand.u32 %v1438, 4294901760
    %v1571 = vsub.f32 %v1438, %v1570
    %v1572 = vand.u32 %v1571, 4294901760
    %v1573 = vsub.f32 %v1571, %v1572
    %v1574 = vand.u32 %v1573, 4294901760
    %1575 = vmatmul.f32.gmra.mxu0 %v1574
    %v1576 = vpop.f32.mrf.mxu0
    %v1577 = vadd.f32 0.0, %v1576
    %v1578 = vand.u32 %v1440, 4294901760
    %v1579 = vsub.f32 %v1440, %v1578
    %v1580 = vand.u32 %v1579, 4294901760
    %v1581 = vsub.f32 %v1579, %v1580
    %v1582 = vand.u32 %v1581, 4294901760
    %1583 = vmatmul.f32.gmra.mxu0 %v1582
    %v1584 = vpop.f32.mrf.mxu0
    %v1585 = vadd.f32 0.0, %v1584
    %v1586 = vand.u32 %v1442, 4294901760
    %v1587 = vsub.f32 %v1442, %v1586
    %v1588 = vand.u32 %v1587, 4294901760
    %v1589 = vsub.f32 %v1587, %v1588
    %v1590 = vand.u32 %v1589, 4294901760
    %1591 = vmatmul.f32.gmra.mxu0 %v1590
    %v1592 = vpop.f32.mrf.mxu0
    %v1593 = vadd.f32 0.0, %v1592
    %v1594 = vand.u32 %v1444, 4294901760
    %v1595 = vsub.f32 %v1444, %v1594
    %v1596 = vand.u32 %v1595, 4294901760
    %v1597 = vsub.f32 %v1595, %v1596
    %v1598 = vand.u32 %v1597, 4294901760
    %1599 = vmatmul.f32.gmra.mxu0 %v1598
    %v1600 = vpop.f32.mrf.mxu0
    %v1601 = vadd.f32 0.0, %v1600
    %v1602 = vand.u32 %v1446, 4294901760
    %v1603 = vsub.f32 %v1446, %v1602
    %v1604 = vand.u32 %v1603, 4294901760
    %v1605 = vsub.f32 %v1603, %v1604
    %v1606 = vand.u32 %v1605, 4294901760
    %1607 = vmatmul.f32.gmra.mxu0 %v1606
    %v1608 = vpop.f32.mrf.mxu0
    %v1609 = vadd.f32 0.0, %v1608
    %v1610 = vand.u32 %v1448, 4294901760
    %v1611 = vsub.f32 %v1448, %v1610
    %v1612 = vand.u32 %v1611, 4294901760
    %v1613 = vsub.f32 %v1611, %v1612
    %v1614 = vand.u32 %v1613, 4294901760
    %1615 = vmatmul.f32.gmra.mxu0 %v1614
    %v1616 = vpop.f32.mrf.mxu0
    %v1617 = vadd.f32 0.0, %v1616
    %v1618 = vand.u32 %v1450, 4294901760
    %v1619 = vsub.f32 %v1450, %v1618
    %v1620 = vand.u32 %v1619, 4294901760
    %v1621 = vsub.f32 %v1619, %v1620
    %v1622 = vand.u32 %v1621, 4294901760
    %1623 = vmatmul.f32.gmra.mxu0 %v1622
    %v1624 = vpop.f32.mrf.mxu0
    %v1625 = vadd.f32 0.0, %v1624
    %v1626 = vand.u32 %v1452, 4294901760
    %v1627 = vsub.f32 %v1452, %v1626
    %v1628 = vand.u32 %v1627, 4294901760
    %v1629 = vsub.f32 %v1627, %v1628
    %v1630 = vand.u32 %v1629, 4294901760
    %1631 = vmatmul.f32.gmra.mxu0 %v1630
    %v1632 = vpop.f32.mrf.mxu0
    %v1633 = vadd.f32 0.0, %v1632
    %v1634 = vand.u32 %v1454, 4294901760
    %v1635 = vsub.f32 %v1454, %v1634
    %v1636 = vand.u32 %v1635, 4294901760
    %v1637 = vsub.f32 %v1635, %v1636
    %v1638 = vand.u32 %v1637, 4294901760
    %1639 = vmatmul.f32.gmra.mxu0 %v1638
    %v1640 = vpop.f32.mrf.mxu0
    %v1641 = vadd.f32 0.0, %v1640
    %v1642 = vand.u32 %v1456, 4294901760
    %v1643 = vsub.f32 %v1456, %v1642
    %v1644 = vand.u32 %v1643, 4294901760
    %v1645 = vsub.f32 %v1643, %v1644
    %v1646 = vand.u32 %v1645, 4294901760
    %1647 = vmatmul.f32.gmra.mxu0 %v1646
    %v1648 = vpop.f32.mrf.mxu0
    %v1649 = vadd.f32 0.0, %v1648
    %1650 = vdwg.mxu0
    %v1651 = vand.u32 %v1488, 4294901760
    %v1652 = vsub.f32 %v1488, %v1651
    %v1653 = vand.u32 %v1652, 4294901760
    %v1654 = vsub.f32 %v1652, %v1653
    %v1655 = vand.u32 %v1654, 4294901760
    %1656 = vmatpush.xpose.msra.mxu0 %v1655
    %v1657 = vand.u32 %v1486, 4294901760
    %v1658 = vsub.f32 %v1486, %v1657
    %v1659 = vand.u32 %v1658, 4294901760
    %v1660 = vsub.f32 %v1658, %v1659
    %v1661 = vand.u32 %v1660, 4294901760
    %1662 = vmatpush.xpose.msra.mxu0 %v1661
    %v1663 = vand.u32 %v1484, 4294901760
    %v1664 = vsub.f32 %v1484, %v1663
    %v1665 = vand.u32 %v1664, 4294901760
    %v1666 = vsub.f32 %v1664, %v1665
    %v1667 = vand.u32 %v1666, 4294901760
    %1668 = vmatpush.xpose.msra.mxu0 %v1667
    %v1669 = vand.u32 %v1482, 4294901760
    %v1670 = vsub.f32 %v1482, %v1669
    %v1671 = vand.u32 %v1670, 4294901760
    %v1672 = vsub.f32 %v1670, %v1671
    %v1673 = vand.u32 %v1672, 4294901760
    %1674 = vmatpush.xpose.msra.mxu0 %v1673
    %v1675 = vand.u32 %v1480, 4294901760
    %v1676 = vsub.f32 %v1480, %v1675
    %v1677 = vand.u32 %v1676, 4294901760
    %v1678 = vsub.f32 %v1676, %v1677
    %v1679 = vand.u32 %v1678, 4294901760
    %1680 = vmatpush.xpose.msra.mxu0 %v1679
    %v1681 = vand.u32 %v1478, 4294901760
    %v1682 = vsub.f32 %v1478, %v1681
    %v1683 = vand.u32 %v1682, 4294901760
    %v1684 = vsub.f32 %v1682, %v1683
    %v1685 = vand.u32 %v1684, 4294901760
    %1686 = vmatpush.xpose.msra.mxu0 %v1685
    %v1687 = vand.u32 %v1476, 4294901760
    %v1688 = vsub.f32 %v1476, %v1687
    %v1689 = vand.u32 %v1688, 4294901760
    %v1690 = vsub.f32 %v1688, %v1689
    %v1691 = vand.u32 %v1690, 4294901760
    %1692 = vmatpush.xpose.msra.mxu0 %v1691
    %v1693 = vand.u32 %v1474, 4294901760
    %v1694 = vsub.f32 %v1474, %v1693
    %v1695 = vand.u32 %v1694, 4294901760
    %v1696 = vsub.f32 %v1694, %v1695
    %v1697 = vand.u32 %v1696, 4294901760
    %1698 = vmatpush.xpose.msra.mxu0 %v1697
    %v1699 = vand.u32 %v1472, 4294901760
    %v1700 = vsub.f32 %v1472, %v1699
    %v1701 = vand.u32 %v1700, 4294901760
    %v1702 = vsub.f32 %v1700, %v1701
    %v1703 = vand.u32 %v1702, 4294901760
    %1704 = vmatpush.xpose.msra.mxu0 %v1703
    %v1705 = vand.u32 %v1470, 4294901760
    %v1706 = vsub.f32 %v1470, %v1705
    %v1707 = vand.u32 %v1706, 4294901760
    %v1708 = vsub.f32 %v1706, %v1707
    %v1709 = vand.u32 %v1708, 4294901760
    %1710 = vmatpush.xpose.msra.mxu0 %v1709
    %v1711 = vand.u32 %v1468, 4294901760
    %v1712 = vsub.f32 %v1468, %v1711
    %v1713 = vand.u32 %v1712, 4294901760
    %v1714 = vsub.f32 %v1712, %v1713
    %v1715 = vand.u32 %v1714, 4294901760
    %1716 = vmatpush.xpose.msra.mxu0 %v1715
    %v1717 = vand.u32 %v1466, 4294901760
    %v1718 = vsub.f32 %v1466, %v1717
    %v1719 = vand.u32 %v1718, 4294901760
    %v1720 = vsub.f32 %v1718, %v1719
    %v1721 = vand.u32 %v1720, 4294901760
    %1722 = vmatpush.xpose.msra.mxu0 %v1721
    %v1723 = vand.u32 %v1464, 4294901760
    %v1724 = vsub.f32 %v1464, %v1723
    %v1725 = vand.u32 %v1724, 4294901760
    %v1726 = vsub.f32 %v1724, %v1725
    %v1727 = vand.u32 %v1726, 4294901760
    %1728 = vmatpush.xpose.msra.mxu0 %v1727
    %v1729 = vand.u32 %v1462, 4294901760
    %v1730 = vsub.f32 %v1462, %v1729
    %v1731 = vand.u32 %v1730, 4294901760
    %v1732 = vsub.f32 %v1730, %v1731
    %v1733 = vand.u32 %v1732, 4294901760
    %1734 = vmatpush.xpose.msra.mxu0 %v1733
    %v1735 = vand.u32 %v1460, 4294901760
    %v1736 = vsub.f32 %v1460, %v1735
    %v1737 = vand.u32 %v1736, 4294901760
    %v1738 = vsub.f32 %v1736, %v1737
    %v1739 = vand.u32 %v1738, 4294901760
    %1740 = vmatpush.xpose.msra.mxu0 %v1739
    %v1741 = vand.u32 %v1458, 4294901760
    %v1742 = vsub.f32 %v1458, %v1741
    %v1743 = vand.u32 %v1742, 4294901760
    %v1744 = vsub.f32 %v1742, %v1743
    %v1745 = vand.u32 %v1744, 4294901760
    %1746 = vmatpush.xpose.msra.mxu0 %v1745
    %v1747 = vand.u32 %v1426, 4294901760
    %1748 = vmatmul.f32.gmra.mxu0 %v1747
    %v1749 = vpop.f32.mrf.mxu0
    %v1750 = vadd.f32 %v1529, %v1749
    %v1751 = vand.u32 %v1428, 4294901760
    %1752 = vmatmul.f32.gmra.mxu0 %v1751
    %v1753 = vpop.f32.mrf.mxu0
    %v1754 = vadd.f32 %v1537, %v1753
    %v1755 = vand.u32 %v1430, 4294901760
    %1756 = vmatmul.f32.gmra.mxu0 %v1755
    %v1757 = vpop.f32.mrf.mxu0
    %v1758 = vadd.f32 %v1545, %v1757
    %v1759 = vand.u32 %v1432, 4294901760
    %1760 = vmatmul.f32.gmra.mxu0 %v1759
    %v1761 = vpop.f32.mrf.mxu0
    %v1762 = vadd.f32 %v1553, %v1761
    %v1763 = vand.u32 %v1434, 4294901760
    %1764 = vmatmul.f32.gmra.mxu0 %v1763
    %v1765 = vpop.f32.mrf.mxu0
    %v1766 = vadd.f32 %v1561, %v1765
    %v1767 = vand.u32 %v1436, 4294901760
    %1768 = vmatmul.f32.gmra.mxu0 %v1767
    %v1769 = vpop.f32.mrf.mxu0
    %v1770 = vadd.f32 %v1569, %v1769
    %v1771 = vand.u32 %v1438, 4294901760
    %1772 = vmatmul.f32.gmra.mxu0 %v1771
    %v1773 = vpop.f32.mrf.mxu0
    %v1774 = vadd.f32 %v1577, %v1773
    %v1775 = vand.u32 %v1440, 4294901760
    %1776 = vmatmul.f32.gmra.mxu0 %v1775
    %v1777 = vpop.f32.mrf.mxu0
    %v1778 = vadd.f32 %v1585, %v1777
    %v1779 = vand.u32 %v1442, 4294901760
    %1780 = vmatmul.f32.gmra.mxu0 %v1779
    %v1781 = vpop.f32.mrf.mxu0
    %v1782 = vadd.f32 %v1593, %v1781
    %v1783 = vand.u32 %v1444, 4294901760
    %1784 = vmatmul.f32.gmra.mxu0 %v1783
    %v1785 = vpop.f32.mrf.mxu0
    %v1786 = vadd.f32 %v1601, %v1785
    %v1787 = vand.u32 %v1446, 4294901760
    %1788 = vmatmul.f32.gmra.mxu0 %v1787
    %v1789 = vpop.f32.mrf.mxu0
    %v1790 = vadd.f32 %v1609, %v1789
    %v1791 = vand.u32 %v1448, 4294901760
    %1792 = vmatmul.f32.gmra.mxu0 %v1791
    %v1793 = vpop.f32.mrf.mxu0
    %v1794 = vadd.f32 %v1617, %v1793
    %v1795 = vand.u32 %v1450, 4294901760
    %1796 = vmatmul.f32.gmra.mxu0 %v1795
    %v1797 = vpop.f32.mrf.mxu0
    %v1798 = vadd.f32 %v1625, %v1797
    %v1799 = vand.u32 %v1452, 4294901760
    %1800 = vmatmul.f32.gmra.mxu0 %v1799
    %v1801 = vpop.f32.mrf.mxu0
    %v1802 = vadd.f32 %v1633, %v1801
    %v1803 = vand.u32 %v1454, 4294901760
    %1804 = vmatmul.f32.gmra.mxu0 %v1803
    %v1805 = vpop.f32.mrf.mxu0
    %v1806 = vadd.f32 %v1641, %v1805
    %v1807 = vand.u32 %v1456, 4294901760
    %1808 = vmatmul.f32.gmra.mxu0 %v1807
    %v1809 = vpop.f32.mrf.mxu0
    %v1810 = vadd.f32 %v1649, %v1809
    %1811 = vdwg.mxu0
    %v1812 = vand.u32 %v1488, 4294901760
    %v1813 = vsub.f32 %v1488, %v1812
    %1814 = vmatpush.xpose.msra.mxu0 %v1813
    %v1815 = vand.u32 %v1486, 4294901760
    %v1816 = vsub.f32 %v1486, %v1815
    %1817 = vmatpush.xpose.msra.mxu0 %v1816
    %v1818 = vand.u32 %v1484, 4294901760
    %v1819 = vsub.f32 %v1484, %v1818
    %1820 = vmatpush.xpose.msra.mxu0 %v1819
    %v1821 = vand.u32 %v1482, 4294901760
    %v1822 = vsub.f32 %v1482, %v1821
    %1823 = vmatpush.xpose.msra.mxu0 %v1822
    %v1824 = vand.u32 %v1480, 4294901760
    %v1825 = vsub.f32 %v1480, %v1824
    %1826 = vmatpush.xpose.msra.mxu0 %v1825
    %v1827 = vand.u32 %v1478, 4294901760
    %v1828 = vsub.f32 %v1478, %v1827
    %1829 = vmatpush.xpose.msra.mxu0 %v1828
    %v1830 = vand.u32 %v1476, 4294901760
    %v1831 = vsub.f32 %v1476, %v1830
    %1832 = vmatpush.xpose.msra.mxu0 %v1831
    %v1833 = vand.u32 %v1474, 4294901760
    %v1834 = vsub.f32 %v1474, %v1833
    %1835 = vmatpush.xpose.msra.mxu0 %v1834
    %v1836 = vand.u32 %v1472, 4294901760
    %v1837 = vsub.f32 %v1472, %v1836
    %1838 = vmatpush.xpose.msra.mxu0 %v1837
    %v1839 = vand.u32 %v1470, 4294901760
    %v1840 = vsub.f32 %v1470, %v1839
    %1841 = vmatpush.xpose.msra.mxu0 %v1840
    %v1842 = vand.u32 %v1468, 4294901760
    %v1843 = vsub.f32 %v1468, %v1842
    %1844 = vmatpush.xpose.msra.mxu0 %v1843
    %v1845 = vand.u32 %v1466, 4294901760
    %v1846 = vsub.f32 %v1466, %v1845
    %1847 = vmatpush.xpose.msra.mxu0 %v1846
    %v1848 = vand.u32 %v1464, 4294901760
    %v1849 = vsub.f32 %v1464, %v1848
    %1850 = vmatpush.xpose.msra.mxu0 %v1849
    %v1851 = vand.u32 %v1462, 4294901760
    %v1852 = vsub.f32 %v1462, %v1851
    %1853 = vmatpush.xpose.msra.mxu0 %v1852
    %v1854 = vand.u32 %v1460, 4294901760
    %v1855 = vsub.f32 %v1460, %v1854
    %1856 = vmatpush.xpose.msra.mxu0 %v1855
    %v1857 = vand.u32 %v1458, 4294901760
    %v1858 = vsub.f32 %v1458, %v1857
    %1859 = vmatpush.xpose.msra.mxu0 %v1858
    %v1860 = vand.u32 %v1426, 4294901760
    %v1861 = vsub.f32 %v1426, %v1860
    %1862 = vmatmul.f32.gmra.mxu0 %v1861
    %v1863 = vpop.f32.mrf.mxu0
    %v1864 = vadd.f32 %v1750, %v1863
    %v1865 = vand.u32 %v1428, 4294901760
    %v1866 = vsub.f32 %v1428, %v1865
    %1867 = vmatmul.f32.gmra.mxu0 %v1866
    %v1868 = vpop.f32.mrf.mxu0
    %v1869 = vadd.f32 %v1754, %v1868
    %v1870 = vand.u32 %v1430, 4294901760
    %v1871 = vsub.f32 %v1430, %v1870
    %1872 = vmatmul.f32.gmra.mxu0 %v1871
    %v1873 = vpop.f32.mrf.mxu0
    %v1874 = vadd.f32 %v1758, %v1873
    %v1875 = vand.u32 %v1432, 4294901760
    %v1876 = vsub.f32 %v1432, %v1875
    %1877 = vmatmul.f32.gmra.mxu0 %v1876
    %v1878 = vpop.f32.mrf.mxu0
    %v1879 = vadd.f32 %v1762, %v1878
    %v1880 = vand.u32 %v1434, 4294901760
    %v1881 = vsub.f32 %v1434, %v1880
    %1882 = vmatmul.f32.gmra.mxu0 %v1881
    %v1883 = vpop.f32.mrf.mxu0
    %v1884 = vadd.f32 %v1766, %v1883
    %v1885 = vand.u32 %v1436, 4294901760
    %v1886 = vsub.f32 %v1436, %v1885
    %1887 = vmatmul.f32.gmra.mxu0 %v1886
    %v1888 = vpop.f32.mrf.mxu0
    %v1889 = vadd.f32 %v1770, %v1888
    %v1890 = vand.u32 %v1438, 4294901760
    %v1891 = vsub.f32 %v1438, %v1890
    %1892 = vmatmul.f32.gmra.mxu0 %v1891
    %v1893 = vpop.f32.mrf.mxu0
    %v1894 = vadd.f32 %v1774, %v1893
    %v1895 = vand.u32 %v1440, 4294901760
    %v1896 = vsub.f32 %v1440, %v1895
    %1897 = vmatmul.f32.gmra.mxu0 %v1896
    %v1898 = vpop.f32.mrf.mxu0
    %v1899 = vadd.f32 %v1778, %v1898
    %v1900 = vand.u32 %v1442, 4294901760
    %v1901 = vsub.f32 %v1442, %v1900
    %1902 = vmatmul.f32.gmra.mxu0 %v1901
    %v1903 = vpop.f32.mrf.mxu0
    %v1904 = vadd.f32 %v1782, %v1903
    %v1905 = vand.u32 %v1444, 4294901760
    %v1906 = vsub.f32 %v1444, %v1905
    %1907 = vmatmul.f32.gmra.mxu0 %v1906
    %v1908 = vpop.f32.mrf.mxu0
    %v1909 = vadd.f32 %v1786, %v1908
    %v1910 = vand.u32 %v1446, 4294901760
    %v1911 = vsub.f32 %v1446, %v1910
    %1912 = vmatmul.f32.gmra.mxu0 %v1911
    %v1913 = vpop.f32.mrf.mxu0
    %v1914 = vadd.f32 %v1790, %v1913
    %v1915 = vand.u32 %v1448, 4294901760
    %v1916 = vsub.f32 %v1448, %v1915
    %1917 = vmatmul.f32.gmra.mxu0 %v1916
    %v1918 = vpop.f32.mrf.mxu0
    %v1919 = vadd.f32 %v1794, %v1918
    %v1920 = vand.u32 %v1450, 4294901760
    %v1921 = vsub.f32 %v1450, %v1920
    %1922 = vmatmul.f32.gmra.mxu0 %v1921
    %v1923 = vpop.f32.mrf.mxu0
    %v1924 = vadd.f32 %v1798, %v1923
    %v1925 = vand.u32 %v1452, 4294901760
    %v1926 = vsub.f32 %v1452, %v1925
    %1927 = vmatmul.f32.gmra.mxu0 %v1926
    %v1928 = vpop.f32.mrf.mxu0
    %v1929 = vadd.f32 %v1802, %v1928
    %v1930 = vand.u32 %v1454, 4294901760
    %v1931 = vsub.f32 %v1454, %v1930
    %1932 = vmatmul.f32.gmra.mxu0 %v1931
    %v1933 = vpop.f32.mrf.mxu0
    %v1934 = vadd.f32 %v1806, %v1933
    %v1935 = vand.u32 %v1456, 4294901760
    %v1936 = vsub.f32 %v1456, %v1935
    %1937 = vmatmul.f32.gmra.mxu0 %v1936
    %v1938 = vpop.f32.mrf.mxu0
    %v1939 = vadd.f32 %v1810, %v1938
    %1940 = vdwg.mxu0
    %v1941 = vand.u32 %v1488, 4294901760
    %1942 = vmatpush.xpose.msra.mxu0 %v1941
    %v1943 = vand.u32 %v1486, 4294901760
    %1944 = vmatpush.xpose.msra.mxu0 %v1943
    %v1945 = vand.u32 %v1484, 4294901760
    %1946 = vmatpush.xpose.msra.mxu0 %v1945
    %v1947 = vand.u32 %v1482, 4294901760
    %1948 = vmatpush.xpose.msra.mxu0 %v1947
    %v1949 = vand.u32 %v1480, 4294901760
    %1950 = vmatpush.xpose.msra.mxu0 %v1949
    %v1951 = vand.u32 %v1478, 4294901760
    %1952 = vmatpush.xpose.msra.mxu0 %v1951
    %v1953 = vand.u32 %v1476, 4294901760
    %1954 = vmatpush.xpose.msra.mxu0 %v1953
    %v1955 = vand.u32 %v1474, 4294901760
    %1956 = vmatpush.xpose.msra.mxu0 %v1955
    %v1957 = vand.u32 %v1472, 4294901760
    %1958 = vmatpush.xpose.msra.mxu0 %v1957
    %v1959 = vand.u32 %v1470, 4294901760
    %1960 = vmatpush.xpose.msra.mxu0 %v1959
    %v1961 = vand.u32 %v1468, 4294901760
    %1962 = vmatpush.xpose.msra.mxu0 %v1961
    %v1963 = vand.u32 %v1466, 4294901760
    %1964 = vmatpush.xpose.msra.mxu0 %v1963
    %v1965 = vand.u32 %v1464, 4294901760
    %1966 = vmatpush.xpose.msra.mxu0 %v1965
    %v1967 = vand.u32 %v1462, 4294901760
    %1968 = vmatpush.xpose.msra.mxu0 %v1967
    %v1969 = vand.u32 %v1460, 4294901760
    %1970 = vmatpush.xpose.msra.mxu0 %v1969
    %v1971 = vand.u32 %v1458, 4294901760
    %1972 = vmatpush.xpose.msra.mxu0 %v1971
    %v1973 = vand.u32 %v1426, 4294901760
    %v1974 = vsub.f32 %v1426, %v1973
    %v1975 = vand.u32 %v1974, 4294901760
    %1976 = vmatmul.f32.gmra.mxu0 %v1975
    %v1977 = vpop.f32.mrf.mxu0
    %v1978 = vadd.f32 %v1864, %v1977
    %v1979 = vand.u32 %v1428, 4294901760
    %v1980 = vsub.f32 %v1428, %v1979
    %v1981 = vand.u32 %v1980, 4294901760
    %1982 = vmatmul.f32.gmra.mxu0 %v1981
    %v1983 = vpop.f32.mrf.mxu0
    %v1984 = vadd.f32 %v1869, %v1983
    %v1985 = vand.u32 %v1430, 4294901760
    %v1986 = vsub.f32 %v1430, %v1985
    %v1987 = vand.u32 %v1986, 4294901760
    %1988 = vmatmul.f32.gmra.mxu0 %v1987
    %v1989 = vpop.f32.mrf.mxu0
    %v1990 = vadd.f32 %v1874, %v1989
    %v1991 = vand.u32 %v1432, 4294901760
    %v1992 = vsub.f32 %v1432, %v1991
    %v1993 = vand.u32 %v1992, 4294901760
    %1994 = vmatmul.f32.gmra.mxu0 %v1993
    %v1995 = vpop.f32.mrf.mxu0
    %v1996 = vadd.f32 %v1879, %v1995
    %v1997 = vand.u32 %v1434, 4294901760
    %v1998 = vsub.f32 %v1434, %v1997
    %v1999 = vand.u32 %v1998, 4294901760
    %2000 = vmatmul.f32.gmra.mxu0 %v1999
    %v2001 = vpop.f32.mrf.mxu0
    %v2002 = vadd.f32 %v1884, %v2001
    %v2003 = vand.u32 %v1436, 4294901760
    %v2004 = vsub.f32 %v1436, %v2003
    %v2005 = vand.u32 %v2004, 4294901760
    %2006 = vmatmul.f32.gmra.mxu0 %v2005
    %v2007 = vpop.f32.mrf.mxu0
    %v2008 = vadd.f32 %v1889, %v2007
    %v2009 = vand.u32 %v1438, 4294901760
    %v2010 = vsub.f32 %v1438, %v2009
    %v2011 = vand.u32 %v2010, 4294901760
    %2012 = vmatmul.f32.gmra.mxu0 %v2011
    %v2013 = vpop.f32.mrf.mxu0
    %v2014 = vadd.f32 %v1894, %v2013
    %v2015 = vand.u32 %v1440, 4294901760
    %v2016 = vsub.f32 %v1440, %v2015
    %v2017 = vand.u32 %v2016, 4294901760
    %2018 = vmatmul.f32.gmra.mxu0 %v2017
    %v2019 = vpop.f32.mrf.mxu0
    %v2020 = vadd.f32 %v1899, %v2019
    %v2021 = vand.u32 %v1442, 4294901760
    %v2022 = vsub.f32 %v1442, %v2021
    %v2023 = vand.u32 %v2022, 4294901760
    %2024 = vmatmul.f32.gmra.mxu0 %v2023
    %v2025 = vpop.f32.mrf.mxu0
    %v2026 = vadd.f32 %v1904, %v2025
    %v2027 = vand.u32 %v1444, 4294901760
    %v2028 = vsub.f32 %v1444, %v2027
    %v2029 = vand.u32 %v2028, 4294901760
    %2030 = vmatmul.f32.gmra.mxu0 %v2029
    %v2031 = vpop.f32.mrf.mxu0
    %v2032 = vadd.f32 %v1909, %v2031
    %v2033 = vand.u32 %v1446, 4294901760
    %v2034 = vsub.f32 %v1446, %v2033
    %v2035 = vand.u32 %v2034, 4294901760
    %2036 = vmatmul.f32.gmra.mxu0 %v2035
    %v2037 = vpop.f32.mrf.mxu0
    %v2038 = vadd.f32 %v1914, %v2037
    %v2039 = vand.u32 %v1448, 4294901760
    %v2040 = vsub.f32 %v1448, %v2039
    %v2041 = vand.u32 %v2040, 4294901760
    %2042 = vmatmul.f32.gmra.mxu0 %v2041
    %v2043 = vpop.f32.mrf.mxu0
    %v2044 = vadd.f32 %v1919, %v2043
    %v2045 = vand.u32 %v1450, 4294901760
    %v2046 = vsub.f32 %v1450, %v2045
    %v2047 = vand.u32 %v2046, 4294901760
    %2048 = vmatmul.f32.gmra.mxu0 %v2047
    %v2049 = vpop.f32.mrf.mxu0
    %v2050 = vadd.f32 %v1924, %v2049
    %v2051 = vand.u32 %v1452, 4294901760
    %v2052 = vsub.f32 %v1452, %v2051
    %v2053 = vand.u32 %v2052, 4294901760
    %2054 = vmatmul.f32.gmra.mxu0 %v2053
    %v2055 = vpop.f32.mrf.mxu0
    %v2056 = vadd.f32 %v1929, %v2055
    %v2057 = vand.u32 %v1454, 4294901760
    %v2058 = vsub.f32 %v1454, %v2057
    %v2059 = vand.u32 %v2058, 4294901760
    %2060 = vmatmul.f32.gmra.mxu0 %v2059
    %v2061 = vpop.f32.mrf.mxu0
    %v2062 = vadd.f32 %v1934, %v2061
    %v2063 = vand.u32 %v1456, 4294901760
    %v2064 = vsub.f32 %v1456, %v2063
    %v2065 = vand.u32 %v2064, 4294901760
    %2066 = vmatmul.f32.gmra.mxu0 %v2065
    %v2067 = vpop.f32.mrf.mxu0
    %v2068 = vadd.f32 %v1939, %v2067
    %2069 = vdwg.mxu0
    %v2070 = vand.u32 %v1488, 4294901760
    %v2071 = vsub.f32 %v1488, %v2070
    %v2072 = vand.u32 %v2071, 4294901760
    %2073 = vmatpush.xpose.msra.mxu0 %v2072
    %v2074 = vand.u32 %v1486, 4294901760
    %v2075 = vsub.f32 %v1486, %v2074
    %v2076 = vand.u32 %v2075, 4294901760
    %2077 = vmatpush.xpose.msra.mxu0 %v2076
    %v2078 = vand.u32 %v1484, 4294901760
    %v2079 = vsub.f32 %v1484, %v2078
    %v2080 = vand.u32 %v2079, 4294901760
    %2081 = vmatpush.xpose.msra.mxu0 %v2080
    %v2082 = vand.u32 %v1482, 4294901760
    %v2083 = vsub.f32 %v1482, %v2082
    %v2084 = vand.u32 %v2083, 4294901760
    %2085 = vmatpush.xpose.msra.mxu0 %v2084
    %v2086 = vand.u32 %v1480, 4294901760
    %v2087 = vsub.f32 %v1480, %v2086
    %v2088 = vand.u32 %v2087, 4294901760
    %2089 = vmatpush.xpose.msra.mxu0 %v2088
    %v2090 = vand.u32 %v1478, 4294901760
    %v2091 = vsub.f32 %v1478, %v2090
    %v2092 = vand.u32 %v2091, 4294901760
    %2093 = vmatpush.xpose.msra.mxu0 %v2092
    %v2094 = vand.u32 %v1476, 4294901760
    %v2095 = vsub.f32 %v1476, %v2094
    %v2096 = vand.u32 %v2095, 4294901760
    %2097 = vmatpush.xpose.msra.mxu0 %v2096
    %v2098 = vand.u32 %v1474, 4294901760
    %v2099 = vsub.f32 %v1474, %v2098
    %v2100 = vand.u32 %v2099, 4294901760
    %2101 = vmatpush.xpose.msra.mxu0 %v2100
    %v2102 = vand.u32 %v1472, 4294901760
    %v2103 = vsub.f32 %v1472, %v2102
    %v2104 = vand.u32 %v2103, 4294901760
    %2105 = vmatpush.xpose.msra.mxu0 %v2104
    %v2106 = vand.u32 %v1470, 4294901760
    %v2107 = vsub.f32 %v1470, %v2106
    %v2108 = vand.u32 %v2107, 4294901760
    %2109 = vmatpush.xpose.msra.mxu0 %v2108
    %v2110 = vand.u32 %v1468, 4294901760
    %v2111 = vsub.f32 %v1468, %v2110
    %v2112 = vand.u32 %v2111, 4294901760
    %2113 = vmatpush.xpose.msra.mxu0 %v2112
    %v2114 = vand.u32 %v1466, 4294901760
    %v2115 = vsub.f32 %v1466, %v2114
    %v2116 = vand.u32 %v2115, 4294901760
    %2117 = vmatpush.xpose.msra.mxu0 %v2116
    %v2118 = vand.u32 %v1464, 4294901760
    %v2119 = vsub.f32 %v1464, %v2118
    %v2120 = vand.u32 %v2119, 4294901760
    %2121 = vmatpush.xpose.msra.mxu0 %v2120
    %v2122 = vand.u32 %v1462, 4294901760
    %v2123 = vsub.f32 %v1462, %v2122
    %v2124 = vand.u32 %v2123, 4294901760
    %2125 = vmatpush.xpose.msra.mxu0 %v2124
    %v2126 = vand.u32 %v1460, 4294901760
    %v2127 = vsub.f32 %v1460, %v2126
    %v2128 = vand.u32 %v2127, 4294901760
    %2129 = vmatpush.xpose.msra.mxu0 %v2128
    %v2130 = vand.u32 %v1458, 4294901760
    %v2131 = vsub.f32 %v1458, %v2130
    %v2132 = vand.u32 %v2131, 4294901760
    %2133 = vmatpush.xpose.msra.mxu0 %v2132
    %v2134 = vand.u32 %v1426, 4294901760
    %2135 = vmatmul.f32.gmra.mxu0 %v2134
    %v2136 = vpop.f32.mrf.mxu0
    %v2137 = vadd.f32 %v1978, %v2136
    %v2138 = vand.u32 %v1428, 4294901760
    %2139 = vmatmul.f32.gmra.mxu0 %v2138
    %v2140 = vpop.f32.mrf.mxu0
    %v2141 = vadd.f32 %v1984, %v2140
    %v2142 = vand.u32 %v1430, 4294901760
    %2143 = vmatmul.f32.gmra.mxu0 %v2142
    %v2144 = vpop.f32.mrf.mxu0
    %v2145 = vadd.f32 %v1990, %v2144
    %v2146 = vand.u32 %v1432, 4294901760
    %2147 = vmatmul.f32.gmra.mxu0 %v2146
    %v2148 = vpop.f32.mrf.mxu0
    %v2149 = vadd.f32 %v1996, %v2148
    %v2150 = vand.u32 %v1434, 4294901760
    %2151 = vmatmul.f32.gmra.mxu0 %v2150
    %v2152 = vpop.f32.mrf.mxu0
    %v2153 = vadd.f32 %v2002, %v2152
    %v2154 = vand.u32 %v1436, 4294901760
    %2155 = vmatmul.f32.gmra.mxu0 %v2154
    %v2156 = vpop.f32.mrf.mxu0
    %v2157 = vadd.f32 %v2008, %v2156
    %v2158 = vand.u32 %v1438, 4294901760
    %2159 = vmatmul.f32.gmra.mxu0 %v2158
    %v2160 = vpop.f32.mrf.mxu0
    %v2161 = vadd.f32 %v2014, %v2160
    %v2162 = vand.u32 %v1440, 4294901760
    %2163 = vmatmul.f32.gmra.mxu0 %v2162
    %v2164 = vpop.f32.mrf.mxu0
    %v2165 = vadd.f32 %v2020, %v2164
    %v2166 = vand.u32 %v1442, 4294901760
    %2167 = vmatmul.f32.gmra.mxu0 %v2166
    %v2168 = vpop.f32.mrf.mxu0
    %v2169 = vadd.f32 %v2026, %v2168
    %v2170 = vand.u32 %v1444, 4294901760
    %2171 = vmatmul.f32.gmra.mxu0 %v2170
    %v2172 = vpop.f32.mrf.mxu0
    %v2173 = vadd.f32 %v2032, %v2172
    %v2174 = vand.u32 %v1446, 4294901760
    %2175 = vmatmul.f32.gmra.mxu0 %v2174
    %v2176 = vpop.f32.mrf.mxu0
    %v2177 = vadd.f32 %v2038, %v2176
    %v2178 = vand.u32 %v1448, 4294901760
    %2179 = vmatmul.f32.gmra.mxu0 %v2178
    %v2180 = vpop.f32.mrf.mxu0
    %v2181 = vadd.f32 %v2044, %v2180
    %v2182 = vand.u32 %v1450, 4294901760
    %2183 = vmatmul.f32.gmra.mxu0 %v2182
    %v2184 = vpop.f32.mrf.mxu0
    %v2185 = vadd.f32 %v2050, %v2184
    %v2186 = vand.u32 %v1452, 4294901760
    %2187 = vmatmul.f32.gmra.mxu0 %v2186
    %v2188 = vpop.f32.mrf.mxu0
    %v2189 = vadd.f32 %v2056, %v2188
    %v2190 = vand.u32 %v1454, 4294901760
    %2191 = vmatmul.f32.gmra.mxu0 %v2190
    %v2192 = vpop.f32.mrf.mxu0
    %v2193 = vadd.f32 %v2062, %v2192
    %v2194 = vand.u32 %v1456, 4294901760
    %2195 = vmatmul.f32.gmra.mxu0 %v2194
    %v2196 = vpop.f32.mrf.mxu0
    %v2197 = vadd.f32 %v2068, %v2196
    %2198 = vdwg.mxu0
    %v2199 = vand.u32 %v1488, 4294901760
    %2200 = vmatpush.xpose.msra.mxu0 %v2199
    %v2201 = vand.u32 %v1486, 4294901760
    %2202 = vmatpush.xpose.msra.mxu0 %v2201
    %v2203 = vand.u32 %v1484, 4294901760
    %2204 = vmatpush.xpose.msra.mxu0 %v2203
    %v2205 = vand.u32 %v1482, 4294901760
    %2206 = vmatpush.xpose.msra.mxu0 %v2205
    %v2207 = vand.u32 %v1480, 4294901760
    %2208 = vmatpush.xpose.msra.mxu0 %v2207
    %v2209 = vand.u32 %v1478, 4294901760
    %2210 = vmatpush.xpose.msra.mxu0 %v2209
    %v2211 = vand.u32 %v1476, 4294901760
    %2212 = vmatpush.xpose.msra.mxu0 %v2211
    %v2213 = vand.u32 %v1474, 4294901760
    %2214 = vmatpush.xpose.msra.mxu0 %v2213
    %v2215 = vand.u32 %v1472, 4294901760
    %2216 = vmatpush.xpose.msra.mxu0 %v2215
    %v2217 = vand.u32 %v1470, 4294901760
    %2218 = vmatpush.xpose.msra.mxu0 %v2217
    %v2219 = vand.u32 %v1468, 4294901760
    %2220 = vmatpush.xpose.msra.mxu0 %v2219
    %v2221 = vand.u32 %v1466, 4294901760
    %2222 = vmatpush.xpose.msra.mxu0 %v2221
    %v2223 = vand.u32 %v1464, 4294901760
    %2224 = vmatpush.xpose.msra.mxu0 %v2223
    %v2225 = vand.u32 %v1462, 4294901760
    %2226 = vmatpush.xpose.msra.mxu0 %v2225
    %v2227 = vand.u32 %v1460, 4294901760
    %2228 = vmatpush.xpose.msra.mxu0 %v2227
    %v2229 = vand.u32 %v1458, 4294901760
    %2230 = vmatpush.xpose.msra.mxu0 %v2229
    %v2231 = vand.u32 %v1426, 4294901760
    %2232 = vmatmul.f32.gmra.mxu0 %v2231
    %v2233 = vpop.f32.mrf.mxu0
    %v2234 = vadd.f32 %v2137, %v2233
    %v2235 = vand.u32 %v1428, 4294901760
    %2236 = vmatmul.f32.gmra.mxu0 %v2235
    %v2237 = vpop.f32.mrf.mxu0
    %v2238 = vadd.f32 %v2141, %v2237
    %v2239 = vand.u32 %v1430, 4294901760
    %2240 = vmatmul.f32.gmra.mxu0 %v2239
    %v2241 = vpop.f32.mrf.mxu0
    %v2242 = vadd.f32 %v2145, %v2241
    %v2243 = vand.u32 %v1432, 4294901760
    %2244 = vmatmul.f32.gmra.mxu0 %v2243
    %v2245 = vpop.f32.mrf.mxu0
    %v2246 = vadd.f32 %v2149, %v2245
    %v2247 = vand.u32 %v1434, 4294901760
    %2248 = vmatmul.f32.gmra.mxu0 %v2247
    %v2249 = vpop.f32.mrf.mxu0
    %v2250 = vadd.f32 %v2153, %v2249
    %v2251 = vand.u32 %v1436, 4294901760
    %2252 = vmatmul.f32.gmra.mxu0 %v2251
    %v2253 = vpop.f32.mrf.mxu0
    %v2254 = vadd.f32 %v2157, %v2253
    %v2255 = vand.u32 %v1438, 4294901760
    %2256 = vmatmul.f32.gmra.mxu0 %v2255
    %v2257 = vpop.f32.mrf.mxu0
    %v2258 = vadd.f32 %v2161, %v2257
    %v2259 = vand.u32 %v1440, 4294901760
    %2260 = vmatmul.f32.gmra.mxu0 %v2259
    %v2261 = vpop.f32.mrf.mxu0
    %v2262 = vadd.f32 %v2165, %v2261
    %v2263 = vand.u32 %v1442, 4294901760
    %2264 = vmatmul.f32.gmra.mxu0 %v2263
    %v2265 = vpop.f32.mrf.mxu0
    %v2266 = vadd.f32 %v2169, %v2265
    %v2267 = vand.u32 %v1444, 4294901760
    %2268 = vmatmul.f32.gmra.mxu0 %v2267
    %v2269 = vpop.f32.mrf.mxu0
    %v2270 = vadd.f32 %v2173, %v2269
    %v2271 = vand.u32 %v1446, 4294901760
    %2272 = vmatmul.f32.gmra.mxu0 %v2271
    %v2273 = vpop.f32.mrf.mxu0
    %v2274 = vadd.f32 %v2177, %v2273
    %v2275 = vand.u32 %v1448, 4294901760
    %2276 = vmatmul.f32.gmra.mxu0 %v2275
    %v2277 = vpop.f32.mrf.mxu0
    %v2278 = vadd.f32 %v2181, %v2277
    %v2279 = vand.u32 %v1450, 4294901760
    %2280 = vmatmul.f32.gmra.mxu0 %v2279
    %v2281 = vpop.f32.mrf.mxu0
    %v2282 = vadd.f32 %v2185, %v2281
    %v2283 = vand.u32 %v1452, 4294901760
    %2284 = vmatmul.f32.gmra.mxu0 %v2283
    %v2285 = vpop.f32.mrf.mxu0
    %v2286 = vadd.f32 %v2189, %v2285
    %v2287 = vand.u32 %v1454, 4294901760
    %2288 = vmatmul.f32.gmra.mxu0 %v2287
    %v2289 = vpop.f32.mrf.mxu0
    %v2290 = vadd.f32 %v2193, %v2289
    %v2291 = vand.u32 %v1456, 4294901760
    %2292 = vmatmul.f32.gmra.mxu0 %v2291
    %v2293 = vpop.f32.mrf.mxu0
    %v2294 = vadd.f32 %v2197, %v2293
    %2295 = vdwg.mxu0
    %v2296 = vlaneseq
    %v2297 = vshrl.u32 %v2296, 7
    %v2298 = vadd.s32 %v2297, 8
    %v2299 = vadd.s32 %v2297, 16
    %v2300 = vadd.s32 %v2297, 24
    %v2301 = vadd.s32 %v2297, 32
    %v2302 = vadd.s32 %v2297, 40
    %v2303 = vadd.s32 %v2297, 48
    %v2304 = vadd.s32 %v2297, 56
    %v2305 = vadd.s32 %v2297, 64
    %v2306 = vadd.s32 %v2297, 72
    %v2307 = vadd.s32 %v2297, 80
    %v2308 = vadd.s32 %v2297, 88
    %v2309 = vadd.s32 %v2297, 96
    %v2310 = vadd.s32 %v2297, 104
    %v2311 = vadd.s32 %v2297, 112
    %v2312 = vadd.s32 %v2297, 120
    %v2313 = vlaneseq
    %v2314 = vand.u32 %v2313, 127
    %vm2315 = vcmp.le.s32.totalorder %v2314, %v2297
    %vm2316 = vcmp.le.s32.totalorder %v2314, %v2298
    %vm2317 = vcmp.le.s32.totalorder %v2314, %v2299
    %vm2318 = vcmp.le.s32.totalorder %v2314, %v2300
    %vm2319 = vcmp.le.s32.totalorder %v2314, %v2301
    %vm2320 = vcmp.le.s32.totalorder %v2314, %v2302
    %vm2321 = vcmp.le.s32.totalorder %v2314, %v2303
    %vm2322 = vcmp.le.s32.totalorder %v2314, %v2304
    %vm2323 = vcmp.le.s32.totalorder %v2314, %v2305
    %vm2324 = vcmp.le.s32.totalorder %v2314, %v2306
    %vm2325 = vcmp.le.s32.totalorder %v2314, %v2307
    %vm2326 = vcmp.le.s32.totalorder %v2314, %v2308
    %vm2327 = vcmp.le.s32.totalorder %v2314, %v2309
    %vm2328 = vcmp.le.s32.totalorder %v2314, %v2310
    %vm2329 = vcmp.le.s32.totalorder %v2314, %v2311
    %vm2330 = vcmp.le.s32.totalorder %v2314, %v2312
    %v2331 = vsel %vm2315, %v2234, -1e+30
    %v2332 = vsel %vm2316, %v2238, -1e+30
    %v2333 = vsel %vm2317, %v2242, -1e+30
    %v2334 = vsel %vm2318, %v2246, -1e+30
    %v2335 = vsel %vm2319, %v2250, -1e+30
    %v2336 = vsel %vm2320, %v2254, -1e+30
    %v2337 = vsel %vm2321, %v2258, -1e+30
    %v2338 = vsel %vm2322, %v2262, -1e+30
    %v2339 = vsel %vm2323, %v2266, -1e+30
    %v2340 = vsel %vm2324, %v2270, -1e+30
    %v2341 = vsel %vm2325, %v2274, -1e+30
    %v2342 = vsel %vm2326, %v2278, -1e+30
    %v2343 = vsel %vm2327, %v2282, -1e+30
    %v2344 = vsel %vm2328, %v2286, -1e+30
    %v2345 = vsel %vm2329, %v2290, -1e+30
    %v2346 = vsel %vm2330, %v2294, -1e+30
    %2347 = vmax.xlane.f32.xlu0 %v2331
    %v2348 = vpop.xlane.xlu0 %2347
    %2349 = vmax.xlane.f32.xlu0 %v2332
    %v2350 = vpop.xlane.xlu0 %2349
    %2351 = vmax.xlane.f32.xlu0 %v2333
    %v2352 = vpop.xlane.xlu0 %2351
    %2353 = vmax.xlane.f32.xlu0 %v2334
    %v2354 = vpop.xlane.xlu0 %2353
    %2355 = vmax.xlane.f32.xlu0 %v2335
    %v2356 = vpop.xlane.xlu0 %2355
    %2357 = vmax.xlane.f32.xlu0 %v2336
    %v2358 = vpop.xlane.xlu0 %2357
    %2359 = vmax.xlane.f32.xlu0 %v2337
    %v2360 = vpop.xlane.xlu0 %2359
    %2361 = vmax.xlane.f32.xlu0 %v2338
    %v2362 = vpop.xlane.xlu0 %2361
    %2363 = vmax.xlane.f32.xlu0 %v2339
    %v2364 = vpop.xlane.xlu0 %2363
    %2365 = vmax.xlane.f32.xlu0 %v2340
    %v2366 = vpop.xlane.xlu0 %2365
    %2367 = vmax.xlane.f32.xlu0 %v2341
    %v2368 = vpop.xlane.xlu0 %2367
    %2369 = vmax.xlane.f32.xlu0 %v2342
    %v2370 = vpop.xlane.xlu0 %2369
    %2371 = vmax.xlane.f32.xlu0 %v2343
    %v2372 = vpop.xlane.xlu0 %2371
    %2373 = vmax.xlane.f32.xlu0 %v2344
    %v2374 = vpop.xlane.xlu0 %2373
    %2375 = vmax.xlane.f32.xlu0 %v2345
    %v2376 = vpop.xlane.xlu0 %2375
    %2377 = vmax.xlane.f32.xlu0 %v2346
    %v2378 = vpop.xlane.xlu0 %2377
    %v2379 = vsub.f32 %v2331, %v2348
    %v2380 = vsub.f32 %v2332, %v2350
    %v2381 = vsub.f32 %v2333, %v2352
    %v2382 = vsub.f32 %v2334, %v2354
    %v2383 = vsub.f32 %v2335, %v2356
    %v2384 = vsub.f32 %v2336, %v2358
    %v2385 = vsub.f32 %v2337, %v2360
    %v2386 = vsub.f32 %v2338, %v2362
    %v2387 = vsub.f32 %v2339, %v2364
    %v2388 = vsub.f32 %v2340, %v2366
    %v2389 = vsub.f32 %v2341, %v2368
    %v2390 = vsub.f32 %v2342, %v2370
    %v2391 = vsub.f32 %v2343, %v2372
    %v2392 = vsub.f32 %v2344, %v2374
    %v2393 = vsub.f32 %v2345, %v2376
    %v2394 = vsub.f32 %v2346, %v2378
    %v2395 = vmul.f32 %v2379, 1.442695
    %v2396 = vpow.pop %v2395
    %v2397 = vmul.f32 %v2380, 1.442695
    %v2398 = vpow.pop %v2397
    %v2399 = vmul.f32 %v2381, 1.442695
    %v2400 = vpow.pop %v2399
    %v2401 = vmul.f32 %v2382, 1.442695
    %v2402 = vpow.pop %v2401
    %v2403 = vmul.f32 %v2383, 1.442695
    %v2404 = vpow.pop %v2403
    %v2405 = vmul.f32 %v2384, 1.442695
    %v2406 = vpow.pop %v2405
    %v2407 = vmul.f32 %v2385, 1.442695
    %v2408 = vpow.pop %v2407
    %v2409 = vmul.f32 %v2386, 1.442695
    %v2410 = vpow.pop %v2409
    %v2411 = vmul.f32 %v2387, 1.442695
    %v2412 = vpow.pop %v2411
    %v2413 = vmul.f32 %v2388, 1.442695
    %v2414 = vpow.pop %v2413
    %v2415 = vmul.f32 %v2389, 1.442695
    %v2416 = vpow.pop %v2415
    %v2417 = vmul.f32 %v2390, 1.442695
    %v2418 = vpow.pop %v2417
    %v2419 = vmul.f32 %v2391, 1.442695
    %v2420 = vpow.pop %v2419
    %v2421 = vmul.f32 %v2392, 1.442695
    %v2422 = vpow.pop %v2421
    %v2423 = vmul.f32 %v2393, 1.442695
    %v2424 = vpow.pop %v2423
    %v2425 = vmul.f32 %v2394, 1.442695
    %v2426 = vpow.pop %v2425
    %2427 = vadd.xlane.f32.xlu0 %v2396
    %v2428 = vpop.xlane.xlu0 %2427
    %2429 = vadd.xlane.f32.xlu0 %v2398
    %v2430 = vpop.xlane.xlu0 %2429
    %2431 = vadd.xlane.f32.xlu0 %v2400
    %v2432 = vpop.xlane.xlu0 %2431
    %2433 = vadd.xlane.f32.xlu0 %v2402
    %v2434 = vpop.xlane.xlu0 %2433
    %2435 = vadd.xlane.f32.xlu0 %v2404
    %v2436 = vpop.xlane.xlu0 %2435
    %2437 = vadd.xlane.f32.xlu0 %v2406
    %v2438 = vpop.xlane.xlu0 %2437
    %2439 = vadd.xlane.f32.xlu0 %v2408
    %v2440 = vpop.xlane.xlu0 %2439
    %2441 = vadd.xlane.f32.xlu0 %v2410
    %v2442 = vpop.xlane.xlu0 %2441
    %2443 = vadd.xlane.f32.xlu0 %v2412
    %v2444 = vpop.xlane.xlu0 %2443
    %2445 = vadd.xlane.f32.xlu0 %v2414
    %v2446 = vpop.xlane.xlu0 %2445
    %2447 = vadd.xlane.f32.xlu0 %v2416
    %v2448 = vpop.xlane.xlu0 %2447
    %2449 = vadd.xlane.f32.xlu0 %v2418
    %v2450 = vpop.xlane.xlu0 %2449
    %2451 = vadd.xlane.f32.xlu0 %v2420
    %v2452 = vpop.xlane.xlu0 %2451
    %2453 = vadd.xlane.f32.xlu0 %v2422
    %v2454 = vpop.xlane.xlu0 %2453
    %2455 = vadd.xlane.f32.xlu0 %v2424
    %v2456 = vpop.xlane.xlu0 %2455
    %2457 = vadd.xlane.f32.xlu0 %v2426
    %v2458 = vpop.xlane.xlu0 %2457
    %2459 = vrot.lane.b32.xlu0 %v1251, 64
    %v2460 = vpop.permute.xlu0 %2459
    %2461 = vrot.lane.b32.xlu0 %v1255, 64
    %v2462 = vpop.permute.xlu0 %2461
    %2463 = vrot.lane.b32.xlu0 %v1259, 64
    %v2464 = vpop.permute.xlu0 %2463
    %2465 = vrot.lane.b32.xlu0 %v1263, 64
    %v2466 = vpop.permute.xlu0 %2465
    %2467 = vrot.lane.b32.xlu0 %v1267, 64
    %v2468 = vpop.permute.xlu0 %2467
    %2469 = vrot.lane.b32.xlu0 %v1271, 64
    %v2470 = vpop.permute.xlu0 %2469
    %2471 = vrot.lane.b32.xlu0 %v1275, 64
    %v2472 = vpop.permute.xlu0 %2471
    %2473 = vrot.lane.b32.xlu0 %v1279, 64
    %v2474 = vpop.permute.xlu0 %2473
    %2475 = vrot.lane.b32.xlu0 %v1283, 64
    %v2476 = vpop.permute.xlu0 %2475
    %2477 = vrot.lane.b32.xlu0 %v1287, 64
    %v2478 = vpop.permute.xlu0 %2477
    %2479 = vrot.lane.b32.xlu0 %v1291, 64
    %v2480 = vpop.permute.xlu0 %2479
    %2481 = vrot.lane.b32.xlu0 %v1295, 64
    %v2482 = vpop.permute.xlu0 %2481
    %2483 = vrot.lane.b32.xlu0 %v1299, 64
    %v2484 = vpop.permute.xlu0 %2483
    %2485 = vrot.lane.b32.xlu0 %v1303, 64
    %v2486 = vpop.permute.xlu0 %2485
    %2487 = vrot.lane.b32.xlu0 %v1307, 64
    %v2488 = vpop.permute.xlu0 %2487
    %2489 = vrot.lane.b32.xlu0 %v1311, 64
    %v2490 = vpop.permute.xlu0 %2489
    %v2507 = vand.u32 %v2490, 4294901760
    %2508 = vmatpush.msra.mxu0 %v2507
    %v2509 = vand.u32 %v2488, 4294901760
    %2510 = vmatpush.msra.mxu0 %v2509
    %v2511 = vand.u32 %v2486, 4294901760
    %2512 = vmatpush.msra.mxu0 %v2511
    %v2513 = vand.u32 %v2484, 4294901760
    %2514 = vmatpush.msra.mxu0 %v2513
    %v2515 = vand.u32 %v2482, 4294901760
    %2516 = vmatpush.msra.mxu0 %v2515
    %v2517 = vand.u32 %v2480, 4294901760
    %2518 = vmatpush.msra.mxu0 %v2517
    %v2519 = vand.u32 %v2478, 4294901760
    %2520 = vmatpush.msra.mxu0 %v2519
    %v2521 = vand.u32 %v2476, 4294901760
    %2522 = vmatpush.msra.mxu0 %v2521
    %v2523 = vand.u32 %v2474, 4294901760
    %2524 = vmatpush.msra.mxu0 %v2523
    %v2525 = vand.u32 %v2472, 4294901760
    %2526 = vmatpush.msra.mxu0 %v2525
    %v2527 = vand.u32 %v2470, 4294901760
    %2528 = vmatpush.msra.mxu0 %v2527
    %v2529 = vand.u32 %v2468, 4294901760
    %2530 = vmatpush.msra.mxu0 %v2529
    %v2531 = vand.u32 %v2466, 4294901760
    %2532 = vmatpush.msra.mxu0 %v2531
    %v2533 = vand.u32 %v2464, 4294901760
    %2534 = vmatpush.msra.mxu0 %v2533
    %v2535 = vand.u32 %v2462, 4294901760
    %2536 = vmatpush.msra.mxu0 %v2535
    %v2537 = vand.u32 %v2460, 4294901760
    %2538 = vmatpush.msra.mxu0 %v2537
    %v2539 = vand.u32 %v2396, 4294901760
    %v2540 = vsub.f32 %v2396, %v2539
    %v2541 = vand.u32 %v2540, 4294901760
    %v2542 = vsub.f32 %v2540, %v2541
    %v2543 = vand.u32 %v2542, 4294901760
    %2544 = vmatmul.f32.gmra.mxu0 %v2543
    %v2545 = vpop.f32.mrf.mxu0
    %v2546 = vadd.f32 0.0, %v2545
    %v2547 = vand.u32 %v2398, 4294901760
    %v2548 = vsub.f32 %v2398, %v2547
    %v2549 = vand.u32 %v2548, 4294901760
    %v2550 = vsub.f32 %v2548, %v2549
    %v2551 = vand.u32 %v2550, 4294901760
    %2552 = vmatmul.f32.gmra.mxu0 %v2551
    %v2553 = vpop.f32.mrf.mxu0
    %v2554 = vadd.f32 0.0, %v2553
    %v2555 = vand.u32 %v2400, 4294901760
    %v2556 = vsub.f32 %v2400, %v2555
    %v2557 = vand.u32 %v2556, 4294901760
    %v2558 = vsub.f32 %v2556, %v2557
    %v2559 = vand.u32 %v2558, 4294901760
    %2560 = vmatmul.f32.gmra.mxu0 %v2559
    %v2561 = vpop.f32.mrf.mxu0
    %v2562 = vadd.f32 0.0, %v2561
    %v2563 = vand.u32 %v2402, 4294901760
    %v2564 = vsub.f32 %v2402, %v2563
    %v2565 = vand.u32 %v2564, 4294901760
    %v2566 = vsub.f32 %v2564, %v2565
    %v2567 = vand.u32 %v2566, 4294901760
    %2568 = vmatmul.f32.gmra.mxu0 %v2567
    %v2569 = vpop.f32.mrf.mxu0
    %v2570 = vadd.f32 0.0, %v2569
    %v2571 = vand.u32 %v2404, 4294901760
    %v2572 = vsub.f32 %v2404, %v2571
    %v2573 = vand.u32 %v2572, 4294901760
    %v2574 = vsub.f32 %v2572, %v2573
    %v2575 = vand.u32 %v2574, 4294901760
    %2576 = vmatmul.f32.gmra.mxu0 %v2575
    %v2577 = vpop.f32.mrf.mxu0
    %v2578 = vadd.f32 0.0, %v2577
    %v2579 = vand.u32 %v2406, 4294901760
    %v2580 = vsub.f32 %v2406, %v2579
    %v2581 = vand.u32 %v2580, 4294901760
    %v2582 = vsub.f32 %v2580, %v2581
    %v2583 = vand.u32 %v2582, 4294901760
    %2584 = vmatmul.f32.gmra.mxu0 %v2583
    %v2585 = vpop.f32.mrf.mxu0
    %v2586 = vadd.f32 0.0, %v2585
    %v2587 = vand.u32 %v2408, 4294901760
    %v2588 = vsub.f32 %v2408, %v2587
    %v2589 = vand.u32 %v2588, 4294901760
    %v2590 = vsub.f32 %v2588, %v2589
    %v2591 = vand.u32 %v2590, 4294901760
    %2592 = vmatmul.f32.gmra.mxu0 %v2591
    %v2593 = vpop.f32.mrf.mxu0
    %v2594 = vadd.f32 0.0, %v2593
    %v2595 = vand.u32 %v2410, 4294901760
    %v2596 = vsub.f32 %v2410, %v2595
    %v2597 = vand.u32 %v2596, 4294901760
    %v2598 = vsub.f32 %v2596, %v2597
    %v2599 = vand.u32 %v2598, 4294901760
    %2600 = vmatmul.f32.gmra.mxu0 %v2599
    %v2601 = vpop.f32.mrf.mxu0
    %v2602 = vadd.f32 0.0, %v2601
    %v2603 = vand.u32 %v2412, 4294901760
    %v2604 = vsub.f32 %v2412, %v2603
    %v2605 = vand.u32 %v2604, 4294901760
    %v2606 = vsub.f32 %v2604, %v2605
    %v2607 = vand.u32 %v2606, 4294901760
    %2608 = vmatmul.f32.gmra.mxu0 %v2607
    %v2609 = vpop.f32.mrf.mxu0
    %v2610 = vadd.f32 0.0, %v2609
    %v2611 = vand.u32 %v2414, 4294901760
    %v2612 = vsub.f32 %v2414, %v2611
    %v2613 = vand.u32 %v2612, 4294901760
    %v2614 = vsub.f32 %v2612, %v2613
    %v2615 = vand.u32 %v2614, 4294901760
    %2616 = vmatmul.f32.gmra.mxu0 %v2615
    %v2617 = vpop.f32.mrf.mxu0
    %v2618 = vadd.f32 0.0, %v2617
    %v2619 = vand.u32 %v2416, 4294901760
    %v2620 = vsub.f32 %v2416, %v2619
    %v2621 = vand.u32 %v2620, 4294901760
    %v2622 = vsub.f32 %v2620, %v2621
    %v2623 = vand.u32 %v2622, 4294901760
    %2624 = vmatmul.f32.gmra.mxu0 %v2623
    %v2625 = vpop.f32.mrf.mxu0
    %v2626 = vadd.f32 0.0, %v2625
    %v2627 = vand.u32 %v2418, 4294901760
    %v2628 = vsub.f32 %v2418, %v2627
    %v2629 = vand.u32 %v2628, 4294901760
    %v2630 = vsub.f32 %v2628, %v2629
    %v2631 = vand.u32 %v2630, 4294901760
    %2632 = vmatmul.f32.gmra.mxu0 %v2631
    %v2633 = vpop.f32.mrf.mxu0
    %v2634 = vadd.f32 0.0, %v2633
    %v2635 = vand.u32 %v2420, 4294901760
    %v2636 = vsub.f32 %v2420, %v2635
    %v2637 = vand.u32 %v2636, 4294901760
    %v2638 = vsub.f32 %v2636, %v2637
    %v2639 = vand.u32 %v2638, 4294901760
    %2640 = vmatmul.f32.gmra.mxu0 %v2639
    %v2641 = vpop.f32.mrf.mxu0
    %v2642 = vadd.f32 0.0, %v2641
    %v2643 = vand.u32 %v2422, 4294901760
    %v2644 = vsub.f32 %v2422, %v2643
    %v2645 = vand.u32 %v2644, 4294901760
    %v2646 = vsub.f32 %v2644, %v2645
    %v2647 = vand.u32 %v2646, 4294901760
    %2648 = vmatmul.f32.gmra.mxu0 %v2647
    %v2649 = vpop.f32.mrf.mxu0
    %v2650 = vadd.f32 0.0, %v2649
    %v2651 = vand.u32 %v2424, 4294901760
    %v2652 = vsub.f32 %v2424, %v2651
    %v2653 = vand.u32 %v2652, 4294901760
    %v2654 = vsub.f32 %v2652, %v2653
    %v2655 = vand.u32 %v2654, 4294901760
    %2656 = vmatmul.f32.gmra.mxu0 %v2655
    %v2657 = vpop.f32.mrf.mxu0
    %v2658 = vadd.f32 0.0, %v2657
    %v2659 = vand.u32 %v2426, 4294901760
    %v2660 = vsub.f32 %v2426, %v2659
    %v2661 = vand.u32 %v2660, 4294901760
    %v2662 = vsub.f32 %v2660, %v2661
    %v2663 = vand.u32 %v2662, 4294901760
    %2664 = vmatmul.f32.gmra.mxu0 %v2663
    %v2665 = vpop.f32.mrf.mxu0
    %v2666 = vadd.f32 0.0, %v2665
    %2667 = vdwg.mxu0
    %v2668 = vand.u32 %v2490, 4294901760
    %v2669 = vsub.f32 %v2490, %v2668
    %v2670 = vand.u32 %v2669, 4294901760
    %v2671 = vsub.f32 %v2669, %v2670
    %v2672 = vand.u32 %v2671, 4294901760
    %2673 = vmatpush.msra.mxu0 %v2672
    %v2674 = vand.u32 %v2488, 4294901760
    %v2675 = vsub.f32 %v2488, %v2674
    %v2676 = vand.u32 %v2675, 4294901760
    %v2677 = vsub.f32 %v2675, %v2676
    %v2678 = vand.u32 %v2677, 4294901760
    %2679 = vmatpush.msra.mxu0 %v2678
    %v2680 = vand.u32 %v2486, 4294901760
    %v2681 = vsub.f32 %v2486, %v2680
    %v2682 = vand.u32 %v2681, 4294901760
    %v2683 = vsub.f32 %v2681, %v2682
    %v2684 = vand.u32 %v2683, 4294901760
    %2685 = vmatpush.msra.mxu0 %v2684
    %v2686 = vand.u32 %v2484, 4294901760
    %v2687 = vsub.f32 %v2484, %v2686
    %v2688 = vand.u32 %v2687, 4294901760
    %v2689 = vsub.f32 %v2687, %v2688
    %v2690 = vand.u32 %v2689, 4294901760
    %2691 = vmatpush.msra.mxu0 %v2690
    %v2692 = vand.u32 %v2482, 4294901760
    %v2693 = vsub.f32 %v2482, %v2692
    %v2694 = vand.u32 %v2693, 4294901760
    %v2695 = vsub.f32 %v2693, %v2694
    %v2696 = vand.u32 %v2695, 4294901760
    %2697 = vmatpush.msra.mxu0 %v2696
    %v2698 = vand.u32 %v2480, 4294901760
    %v2699 = vsub.f32 %v2480, %v2698
    %v2700 = vand.u32 %v2699, 4294901760
    %v2701 = vsub.f32 %v2699, %v2700
    %v2702 = vand.u32 %v2701, 4294901760
    %2703 = vmatpush.msra.mxu0 %v2702
    %v2704 = vand.u32 %v2478, 4294901760
    %v2705 = vsub.f32 %v2478, %v2704
    %v2706 = vand.u32 %v2705, 4294901760
    %v2707 = vsub.f32 %v2705, %v2706
    %v2708 = vand.u32 %v2707, 4294901760
    %2709 = vmatpush.msra.mxu0 %v2708
    %v2710 = vand.u32 %v2476, 4294901760
    %v2711 = vsub.f32 %v2476, %v2710
    %v2712 = vand.u32 %v2711, 4294901760
    %v2713 = vsub.f32 %v2711, %v2712
    %v2714 = vand.u32 %v2713, 4294901760
    %2715 = vmatpush.msra.mxu0 %v2714
    %v2716 = vand.u32 %v2474, 4294901760
    %v2717 = vsub.f32 %v2474, %v2716
    %v2718 = vand.u32 %v2717, 4294901760
    %v2719 = vsub.f32 %v2717, %v2718
    %v2720 = vand.u32 %v2719, 4294901760
    %2721 = vmatpush.msra.mxu0 %v2720
    %v2722 = vand.u32 %v2472, 4294901760
    %v2723 = vsub.f32 %v2472, %v2722
    %v2724 = vand.u32 %v2723, 4294901760
    %v2725 = vsub.f32 %v2723, %v2724
    %v2726 = vand.u32 %v2725, 4294901760
    %2727 = vmatpush.msra.mxu0 %v2726
    %v2728 = vand.u32 %v2470, 4294901760
    %v2729 = vsub.f32 %v2470, %v2728
    %v2730 = vand.u32 %v2729, 4294901760
    %v2731 = vsub.f32 %v2729, %v2730
    %v2732 = vand.u32 %v2731, 4294901760
    %2733 = vmatpush.msra.mxu0 %v2732
    %v2734 = vand.u32 %v2468, 4294901760
    %v2735 = vsub.f32 %v2468, %v2734
    %v2736 = vand.u32 %v2735, 4294901760
    %v2737 = vsub.f32 %v2735, %v2736
    %v2738 = vand.u32 %v2737, 4294901760
    %2739 = vmatpush.msra.mxu0 %v2738
    %v2740 = vand.u32 %v2466, 4294901760
    %v2741 = vsub.f32 %v2466, %v2740
    %v2742 = vand.u32 %v2741, 4294901760
    %v2743 = vsub.f32 %v2741, %v2742
    %v2744 = vand.u32 %v2743, 4294901760
    %2745 = vmatpush.msra.mxu0 %v2744
    %v2746 = vand.u32 %v2464, 4294901760
    %v2747 = vsub.f32 %v2464, %v2746
    %v2748 = vand.u32 %v2747, 4294901760
    %v2749 = vsub.f32 %v2747, %v2748
    %v2750 = vand.u32 %v2749, 4294901760
    %2751 = vmatpush.msra.mxu0 %v2750
    %v2752 = vand.u32 %v2462, 4294901760
    %v2753 = vsub.f32 %v2462, %v2752
    %v2754 = vand.u32 %v2753, 4294901760
    %v2755 = vsub.f32 %v2753, %v2754
    %v2756 = vand.u32 %v2755, 4294901760
    %2757 = vmatpush.msra.mxu0 %v2756
    %v2758 = vand.u32 %v2460, 4294901760
    %v2759 = vsub.f32 %v2460, %v2758
    %v2760 = vand.u32 %v2759, 4294901760
    %v2761 = vsub.f32 %v2759, %v2760
    %v2762 = vand.u32 %v2761, 4294901760
    %2763 = vmatpush.msra.mxu0 %v2762
    %v2764 = vand.u32 %v2396, 4294901760
    %2765 = vmatmul.f32.gmra.mxu0 %v2764
    %v2766 = vpop.f32.mrf.mxu0
    %v2767 = vadd.f32 %v2546, %v2766
    %v2768 = vand.u32 %v2398, 4294901760
    %2769 = vmatmul.f32.gmra.mxu0 %v2768
    %v2770 = vpop.f32.mrf.mxu0
    %v2771 = vadd.f32 %v2554, %v2770
    %v2772 = vand.u32 %v2400, 4294901760
    %2773 = vmatmul.f32.gmra.mxu0 %v2772
    %v2774 = vpop.f32.mrf.mxu0
    %v2775 = vadd.f32 %v2562, %v2774
    %v2776 = vand.u32 %v2402, 4294901760
    %2777 = vmatmul.f32.gmra.mxu0 %v2776
    %v2778 = vpop.f32.mrf.mxu0
    %v2779 = vadd.f32 %v2570, %v2778
    %v2780 = vand.u32 %v2404, 4294901760
    %2781 = vmatmul.f32.gmra.mxu0 %v2780
    %v2782 = vpop.f32.mrf.mxu0
    %v2783 = vadd.f32 %v2578, %v2782
    %v2784 = vand.u32 %v2406, 4294901760
    %2785 = vmatmul.f32.gmra.mxu0 %v2784
    %v2786 = vpop.f32.mrf.mxu0
    %v2787 = vadd.f32 %v2586, %v2786
    %v2788 = vand.u32 %v2408, 4294901760
    %2789 = vmatmul.f32.gmra.mxu0 %v2788
    %v2790 = vpop.f32.mrf.mxu0
    %v2791 = vadd.f32 %v2594, %v2790
    %v2792 = vand.u32 %v2410, 4294901760
    %2793 = vmatmul.f32.gmra.mxu0 %v2792
    %v2794 = vpop.f32.mrf.mxu0
    %v2795 = vadd.f32 %v2602, %v2794
    %v2796 = vand.u32 %v2412, 4294901760
    %2797 = vmatmul.f32.gmra.mxu0 %v2796
    %v2798 = vpop.f32.mrf.mxu0
    %v2799 = vadd.f32 %v2610, %v2798
    %v2800 = vand.u32 %v2414, 4294901760
    %2801 = vmatmul.f32.gmra.mxu0 %v2800
    %v2802 = vpop.f32.mrf.mxu0
    %v2803 = vadd.f32 %v2618, %v2802
    %v2804 = vand.u32 %v2416, 4294901760
    %2805 = vmatmul.f32.gmra.mxu0 %v2804
    %v2806 = vpop.f32.mrf.mxu0
    %v2807 = vadd.f32 %v2626, %v2806
    %v2808 = vand.u32 %v2418, 4294901760
    %2809 = vmatmul.f32.gmra.mxu0 %v2808
    %v2810 = vpop.f32.mrf.mxu0
    %v2811 = vadd.f32 %v2634, %v2810
    %v2812 = vand.u32 %v2420, 4294901760
    %2813 = vmatmul.f32.gmra.mxu0 %v2812
    %v2814 = vpop.f32.mrf.mxu0
    %v2815 = vadd.f32 %v2642, %v2814
    %v2816 = vand.u32 %v2422, 4294901760
    %2817 = vmatmul.f32.gmra.mxu0 %v2816
    %v2818 = vpop.f32.mrf.mxu0
    %v2819 = vadd.f32 %v2650, %v2818
    %v2820 = vand.u32 %v2424, 4294901760
    %2821 = vmatmul.f32.gmra.mxu0 %v2820
    %v2822 = vpop.f32.mrf.mxu0
    %v2823 = vadd.f32 %v2658, %v2822
    %v2824 = vand.u32 %v2426, 4294901760
    %2825 = vmatmul.f32.gmra.mxu0 %v2824
    %v2826 = vpop.f32.mrf.mxu0
    %v2827 = vadd.f32 %v2666, %v2826
    %2828 = vdwg.mxu0
    %v2829 = vand.u32 %v2490, 4294901760
    %v2830 = vsub.f32 %v2490, %v2829
    %2831 = vmatpush.msra.mxu0 %v2830
    %v2832 = vand.u32 %v2488, 4294901760
    %v2833 = vsub.f32 %v2488, %v2832
    %2834 = vmatpush.msra.mxu0 %v2833
    %v2835 = vand.u32 %v2486, 4294901760
    %v2836 = vsub.f32 %v2486, %v2835
    %2837 = vmatpush.msra.mxu0 %v2836
    %v2838 = vand.u32 %v2484, 4294901760
    %v2839 = vsub.f32 %v2484, %v2838
    %2840 = vmatpush.msra.mxu0 %v2839
    %v2841 = vand.u32 %v2482, 4294901760
    %v2842 = vsub.f32 %v2482, %v2841
    %2843 = vmatpush.msra.mxu0 %v2842
    %v2844 = vand.u32 %v2480, 4294901760
    %v2845 = vsub.f32 %v2480, %v2844
    %2846 = vmatpush.msra.mxu0 %v2845
    %v2847 = vand.u32 %v2478, 4294901760
    %v2848 = vsub.f32 %v2478, %v2847
    %2849 = vmatpush.msra.mxu0 %v2848
    %v2850 = vand.u32 %v2476, 4294901760
    %v2851 = vsub.f32 %v2476, %v2850
    %2852 = vmatpush.msra.mxu0 %v2851
    %v2853 = vand.u32 %v2474, 4294901760
    %v2854 = vsub.f32 %v2474, %v2853
    %2855 = vmatpush.msra.mxu0 %v2854
    %v2856 = vand.u32 %v2472, 4294901760
    %v2857 = vsub.f32 %v2472, %v2856
    %2858 = vmatpush.msra.mxu0 %v2857
    %v2859 = vand.u32 %v2470, 4294901760
    %v2860 = vsub.f32 %v2470, %v2859
    %2861 = vmatpush.msra.mxu0 %v2860
    %v2862 = vand.u32 %v2468, 4294901760
    %v2863 = vsub.f32 %v2468, %v2862
    %2864 = vmatpush.msra.mxu0 %v2863
    %v2865 = vand.u32 %v2466, 4294901760
    %v2866 = vsub.f32 %v2466, %v2865
    %2867 = vmatpush.msra.mxu0 %v2866
    %v2868 = vand.u32 %v2464, 4294901760
    %v2869 = vsub.f32 %v2464, %v2868
    %2870 = vmatpush.msra.mxu0 %v2869
    %v2871 = vand.u32 %v2462, 4294901760
    %v2872 = vsub.f32 %v2462, %v2871
    %2873 = vmatpush.msra.mxu0 %v2872
    %v2874 = vand.u32 %v2460, 4294901760
    %v2875 = vsub.f32 %v2460, %v2874
    %2876 = vmatpush.msra.mxu0 %v2875
    %v2877 = vand.u32 %v2396, 4294901760
    %v2878 = vsub.f32 %v2396, %v2877
    %2879 = vmatmul.f32.gmra.mxu0 %v2878
    %v2880 = vpop.f32.mrf.mxu0
    %v2881 = vadd.f32 %v2767, %v2880
    %v2882 = vand.u32 %v2398, 4294901760
    %v2883 = vsub.f32 %v2398, %v2882
    %2884 = vmatmul.f32.gmra.mxu0 %v2883
    %v2885 = vpop.f32.mrf.mxu0
    %v2886 = vadd.f32 %v2771, %v2885
    %v2887 = vand.u32 %v2400, 4294901760
    %v2888 = vsub.f32 %v2400, %v2887
    %2889 = vmatmul.f32.gmra.mxu0 %v2888
    %v2890 = vpop.f32.mrf.mxu0
    %v2891 = vadd.f32 %v2775, %v2890
    %v2892 = vand.u32 %v2402, 4294901760
    %v2893 = vsub.f32 %v2402, %v2892
    %2894 = vmatmul.f32.gmra.mxu0 %v2893
    %v2895 = vpop.f32.mrf.mxu0
    %v2896 = vadd.f32 %v2779, %v2895
    %v2897 = vand.u32 %v2404, 4294901760
    %v2898 = vsub.f32 %v2404, %v2897
    %2899 = vmatmul.f32.gmra.mxu0 %v2898
    %v2900 = vpop.f32.mrf.mxu0
    %v2901 = vadd.f32 %v2783, %v2900
    %v2902 = vand.u32 %v2406, 4294901760
    %v2903 = vsub.f32 %v2406, %v2902
    %2904 = vmatmul.f32.gmra.mxu0 %v2903
    %v2905 = vpop.f32.mrf.mxu0
    %v2906 = vadd.f32 %v2787, %v2905
    %v2907 = vand.u32 %v2408, 4294901760
    %v2908 = vsub.f32 %v2408, %v2907
    %2909 = vmatmul.f32.gmra.mxu0 %v2908
    %v2910 = vpop.f32.mrf.mxu0
    %v2911 = vadd.f32 %v2791, %v2910
    %v2912 = vand.u32 %v2410, 4294901760
    %v2913 = vsub.f32 %v2410, %v2912
    %2914 = vmatmul.f32.gmra.mxu0 %v2913
    %v2915 = vpop.f32.mrf.mxu0
    %v2916 = vadd.f32 %v2795, %v2915
    %v2917 = vand.u32 %v2412, 4294901760
    %v2918 = vsub.f32 %v2412, %v2917
    %2919 = vmatmul.f32.gmra.mxu0 %v2918
    %v2920 = vpop.f32.mrf.mxu0
    %v2921 = vadd.f32 %v2799, %v2920
    %v2922 = vand.u32 %v2414, 4294901760
    %v2923 = vsub.f32 %v2414, %v2922
    %2924 = vmatmul.f32.gmra.mxu0 %v2923
    %v2925 = vpop.f32.mrf.mxu0
    %v2926 = vadd.f32 %v2803, %v2925
    %v2927 = vand.u32 %v2416, 4294901760
    %v2928 = vsub.f32 %v2416, %v2927
    %2929 = vmatmul.f32.gmra.mxu0 %v2928
    %v2930 = vpop.f32.mrf.mxu0
    %v2931 = vadd.f32 %v2807, %v2930
    %v2932 = vand.u32 %v2418, 4294901760
    %v2933 = vsub.f32 %v2418, %v2932
    %2934 = vmatmul.f32.gmra.mxu0 %v2933
    %v2935 = vpop.f32.mrf.mxu0
    %v2936 = vadd.f32 %v2811, %v2935
    %v2937 = vand.u32 %v2420, 4294901760
    %v2938 = vsub.f32 %v2420, %v2937
    %2939 = vmatmul.f32.gmra.mxu0 %v2938
    %v2940 = vpop.f32.mrf.mxu0
    %v2941 = vadd.f32 %v2815, %v2940
    %v2942 = vand.u32 %v2422, 4294901760
    %v2943 = vsub.f32 %v2422, %v2942
    %2944 = vmatmul.f32.gmra.mxu0 %v2943
    %v2945 = vpop.f32.mrf.mxu0
    %v2946 = vadd.f32 %v2819, %v2945
    %v2947 = vand.u32 %v2424, 4294901760
    %v2948 = vsub.f32 %v2424, %v2947
    %2949 = vmatmul.f32.gmra.mxu0 %v2948
    %v2950 = vpop.f32.mrf.mxu0
    %v2951 = vadd.f32 %v2823, %v2950
    %v2952 = vand.u32 %v2426, 4294901760
    %v2953 = vsub.f32 %v2426, %v2952
    %2954 = vmatmul.f32.gmra.mxu0 %v2953
    %v2955 = vpop.f32.mrf.mxu0
    %v2956 = vadd.f32 %v2827, %v2955
    %2957 = vdwg.mxu0
    %v2958 = vand.u32 %v2490, 4294901760
    %2959 = vmatpush.msra.mxu0 %v2958
    %v2960 = vand.u32 %v2488, 4294901760
    %2961 = vmatpush.msra.mxu0 %v2960
    %v2962 = vand.u32 %v2486, 4294901760
    %2963 = vmatpush.msra.mxu0 %v2962
    %v2964 = vand.u32 %v2484, 4294901760
    %2965 = vmatpush.msra.mxu0 %v2964
    %v2966 = vand.u32 %v2482, 4294901760
    %2967 = vmatpush.msra.mxu0 %v2966
    %v2968 = vand.u32 %v2480, 4294901760
    %2969 = vmatpush.msra.mxu0 %v2968
    %v2970 = vand.u32 %v2478, 4294901760
    %2971 = vmatpush.msra.mxu0 %v2970
    %v2972 = vand.u32 %v2476, 4294901760
    %2973 = vmatpush.msra.mxu0 %v2972
    %v2974 = vand.u32 %v2474, 4294901760
    %2975 = vmatpush.msra.mxu0 %v2974
    %v2976 = vand.u32 %v2472, 4294901760
    %2977 = vmatpush.msra.mxu0 %v2976
    %v2978 = vand.u32 %v2470, 4294901760
    %2979 = vmatpush.msra.mxu0 %v2978
    %v2980 = vand.u32 %v2468, 4294901760
    %2981 = vmatpush.msra.mxu0 %v2980
    %v2982 = vand.u32 %v2466, 4294901760
    %2983 = vmatpush.msra.mxu0 %v2982
    %v2984 = vand.u32 %v2464, 4294901760
    %2985 = vmatpush.msra.mxu0 %v2984
    %v2986 = vand.u32 %v2462, 4294901760
    %2987 = vmatpush.msra.mxu0 %v2986
    %v2988 = vand.u32 %v2460, 4294901760
    %2989 = vmatpush.msra.mxu0 %v2988
    %v2990 = vand.u32 %v2396, 4294901760
    %v2991 = vsub.f32 %v2396, %v2990
    %v2992 = vand.u32 %v2991, 4294901760
    %2993 = vmatmul.f32.gmra.mxu0 %v2992
    %v2994 = vpop.f32.mrf.mxu0
    %v2995 = vadd.f32 %v2881, %v2994
    %v2996 = vand.u32 %v2398, 4294901760
    %v2997 = vsub.f32 %v2398, %v2996
    %v2998 = vand.u32 %v2997, 4294901760
    %2999 = vmatmul.f32.gmra.mxu0 %v2998
    %v3000 = vpop.f32.mrf.mxu0
    %v3001 = vadd.f32 %v2886, %v3000
    %v3002 = vand.u32 %v2400, 4294901760
    %v3003 = vsub.f32 %v2400, %v3002
    %v3004 = vand.u32 %v3003, 4294901760
    %3005 = vmatmul.f32.gmra.mxu0 %v3004
    %v3006 = vpop.f32.mrf.mxu0
    %v3007 = vadd.f32 %v2891, %v3006
    %v3008 = vand.u32 %v2402, 4294901760
    %v3009 = vsub.f32 %v2402, %v3008
    %v3010 = vand.u32 %v3009, 4294901760
    %3011 = vmatmul.f32.gmra.mxu0 %v3010
    %v3012 = vpop.f32.mrf.mxu0
    %v3013 = vadd.f32 %v2896, %v3012
    %v3014 = vand.u32 %v2404, 4294901760
    %v3015 = vsub.f32 %v2404, %v3014
    %v3016 = vand.u32 %v3015, 4294901760
    %3017 = vmatmul.f32.gmra.mxu0 %v3016
    %v3018 = vpop.f32.mrf.mxu0
    %v3019 = vadd.f32 %v2901, %v3018
    %v3020 = vand.u32 %v2406, 4294901760
    %v3021 = vsub.f32 %v2406, %v3020
    %v3022 = vand.u32 %v3021, 4294901760
    %3023 = vmatmul.f32.gmra.mxu0 %v3022
    %v3024 = vpop.f32.mrf.mxu0
    %v3025 = vadd.f32 %v2906, %v3024
    %v3026 = vand.u32 %v2408, 4294901760
    %v3027 = vsub.f32 %v2408, %v3026
    %v3028 = vand.u32 %v3027, 4294901760
    %3029 = vmatmul.f32.gmra.mxu0 %v3028
    %v3030 = vpop.f32.mrf.mxu0
    %v3031 = vadd.f32 %v2911, %v3030
    %v3032 = vand.u32 %v2410, 4294901760
    %v3033 = vsub.f32 %v2410, %v3032
    %v3034 = vand.u32 %v3033, 4294901760
    %3035 = vmatmul.f32.gmra.mxu0 %v3034
    %v3036 = vpop.f32.mrf.mxu0
    %v3037 = vadd.f32 %v2916, %v3036
    %v3038 = vand.u32 %v2412, 4294901760
    %v3039 = vsub.f32 %v2412, %v3038
    %v3040 = vand.u32 %v3039, 4294901760
    %3041 = vmatmul.f32.gmra.mxu0 %v3040
    %v3042 = vpop.f32.mrf.mxu0
    %v3043 = vadd.f32 %v2921, %v3042
    %v3044 = vand.u32 %v2414, 4294901760
    %v3045 = vsub.f32 %v2414, %v3044
    %v3046 = vand.u32 %v3045, 4294901760
    %3047 = vmatmul.f32.gmra.mxu0 %v3046
    %v3048 = vpop.f32.mrf.mxu0
    %v3049 = vadd.f32 %v2926, %v3048
    %v3050 = vand.u32 %v2416, 4294901760
    %v3051 = vsub.f32 %v2416, %v3050
    %v3052 = vand.u32 %v3051, 4294901760
    %3053 = vmatmul.f32.gmra.mxu0 %v3052
    %v3054 = vpop.f32.mrf.mxu0
    %v3055 = vadd.f32 %v2931, %v3054
    %v3056 = vand.u32 %v2418, 4294901760
    %v3057 = vsub.f32 %v2418, %v3056
    %v3058 = vand.u32 %v3057, 4294901760
    %3059 = vmatmul.f32.gmra.mxu0 %v3058
    %v3060 = vpop.f32.mrf.mxu0
    %v3061 = vadd.f32 %v2936, %v3060
    %v3062 = vand.u32 %v2420, 4294901760
    %v3063 = vsub.f32 %v2420, %v3062
    %v3064 = vand.u32 %v3063, 4294901760
    %3065 = vmatmul.f32.gmra.mxu0 %v3064
    %v3066 = vpop.f32.mrf.mxu0
    %v3067 = vadd.f32 %v2941, %v3066
    %v3068 = vand.u32 %v2422, 4294901760
    %v3069 = vsub.f32 %v2422, %v3068
    %v3070 = vand.u32 %v3069, 4294901760
    %3071 = vmatmul.f32.gmra.mxu0 %v3070
    %v3072 = vpop.f32.mrf.mxu0
    %v3073 = vadd.f32 %v2946, %v3072
    %v3074 = vand.u32 %v2424, 4294901760
    %v3075 = vsub.f32 %v2424, %v3074
    %v3076 = vand.u32 %v3075, 4294901760
    %3077 = vmatmul.f32.gmra.mxu0 %v3076
    %v3078 = vpop.f32.mrf.mxu0
    %v3079 = vadd.f32 %v2951, %v3078
    %v3080 = vand.u32 %v2426, 4294901760
    %v3081 = vsub.f32 %v2426, %v3080
    %v3082 = vand.u32 %v3081, 4294901760
    %3083 = vmatmul.f32.gmra.mxu0 %v3082
    %v3084 = vpop.f32.mrf.mxu0
    %v3085 = vadd.f32 %v2956, %v3084
    %3086 = vdwg.mxu0
    %v3087 = vand.u32 %v2490, 4294901760
    %v3088 = vsub.f32 %v2490, %v3087
    %v3089 = vand.u32 %v3088, 4294901760
    %3090 = vmatpush.msra.mxu0 %v3089
    %v3091 = vand.u32 %v2488, 4294901760
    %v3092 = vsub.f32 %v2488, %v3091
    %v3093 = vand.u32 %v3092, 4294901760
    %3094 = vmatpush.msra.mxu0 %v3093
    %v3095 = vand.u32 %v2486, 4294901760
    %v3096 = vsub.f32 %v2486, %v3095
    %v3097 = vand.u32 %v3096, 4294901760
    %3098 = vmatpush.msra.mxu0 %v3097
    %v3099 = vand.u32 %v2484, 4294901760
    %v3100 = vsub.f32 %v2484, %v3099
    %v3101 = vand.u32 %v3100, 4294901760
    %3102 = vmatpush.msra.mxu0 %v3101
    %v3103 = vand.u32 %v2482, 4294901760
    %v3104 = vsub.f32 %v2482, %v3103
    %v3105 = vand.u32 %v3104, 4294901760
    %3106 = vmatpush.msra.mxu0 %v3105
    %v3107 = vand.u32 %v2480, 4294901760
    %v3108 = vsub.f32 %v2480, %v3107
    %v3109 = vand.u32 %v3108, 4294901760
    %3110 = vmatpush.msra.mxu0 %v3109
    %v3111 = vand.u32 %v2478, 4294901760
    %v3112 = vsub.f32 %v2478, %v3111
    %v3113 = vand.u32 %v3112, 4294901760
    %3114 = vmatpush.msra.mxu0 %v3113
    %v3115 = vand.u32 %v2476, 4294901760
    %v3116 = vsub.f32 %v2476, %v3115
    %v3117 = vand.u32 %v3116, 4294901760
    %3118 = vmatpush.msra.mxu0 %v3117
    %v3119 = vand.u32 %v2474, 4294901760
    %v3120 = vsub.f32 %v2474, %v3119
    %v3121 = vand.u32 %v3120, 4294901760
    %3122 = vmatpush.msra.mxu0 %v3121
    %v3123 = vand.u32 %v2472, 4294901760
    %v3124 = vsub.f32 %v2472, %v3123
    %v3125 = vand.u32 %v3124, 4294901760
    %3126 = vmatpush.msra.mxu0 %v3125
    %v3127 = vand.u32 %v2470, 4294901760
    %v3128 = vsub.f32 %v2470, %v3127
    %v3129 = vand.u32 %v3128, 4294901760
    %3130 = vmatpush.msra.mxu0 %v3129
    %v3131 = vand.u32 %v2468, 4294901760
    %v3132 = vsub.f32 %v2468, %v3131
    %v3133 = vand.u32 %v3132, 4294901760
    %3134 = vmatpush.msra.mxu0 %v3133
    %v3135 = vand.u32 %v2466, 4294901760
    %v3136 = vsub.f32 %v2466, %v3135
    %v3137 = vand.u32 %v3136, 4294901760
    %3138 = vmatpush.msra.mxu0 %v3137
    %v3139 = vand.u32 %v2464, 4294901760
    %v3140 = vsub.f32 %v2464, %v3139
    %v3141 = vand.u32 %v3140, 4294901760
    %3142 = vmatpush.msra.mxu0 %v3141
    %v3143 = vand.u32 %v2462, 4294901760
    %v3144 = vsub.f32 %v2462, %v3143
    %v3145 = vand.u32 %v3144, 4294901760
    %3146 = vmatpush.msra.mxu0 %v3145
    %v3147 = vand.u32 %v2460, 4294901760
    %v3148 = vsub.f32 %v2460, %v3147
    %v3149 = vand.u32 %v3148, 4294901760
    %3150 = vmatpush.msra.mxu0 %v3149
    %v3151 = vand.u32 %v2396, 4294901760
    %3152 = vmatmul.f32.gmra.mxu0 %v3151
    %v3153 = vpop.f32.mrf.mxu0
    %v3154 = vadd.f32 %v2995, %v3153
    %v3155 = vand.u32 %v2398, 4294901760
    %3156 = vmatmul.f32.gmra.mxu0 %v3155
    %v3157 = vpop.f32.mrf.mxu0
    %v3158 = vadd.f32 %v3001, %v3157
    %v3159 = vand.u32 %v2400, 4294901760
    %3160 = vmatmul.f32.gmra.mxu0 %v3159
    %v3161 = vpop.f32.mrf.mxu0
    %v3162 = vadd.f32 %v3007, %v3161
    %v3163 = vand.u32 %v2402, 4294901760
    %3164 = vmatmul.f32.gmra.mxu0 %v3163
    %v3165 = vpop.f32.mrf.mxu0
    %v3166 = vadd.f32 %v3013, %v3165
    %v3167 = vand.u32 %v2404, 4294901760
    %3168 = vmatmul.f32.gmra.mxu0 %v3167
    %v3169 = vpop.f32.mrf.mxu0
    %v3170 = vadd.f32 %v3019, %v3169
    %v3171 = vand.u32 %v2406, 4294901760
    %3172 = vmatmul.f32.gmra.mxu0 %v3171
    %v3173 = vpop.f32.mrf.mxu0
    %v3174 = vadd.f32 %v3025, %v3173
    %v3175 = vand.u32 %v2408, 4294901760
    %3176 = vmatmul.f32.gmra.mxu0 %v3175
    %v3177 = vpop.f32.mrf.mxu0
    %v3178 = vadd.f32 %v3031, %v3177
    %v3179 = vand.u32 %v2410, 4294901760
    %3180 = vmatmul.f32.gmra.mxu0 %v3179
    %v3181 = vpop.f32.mrf.mxu0
    %v3182 = vadd.f32 %v3037, %v3181
    %v3183 = vand.u32 %v2412, 4294901760
    %3184 = vmatmul.f32.gmra.mxu0 %v3183
    %v3185 = vpop.f32.mrf.mxu0
    %v3186 = vadd.f32 %v3043, %v3185
    %v3187 = vand.u32 %v2414, 4294901760
    %3188 = vmatmul.f32.gmra.mxu0 %v3187
    %v3189 = vpop.f32.mrf.mxu0
    %v3190 = vadd.f32 %v3049, %v3189
    %v3191 = vand.u32 %v2416, 4294901760
    %3192 = vmatmul.f32.gmra.mxu0 %v3191
    %v3193 = vpop.f32.mrf.mxu0
    %v3194 = vadd.f32 %v3055, %v3193
    %v3195 = vand.u32 %v2418, 4294901760
    %3196 = vmatmul.f32.gmra.mxu0 %v3195
    %v3197 = vpop.f32.mrf.mxu0
    %v3198 = vadd.f32 %v3061, %v3197
    %v3199 = vand.u32 %v2420, 4294901760
    %3200 = vmatmul.f32.gmra.mxu0 %v3199
    %v3201 = vpop.f32.mrf.mxu0
    %v3202 = vadd.f32 %v3067, %v3201
    %v3203 = vand.u32 %v2422, 4294901760
    %3204 = vmatmul.f32.gmra.mxu0 %v3203
    %v3205 = vpop.f32.mrf.mxu0
    %v3206 = vadd.f32 %v3073, %v3205
    %v3207 = vand.u32 %v2424, 4294901760
    %3208 = vmatmul.f32.gmra.mxu0 %v3207
    %v3209 = vpop.f32.mrf.mxu0
    %v3210 = vadd.f32 %v3079, %v3209
    %v3211 = vand.u32 %v2426, 4294901760
    %3212 = vmatmul.f32.gmra.mxu0 %v3211
    %v3213 = vpop.f32.mrf.mxu0
    %v3214 = vadd.f32 %v3085, %v3213
    %3215 = vdwg.mxu0
    %v3216 = vand.u32 %v2490, 4294901760
    %3217 = vmatpush.msra.mxu0 %v3216
    %v3218 = vand.u32 %v2488, 4294901760
    %3219 = vmatpush.msra.mxu0 %v3218
    %v3220 = vand.u32 %v2486, 4294901760
    %3221 = vmatpush.msra.mxu0 %v3220
    %v3222 = vand.u32 %v2484, 4294901760
    %3223 = vmatpush.msra.mxu0 %v3222
    %v3224 = vand.u32 %v2482, 4294901760
    %3225 = vmatpush.msra.mxu0 %v3224
    %v3226 = vand.u32 %v2480, 4294901760
    %3227 = vmatpush.msra.mxu0 %v3226
    %v3228 = vand.u32 %v2478, 4294901760
    %3229 = vmatpush.msra.mxu0 %v3228
    %v3230 = vand.u32 %v2476, 4294901760
    %3231 = vmatpush.msra.mxu0 %v3230
    %v3232 = vand.u32 %v2474, 4294901760
    %3233 = vmatpush.msra.mxu0 %v3232
    %v3234 = vand.u32 %v2472, 4294901760
    %3235 = vmatpush.msra.mxu0 %v3234
    %v3236 = vand.u32 %v2470, 4294901760
    %3237 = vmatpush.msra.mxu0 %v3236
    %v3238 = vand.u32 %v2468, 4294901760
    %3239 = vmatpush.msra.mxu0 %v3238
    %v3240 = vand.u32 %v2466, 4294901760
    %3241 = vmatpush.msra.mxu0 %v3240
    %v3242 = vand.u32 %v2464, 4294901760
    %3243 = vmatpush.msra.mxu0 %v3242
    %v3244 = vand.u32 %v2462, 4294901760
    %3245 = vmatpush.msra.mxu0 %v3244
    %v3246 = vand.u32 %v2460, 4294901760
    %3247 = vmatpush.msra.mxu0 %v3246
    %v3248 = vand.u32 %v2396, 4294901760
    %3249 = vmatmul.f32.gmra.mxu0 %v3248
    %v3250 = vpop.f32.mrf.mxu0
    %v3251 = vadd.f32 %v3154, %v3250
    %v3252 = vand.u32 %v2398, 4294901760
    %3253 = vmatmul.f32.gmra.mxu0 %v3252
    %v3254 = vpop.f32.mrf.mxu0
    %v3255 = vadd.f32 %v3158, %v3254
    %v3256 = vand.u32 %v2400, 4294901760
    %3257 = vmatmul.f32.gmra.mxu0 %v3256
    %v3258 = vpop.f32.mrf.mxu0
    %v3259 = vadd.f32 %v3162, %v3258
    %v3260 = vand.u32 %v2402, 4294901760
    %3261 = vmatmul.f32.gmra.mxu0 %v3260
    %v3262 = vpop.f32.mrf.mxu0
    %v3263 = vadd.f32 %v3166, %v3262
    %v3264 = vand.u32 %v2404, 4294901760
    %3265 = vmatmul.f32.gmra.mxu0 %v3264
    %v3266 = vpop.f32.mrf.mxu0
    %v3267 = vadd.f32 %v3170, %v3266
    %v3268 = vand.u32 %v2406, 4294901760
    %3269 = vmatmul.f32.gmra.mxu0 %v3268
    %v3270 = vpop.f32.mrf.mxu0
    %v3271 = vadd.f32 %v3174, %v3270
    %v3272 = vand.u32 %v2408, 4294901760
    %3273 = vmatmul.f32.gmra.mxu0 %v3272
    %v3274 = vpop.f32.mrf.mxu0
    %v3275 = vadd.f32 %v3178, %v3274
    %v3276 = vand.u32 %v2410, 4294901760
    %3277 = vmatmul.f32.gmra.mxu0 %v3276
    %v3278 = vpop.f32.mrf.mxu0
    %v3279 = vadd.f32 %v3182, %v3278
    %v3280 = vand.u32 %v2412, 4294901760
    %3281 = vmatmul.f32.gmra.mxu0 %v3280
    %v3282 = vpop.f32.mrf.mxu0
    %v3283 = vadd.f32 %v3186, %v3282
    %v3284 = vand.u32 %v2414, 4294901760
    %3285 = vmatmul.f32.gmra.mxu0 %v3284
    %v3286 = vpop.f32.mrf.mxu0
    %v3287 = vadd.f32 %v3190, %v3286
    %v3288 = vand.u32 %v2416, 4294901760
    %3289 = vmatmul.f32.gmra.mxu0 %v3288
    %v3290 = vpop.f32.mrf.mxu0
    %v3291 = vadd.f32 %v3194, %v3290
    %v3292 = vand.u32 %v2418, 4294901760
    %3293 = vmatmul.f32.gmra.mxu0 %v3292
    %v3294 = vpop.f32.mrf.mxu0
    %v3295 = vadd.f32 %v3198, %v3294
    %v3296 = vand.u32 %v2420, 4294901760
    %3297 = vmatmul.f32.gmra.mxu0 %v3296
    %v3298 = vpop.f32.mrf.mxu0
    %v3299 = vadd.f32 %v3202, %v3298
    %v3300 = vand.u32 %v2422, 4294901760
    %3301 = vmatmul.f32.gmra.mxu0 %v3300
    %v3302 = vpop.f32.mrf.mxu0
    %v3303 = vadd.f32 %v3206, %v3302
    %v3304 = vand.u32 %v2424, 4294901760
    %3305 = vmatmul.f32.gmra.mxu0 %v3304
    %v3306 = vpop.f32.mrf.mxu0
    %v3307 = vadd.f32 %v3210, %v3306
    %v3308 = vand.u32 %v2426, 4294901760
    %3309 = vmatmul.f32.gmra.mxu0 %v3308
    %v3310 = vpop.f32.mrf.mxu0
    %v3311 = vadd.f32 %v3214, %v3310
    %3312 = vdwg.mxu0
    %v3313 = vrcp.pop %v2428
    %v3314 = vmul.f32 %v2428, %v3313
    %v3315 = vsub.f32 1.0, %v3314
    %v3316 = vmul.f32 %v3313, %v3315
    %v3317 = vadd.f32 %v3313, %v3316
    %vm3318 = vweird.f32 %v2428
    %vm3319 = vweird.f32 %v3313
    %vm3320 = vmor %vm3318, %vm3319
    %v3321 = vsel %vm3320, %v3313, %v3317
    %v3322 = vand.u32 2147483647, %v2428
    %vm3323 = vcmp.eq.f32.partialorder %v3322, 8.507059e+37
    %v3324 = vand.u32 %v2428, 2147483648
    %v3325 = vor.u32 1.1754944e-38, %v3324
    %v3326 = vsel %vm3323, %v3325, %v3321
    %v3327 = vmul.f32 %v3251, %v3326
    %v3328 = vrcp.pop %v2430
    %v3329 = vmul.f32 %v2430, %v3328
    %v3330 = vsub.f32 1.0, %v3329
    %v3331 = vmul.f32 %v3328, %v3330
    %v3332 = vadd.f32 %v3328, %v3331
    %vm3333 = vweird.f32 %v2430
    %vm3334 = vweird.f32 %v3328
    %vm3335 = vmor %vm3333, %vm3334
    %v3336 = vsel %vm3335, %v3328, %v3332
    %v3337 = vand.u32 2147483647, %v2430
    %vm3338 = vcmp.eq.f32.partialorder %v3337, 8.507059e+37
    %v3339 = vand.u32 %v2430, 2147483648
    %v3340 = vor.u32 1.1754944e-38, %v3339
    %v3341 = vsel %vm3338, %v3340, %v3336
    %v3342 = vmul.f32 %v3255, %v3341
    %v3343 = vrcp.pop %v2432
    %v3344 = vmul.f32 %v2432, %v3343
    %v3345 = vsub.f32 1.0, %v3344
    %v3346 = vmul.f32 %v3343, %v3345
    %v3347 = vadd.f32 %v3343, %v3346
    %vm3348 = vweird.f32 %v2432
    %vm3349 = vweird.f32 %v3343
    %vm3350 = vmor %vm3348, %vm3349
    %v3351 = vsel %vm3350, %v3343, %v3347
    %v3352 = vand.u32 2147483647, %v2432
    %vm3353 = vcmp.eq.f32.partialorder %v3352, 8.507059e+37
    %v3354 = vand.u32 %v2432, 2147483648
    %v3355 = vor.u32 1.1754944e-38, %v3354
    %v3356 = vsel %vm3353, %v3355, %v3351
    %v3357 = vmul.f32 %v3259, %v3356
    %v3358 = vrcp.pop %v2434
    %v3359 = vmul.f32 %v2434, %v3358
    %v3360 = vsub.f32 1.0, %v3359
    %v3361 = vmul.f32 %v3358, %v3360
    %v3362 = vadd.f32 %v3358, %v3361
    %vm3363 = vweird.f32 %v2434
    %vm3364 = vweird.f32 %v3358
    %vm3365 = vmor %vm3363, %vm3364
    %v3366 = vsel %vm3365, %v3358, %v3362
    %v3367 = vand.u32 2147483647, %v2434
    %vm3368 = vcmp.eq.f32.partialorder %v3367, 8.507059e+37
    %v3369 = vand.u32 %v2434, 2147483648
    %v3370 = vor.u32 1.1754944e-38, %v3369
    %v3371 = vsel %vm3368, %v3370, %v3366
    %v3372 = vmul.f32 %v3263, %v3371
    %v3373 = vrcp.pop %v2436
    %v3374 = vmul.f32 %v2436, %v3373
    %v3375 = vsub.f32 1.0, %v3374
    %v3376 = vmul.f32 %v3373, %v3375
    %v3377 = vadd.f32 %v3373, %v3376
    %vm3378 = vweird.f32 %v2436
    %vm3379 = vweird.f32 %v3373
    %vm3380 = vmor %vm3378, %vm3379
    %v3381 = vsel %vm3380, %v3373, %v3377
    %v3382 = vand.u32 2147483647, %v2436
    %vm3383 = vcmp.eq.f32.partialorder %v3382, 8.507059e+37
    %v3384 = vand.u32 %v2436, 2147483648
    %v3385 = vor.u32 1.1754944e-38, %v3384
    %v3386 = vsel %vm3383, %v3385, %v3381
    %v3387 = vmul.f32 %v3267, %v3386
    %v3388 = vrcp.pop %v2438
    %v3389 = vmul.f32 %v2438, %v3388
    %v3390 = vsub.f32 1.0, %v3389
    %v3391 = vmul.f32 %v3388, %v3390
    %v3392 = vadd.f32 %v3388, %v3391
    %vm3393 = vweird.f32 %v2438
    %vm3394 = vweird.f32 %v3388
    %vm3395 = vmor %vm3393, %vm3394
    %v3396 = vsel %vm3395, %v3388, %v3392
    %v3397 = vand.u32 2147483647, %v2438
    %vm3398 = vcmp.eq.f32.partialorder %v3397, 8.507059e+37
    %v3399 = vand.u32 %v2438, 2147483648
    %v3400 = vor.u32 1.1754944e-38, %v3399
    %v3401 = vsel %vm3398, %v3400, %v3396
    %v3402 = vmul.f32 %v3271, %v3401
    %v3403 = vrcp.pop %v2440
    %v3404 = vmul.f32 %v2440, %v3403
    %v3405 = vsub.f32 1.0, %v3404
    %v3406 = vmul.f32 %v3403, %v3405
    %v3407 = vadd.f32 %v3403, %v3406
    %vm3408 = vweird.f32 %v2440
    %vm3409 = vweird.f32 %v3403
    %vm3410 = vmor %vm3408, %vm3409
    %v3411 = vsel %vm3410, %v3403, %v3407
    %v3412 = vand.u32 2147483647, %v2440
    %vm3413 = vcmp.eq.f32.partialorder %v3412, 8.507059e+37
    %v3414 = vand.u32 %v2440, 2147483648
    %v3415 = vor.u32 1.1754944e-38, %v3414
    %v3416 = vsel %vm3413, %v3415, %v3411
    %v3417 = vmul.f32 %v3275, %v3416
    %v3418 = vrcp.pop %v2442
    %v3419 = vmul.f32 %v2442, %v3418
    %v3420 = vsub.f32 1.0, %v3419
    %v3421 = vmul.f32 %v3418, %v3420
    %v3422 = vadd.f32 %v3418, %v3421
    %vm3423 = vweird.f32 %v2442
    %vm3424 = vweird.f32 %v3418
    %vm3425 = vmor %vm3423, %vm3424
    %v3426 = vsel %vm3425, %v3418, %v3422
    %v3427 = vand.u32 2147483647, %v2442
    %vm3428 = vcmp.eq.f32.partialorder %v3427, 8.507059e+37
    %v3429 = vand.u32 %v2442, 2147483648
    %v3430 = vor.u32 1.1754944e-38, %v3429
    %v3431 = vsel %vm3428, %v3430, %v3426
    %v3432 = vmul.f32 %v3279, %v3431
    %v3433 = vrcp.pop %v2444
    %v3434 = vmul.f32 %v2444, %v3433
    %v3435 = vsub.f32 1.0, %v3434
    %v3436 = vmul.f32 %v3433, %v3435
    %v3437 = vadd.f32 %v3433, %v3436
    %vm3438 = vweird.f32 %v2444
    %vm3439 = vweird.f32 %v3433
    %vm3440 = vmor %vm3438, %vm3439
    %v3441 = vsel %vm3440, %v3433, %v3437
    %v3442 = vand.u32 2147483647, %v2444
    %vm3443 = vcmp.eq.f32.partialorder %v3442, 8.507059e+37
    %v3444 = vand.u32 %v2444, 2147483648
    %v3445 = vor.u32 1.1754944e-38, %v3444
    %v3446 = vsel %vm3443, %v3445, %v3441
    %v3447 = vmul.f32 %v3283, %v3446
    %v3448 = vrcp.pop %v2446
    %v3449 = vmul.f32 %v2446, %v3448
    %v3450 = vsub.f32 1.0, %v3449
    %v3451 = vmul.f32 %v3448, %v3450
    %v3452 = vadd.f32 %v3448, %v3451
    %vm3453 = vweird.f32 %v2446
    %vm3454 = vweird.f32 %v3448
    %vm3455 = vmor %vm3453, %vm3454
    %v3456 = vsel %vm3455, %v3448, %v3452
    %v3457 = vand.u32 2147483647, %v2446
    %vm3458 = vcmp.eq.f32.partialorder %v3457, 8.507059e+37
    %v3459 = vand.u32 %v2446, 2147483648
    %v3460 = vor.u32 1.1754944e-38, %v3459
    %v3461 = vsel %vm3458, %v3460, %v3456
    %v3462 = vmul.f32 %v3287, %v3461
    %v3463 = vrcp.pop %v2448
    %v3464 = vmul.f32 %v2448, %v3463
    %v3465 = vsub.f32 1.0, %v3464
    %v3466 = vmul.f32 %v3463, %v3465
    %v3467 = vadd.f32 %v3463, %v3466
    %vm3468 = vweird.f32 %v2448
    %vm3469 = vweird.f32 %v3463
    %vm3470 = vmor %vm3468, %vm3469
    %v3471 = vsel %vm3470, %v3463, %v3467
    %v3472 = vand.u32 2147483647, %v2448
    %vm3473 = vcmp.eq.f32.partialorder %v3472, 8.507059e+37
    %v3474 = vand.u32 %v2448, 2147483648
    %v3475 = vor.u32 1.1754944e-38, %v3474
    %v3476 = vsel %vm3473, %v3475, %v3471
    %v3477 = vmul.f32 %v3291, %v3476
    %v3478 = vrcp.pop %v2450
    %v3479 = vmul.f32 %v2450, %v3478
    %v3480 = vsub.f32 1.0, %v3479
    %v3481 = vmul.f32 %v3478, %v3480
    %v3482 = vadd.f32 %v3478, %v3481
    %vm3483 = vweird.f32 %v2450
    %vm3484 = vweird.f32 %v3478
    %vm3485 = vmor %vm3483, %vm3484
    %v3486 = vsel %vm3485, %v3478, %v3482
    %v3487 = vand.u32 2147483647, %v2450
    %vm3488 = vcmp.eq.f32.partialorder %v3487, 8.507059e+37
    %v3489 = vand.u32 %v2450, 2147483648
    %v3490 = vor.u32 1.1754944e-38, %v3489
    %v3491 = vsel %vm3488, %v3490, %v3486
    %v3492 = vmul.f32 %v3295, %v3491
    %v3493 = vrcp.pop %v2452
    %v3494 = vmul.f32 %v2452, %v3493
    %v3495 = vsub.f32 1.0, %v3494
    %v3496 = vmul.f32 %v3493, %v3495
    %v3497 = vadd.f32 %v3493, %v3496
    %vm3498 = vweird.f32 %v2452
    %vm3499 = vweird.f32 %v3493
    %vm3500 = vmor %vm3498, %vm3499
    %v3501 = vsel %vm3500, %v3493, %v3497
    %v3502 = vand.u32 2147483647, %v2452
    %vm3503 = vcmp.eq.f32.partialorder %v3502, 8.507059e+37
    %v3504 = vand.u32 %v2452, 2147483648
    %v3505 = vor.u32 1.1754944e-38, %v3504
    %v3506 = vsel %vm3503, %v3505, %v3501
    %v3507 = vmul.f32 %v3299, %v3506
    %v3508 = vrcp.pop %v2454
    %v3509 = vmul.f32 %v2454, %v3508
    %v3510 = vsub.f32 1.0, %v3509
    %v3511 = vmul.f32 %v3508, %v3510
    %v3512 = vadd.f32 %v3508, %v3511
    %vm3513 = vweird.f32 %v2454
    %vm3514 = vweird.f32 %v3508
    %vm3515 = vmor %vm3513, %vm3514
    %v3516 = vsel %vm3515, %v3508, %v3512
    %v3517 = vand.u32 2147483647, %v2454
    %vm3518 = vcmp.eq.f32.partialorder %v3517, 8.507059e+37
    %v3519 = vand.u32 %v2454, 2147483648
    %v3520 = vor.u32 1.1754944e-38, %v3519
    %v3521 = vsel %vm3518, %v3520, %v3516
    %v3522 = vmul.f32 %v3303, %v3521
    %v3523 = vrcp.pop %v2456
    %v3524 = vmul.f32 %v2456, %v3523
    %v3525 = vsub.f32 1.0, %v3524
    %v3526 = vmul.f32 %v3523, %v3525
    %v3527 = vadd.f32 %v3523, %v3526
    %vm3528 = vweird.f32 %v2456
    %vm3529 = vweird.f32 %v3523
    %vm3530 = vmor %vm3528, %vm3529
    %v3531 = vsel %vm3530, %v3523, %v3527
    %v3532 = vand.u32 2147483647, %v2456
    %vm3533 = vcmp.eq.f32.partialorder %v3532, 8.507059e+37
    %v3534 = vand.u32 %v2456, 2147483648
    %v3535 = vor.u32 1.1754944e-38, %v3534
    %v3536 = vsel %vm3533, %v3535, %v3531
    %v3537 = vmul.f32 %v3307, %v3536
    %v3538 = vrcp.pop %v2458
    %v3539 = vmul.f32 %v2458, %v3538
    %v3540 = vsub.f32 1.0, %v3539
    %v3541 = vmul.f32 %v3538, %v3540
    %v3542 = vadd.f32 %v3538, %v3541
    %vm3543 = vweird.f32 %v2458
    %vm3544 = vweird.f32 %v3538
    %vm3545 = vmor %vm3543, %vm3544
    %v3546 = vsel %vm3545, %v3538, %v3542
    %v3547 = vand.u32 2147483647, %v2458
    %vm3548 = vcmp.eq.f32.partialorder %v3547, 8.507059e+37
    %v3549 = vand.u32 %v2458, 2147483648
    %v3550 = vor.u32 1.1754944e-38, %v3549
    %v3551 = vsel %vm3548, %v3550, %v3546
    %v3552 = vmul.f32 %v3311, %v3551
    %3553 = vst.msk [vmem:[%s2] sm:$0xff] %vm1425, %v3327
    %3554 = vst.msk [vmem:[%s2 + $0x8] sm:$0xff] %vm1425, %v3342
    %3555 = vst.msk [vmem:[%s2 + $0x10] sm:$0xff] %vm1425, %v3357
    %3556 = vst.msk [vmem:[%s2 + $0x18] sm:$0xff] %vm1425, %v3372
    %3557 = vst.msk [vmem:[%s2 + $0x20] sm:$0xff] %vm1425, %v3387
    %3558 = vst.msk [vmem:[%s2 + $0x28] sm:$0xff] %vm1425, %v3402
    %3559 = vst.msk [vmem:[%s2 + $0x30] sm:$0xff] %vm1425, %v3417
    %3560 = vst.msk [vmem:[%s2 + $0x38] sm:$0xff] %vm1425, %v3432
    %3561 = vst.msk [vmem:[%s2 + $0x40] sm:$0xff] %vm1425, %v3447
    %3562 = vst.msk [vmem:[%s2 + $0x48] sm:$0xff] %vm1425, %v3462
    %3563 = vst.msk [vmem:[%s2 + $0x50] sm:$0xff] %vm1425, %v3477
    %3564 = vst.msk [vmem:[%s2 + $0x58] sm:$0xff] %vm1425, %v3492
    %3565 = vst.msk [vmem:[%s2 + $0x60] sm:$0xff] %vm1425, %v3507
    %3566 = vst.msk [vmem:[%s2 + $0x68] sm:$0xff] %vm1425, %v3522
    %3567 = vst.msk [vmem:[%s2 + $0x70] sm:$0xff] %vm1425, %v3537
    %3568 = vst.msk [vmem:[%s2 + $0x78] sm:$0xff] %vm1425, %v3552
    %3585 = vrot.lane.b32.xlu0 %v1315, 96
    %v3586 = vpop.permute.xlu0 %3585
    %3587 = vrot.lane.b32.xlu0 %v1319, 96
    %v3588 = vpop.permute.xlu0 %3587
    %3589 = vrot.lane.b32.xlu0 %v1323, 96
    %v3590 = vpop.permute.xlu0 %3589
    %3591 = vrot.lane.b32.xlu0 %v1327, 96
    %v3592 = vpop.permute.xlu0 %3591
    %3593 = vrot.lane.b32.xlu0 %v1331, 96
    %v3594 = vpop.permute.xlu0 %3593
    %3595 = vrot.lane.b32.xlu0 %v1335, 96
    %v3596 = vpop.permute.xlu0 %3595
    %3597 = vrot.lane.b32.xlu0 %v1339, 96
    %v3598 = vpop.permute.xlu0 %3597
    %3599 = vrot.lane.b32.xlu0 %v1343, 96
    %v3600 = vpop.permute.xlu0 %3599
    %3601 = vrot.lane.b32.xlu0 %v1347, 96
    %v3602 = vpop.permute.xlu0 %3601
    %3603 = vrot.lane.b32.xlu0 %v1351, 96
    %v3604 = vpop.permute.xlu0 %3603
    %3605 = vrot.lane.b32.xlu0 %v1355, 96
    %v3606 = vpop.permute.xlu0 %3605
    %3607 = vrot.lane.b32.xlu0 %v1359, 96
    %v3608 = vpop.permute.xlu0 %3607
    %3609 = vrot.lane.b32.xlu0 %v1363, 96
    %v3610 = vpop.permute.xlu0 %3609
    %3611 = vrot.lane.b32.xlu0 %v1367, 96
    %v3612 = vpop.permute.xlu0 %3611
    %3613 = vrot.lane.b32.xlu0 %v1371, 96
    %v3614 = vpop.permute.xlu0 %3613
    %3615 = vrot.lane.b32.xlu0 %v1375, 96
    %v3616 = vpop.permute.xlu0 %3615
    %v3617 = vsel %vm1425, %v3586, 0
    %v3619 = vsel %vm1425, %v3588, 0
    %v3621 = vsel %vm1425, %v3590, 0
    %v3623 = vsel %vm1425, %v3592, 0
    %v3625 = vsel %vm1425, %v3594, 0
    %v3627 = vsel %vm1425, %v3596, 0
    %v3629 = vsel %vm1425, %v3598, 0
    %v3631 = vsel %vm1425, %v3600, 0
    %v3633 = vsel %vm1425, %v3602, 0
    %v3635 = vsel %vm1425, %v3604, 0
    %v3637 = vsel %vm1425, %v3606, 0
    %v3639 = vsel %vm1425, %v3608, 0
    %v3641 = vsel %vm1425, %v3610, 0
    %v3643 = vsel %vm1425, %v3612, 0
    %v3645 = vsel %vm1425, %v3614, 0
    %v3647 = vsel %vm1425, %v3616, 0
    %v3649 = vsel %vm1425, %v1315, 0
    %v3651 = vsel %vm1425, %v1319, 0
    %v3653 = vsel %vm1425, %v1323, 0
    %v3655 = vsel %vm1425, %v1327, 0
    %v3657 = vsel %vm1425, %v1331, 0
    %v3659 = vsel %vm1425, %v1335, 0
    %v3661 = vsel %vm1425, %v1339, 0
    %v3663 = vsel %vm1425, %v1343, 0
    %v3665 = vsel %vm1425, %v1347, 0
    %v3667 = vsel %vm1425, %v1351, 0
    %v3669 = vsel %vm1425, %v1355, 0
    %v3671 = vsel %vm1425, %v1359, 0
    %v3673 = vsel %vm1425, %v1363, 0
    %v3675 = vsel %vm1425, %v1367, 0
    %v3677 = vsel %vm1425, %v1371, 0
    %v3679 = vsel %vm1425, %v1375, 0
    %v3681 = vand.u32 %v3679, 4294901760
    %3682 = vmatpush.xpose.msra.mxu0 %v3681
    %v3683 = vand.u32 %v3677, 4294901760
    %3684 = vmatpush.xpose.msra.mxu0 %v3683
    %v3685 = vand.u32 %v3675, 4294901760
    %3686 = vmatpush.xpose.msra.mxu0 %v3685
    %v3687 = vand.u32 %v3673, 4294901760
    %3688 = vmatpush.xpose.msra.mxu0 %v3687
    %v3689 = vand.u32 %v3671, 4294901760
    %3690 = vmatpush.xpose.msra.mxu0 %v3689
    %v3691 = vand.u32 %v3669, 4294901760
    %3692 = vmatpush.xpose.msra.mxu0 %v3691
    %v3693 = vand.u32 %v3667, 4294901760
    %3694 = vmatpush.xpose.msra.mxu0 %v3693
    %v3695 = vand.u32 %v3665, 4294901760
    %3696 = vmatpush.xpose.msra.mxu0 %v3695
    %v3697 = vand.u32 %v3663, 4294901760
    %3698 = vmatpush.xpose.msra.mxu0 %v3697
    %v3699 = vand.u32 %v3661, 4294901760
    %3700 = vmatpush.xpose.msra.mxu0 %v3699
    %v3701 = vand.u32 %v3659, 4294901760
    %3702 = vmatpush.xpose.msra.mxu0 %v3701
    %v3703 = vand.u32 %v3657, 4294901760
    %3704 = vmatpush.xpose.msra.mxu0 %v3703
    %v3705 = vand.u32 %v3655, 4294901760
    %3706 = vmatpush.xpose.msra.mxu0 %v3705
    %v3707 = vand.u32 %v3653, 4294901760
    %3708 = vmatpush.xpose.msra.mxu0 %v3707
    %v3709 = vand.u32 %v3651, 4294901760
    %3710 = vmatpush.xpose.msra.mxu0 %v3709
    %v3711 = vand.u32 %v3649, 4294901760
    %3712 = vmatpush.xpose.msra.mxu0 %v3711
    %v3713 = vand.u32 %v3617, 4294901760
    %v3714 = vsub.f32 %v3617, %v3713
    %v3715 = vand.u32 %v3714, 4294901760
    %v3716 = vsub.f32 %v3714, %v3715
    %v3717 = vand.u32 %v3716, 4294901760
    %3718 = vmatmul.f32.gmra.mxu0 %v3717
    %v3719 = vpop.f32.mrf.mxu0
    %v3720 = vadd.f32 0.0, %v3719
    %v3721 = vand.u32 %v3619, 4294901760
    %v3722 = vsub.f32 %v3619, %v3721
    %v3723 = vand.u32 %v3722, 4294901760
    %v3724 = vsub.f32 %v3722, %v3723
    %v3725 = vand.u32 %v3724, 4294901760
    %3726 = vmatmul.f32.gmra.mxu0 %v3725
    %v3727 = vpop.f32.mrf.mxu0
    %v3728 = vadd.f32 0.0, %v3727
    %v3729 = vand.u32 %v3621, 4294901760
    %v3730 = vsub.f32 %v3621, %v3729
    %v3731 = vand.u32 %v3730, 4294901760
    %v3732 = vsub.f32 %v3730, %v3731
    %v3733 = vand.u32 %v3732, 4294901760
    %3734 = vmatmul.f32.gmra.mxu0 %v3733
    %v3735 = vpop.f32.mrf.mxu0
    %v3736 = vadd.f32 0.0, %v3735
    %v3737 = vand.u32 %v3623, 4294901760
    %v3738 = vsub.f32 %v3623, %v3737
    %v3739 = vand.u32 %v3738, 4294901760
    %v3740 = vsub.f32 %v3738, %v3739
    %v3741 = vand.u32 %v3740, 4294901760
    %3742 = vmatmul.f32.gmra.mxu0 %v3741
    %v3743 = vpop.f32.mrf.mxu0
    %v3744 = vadd.f32 0.0, %v3743
    %v3745 = vand.u32 %v3625, 4294901760
    %v3746 = vsub.f32 %v3625, %v3745
    %v3747 = vand.u32 %v3746, 4294901760
    %v3748 = vsub.f32 %v3746, %v3747
    %v3749 = vand.u32 %v3748, 4294901760
    %3750 = vmatmul.f32.gmra.mxu0 %v3749
    %v3751 = vpop.f32.mrf.mxu0
    %v3752 = vadd.f32 0.0, %v3751
    %v3753 = vand.u32 %v3627, 4294901760
    %v3754 = vsub.f32 %v3627, %v3753
    %v3755 = vand.u32 %v3754, 4294901760
    %v3756 = vsub.f32 %v3754, %v3755
    %v3757 = vand.u32 %v3756, 4294901760
    %3758 = vmatmul.f32.gmra.mxu0 %v3757
    %v3759 = vpop.f32.mrf.mxu0
    %v3760 = vadd.f32 0.0, %v3759
    %v3761 = vand.u32 %v3629, 4294901760
    %v3762 = vsub.f32 %v3629, %v3761
    %v3763 = vand.u32 %v3762, 4294901760
    %v3764 = vsub.f32 %v3762, %v3763
    %v3765 = vand.u32 %v3764, 4294901760
    %3766 = vmatmul.f32.gmra.mxu0 %v3765
    %v3767 = vpop.f32.mrf.mxu0
    %v3768 = vadd.f32 0.0, %v3767
    %v3769 = vand.u32 %v3631, 4294901760
    %v3770 = vsub.f32 %v3631, %v3769
    %v3771 = vand.u32 %v3770, 4294901760
    %v3772 = vsub.f32 %v3770, %v3771
    %v3773 = vand.u32 %v3772, 4294901760
    %3774 = vmatmul.f32.gmra.mxu0 %v3773
    %v3775 = vpop.f32.mrf.mxu0
    %v3776 = vadd.f32 0.0, %v3775
    %v3777 = vand.u32 %v3633, 4294901760
    %v3778 = vsub.f32 %v3633, %v3777
    %v3779 = vand.u32 %v3778, 4294901760
    %v3780 = vsub.f32 %v3778, %v3779
    %v3781 = vand.u32 %v3780, 4294901760
    %3782 = vmatmul.f32.gmra.mxu0 %v3781
    %v3783 = vpop.f32.mrf.mxu0
    %v3784 = vadd.f32 0.0, %v3783
    %v3785 = vand.u32 %v3635, 4294901760
    %v3786 = vsub.f32 %v3635, %v3785
    %v3787 = vand.u32 %v3786, 4294901760
    %v3788 = vsub.f32 %v3786, %v3787
    %v3789 = vand.u32 %v3788, 4294901760
    %3790 = vmatmul.f32.gmra.mxu0 %v3789
    %v3791 = vpop.f32.mrf.mxu0
    %v3792 = vadd.f32 0.0, %v3791
    %v3793 = vand.u32 %v3637, 4294901760
    %v3794 = vsub.f32 %v3637, %v3793
    %v3795 = vand.u32 %v3794, 4294901760
    %v3796 = vsub.f32 %v3794, %v3795
    %v3797 = vand.u32 %v3796, 4294901760
    %3798 = vmatmul.f32.gmra.mxu0 %v3797
    %v3799 = vpop.f32.mrf.mxu0
    %v3800 = vadd.f32 0.0, %v3799
    %v3801 = vand.u32 %v3639, 4294901760
    %v3802 = vsub.f32 %v3639, %v3801
    %v3803 = vand.u32 %v3802, 4294901760
    %v3804 = vsub.f32 %v3802, %v3803
    %v3805 = vand.u32 %v3804, 4294901760
    %3806 = vmatmul.f32.gmra.mxu0 %v3805
    %v3807 = vpop.f32.mrf.mxu0
    %v3808 = vadd.f32 0.0, %v3807
    %v3809 = vand.u32 %v3641, 4294901760
    %v3810 = vsub.f32 %v3641, %v3809
    %v3811 = vand.u32 %v3810, 4294901760
    %v3812 = vsub.f32 %v3810, %v3811
    %v3813 = vand.u32 %v3812, 4294901760
    %3814 = vmatmul.f32.gmra.mxu0 %v3813
    %v3815 = vpop.f32.mrf.mxu0
    %v3816 = vadd.f32 0.0, %v3815
    %v3817 = vand.u32 %v3643, 4294901760
    %v3818 = vsub.f32 %v3643, %v3817
    %v3819 = vand.u32 %v3818, 4294901760
    %v3820 = vsub.f32 %v3818, %v3819
    %v3821 = vand.u32 %v3820, 4294901760
    %3822 = vmatmul.f32.gmra.mxu0 %v3821
    %v3823 = vpop.f32.mrf.mxu0
    %v3824 = vadd.f32 0.0, %v3823
    %v3825 = vand.u32 %v3645, 4294901760
    %v3826 = vsub.f32 %v3645, %v3825
    %v3827 = vand.u32 %v3826, 4294901760
    %v3828 = vsub.f32 %v3826, %v3827
    %v3829 = vand.u32 %v3828, 4294901760
    %3830 = vmatmul.f32.gmra.mxu0 %v3829
    %v3831 = vpop.f32.mrf.mxu0
    %v3832 = vadd.f32 0.0, %v3831
    %v3833 = vand.u32 %v3647, 4294901760
    %v3834 = vsub.f32 %v3647, %v3833
    %v3835 = vand.u32 %v3834, 4294901760
    %v3836 = vsub.f32 %v3834, %v3835
    %v3837 = vand.u32 %v3836, 4294901760
    %3838 = vmatmul.f32.gmra.mxu0 %v3837
    %v3839 = vpop.f32.mrf.mxu0
    %v3840 = vadd.f32 0.0, %v3839
    %3841 = vdwg.mxu0
    %v3842 = vand.u32 %v3679, 4294901760
    %v3843 = vsub.f32 %v3679, %v3842
    %v3844 = vand.u32 %v3843, 4294901760
    %v3845 = vsub.f32 %v3843, %v3844
    %v3846 = vand.u32 %v3845, 4294901760
    %3847 = vmatpush.xpose.msra.mxu0 %v3846
    %v3848 = vand.u32 %v3677, 4294901760
    %v3849 = vsub.f32 %v3677, %v3848
    %v3850 = vand.u32 %v3849, 4294901760
    %v3851 = vsub.f32 %v3849, %v3850
    %v3852 = vand.u32 %v3851, 4294901760
    %3853 = vmatpush.xpose.msra.mxu0 %v3852
    %v3854 = vand.u32 %v3675, 4294901760
    %v3855 = vsub.f32 %v3675, %v3854
    %v3856 = vand.u32 %v3855, 4294901760
    %v3857 = vsub.f32 %v3855, %v3856
    %v3858 = vand.u32 %v3857, 4294901760
    %3859 = vmatpush.xpose.msra.mxu0 %v3858
    %v3860 = vand.u32 %v3673, 4294901760
    %v3861 = vsub.f32 %v3673, %v3860
    %v3862 = vand.u32 %v3861, 4294901760
    %v3863 = vsub.f32 %v3861, %v3862
    %v3864 = vand.u32 %v3863, 4294901760
    %3865 = vmatpush.xpose.msra.mxu0 %v3864
    %v3866 = vand.u32 %v3671, 4294901760
    %v3867 = vsub.f32 %v3671, %v3866
    %v3868 = vand.u32 %v3867, 4294901760
    %v3869 = vsub.f32 %v3867, %v3868
    %v3870 = vand.u32 %v3869, 4294901760
    %3871 = vmatpush.xpose.msra.mxu0 %v3870
    %v3872 = vand.u32 %v3669, 4294901760
    %v3873 = vsub.f32 %v3669, %v3872
    %v3874 = vand.u32 %v3873, 4294901760
    %v3875 = vsub.f32 %v3873, %v3874
    %v3876 = vand.u32 %v3875, 4294901760
    %3877 = vmatpush.xpose.msra.mxu0 %v3876
    %v3878 = vand.u32 %v3667, 4294901760
    %v3879 = vsub.f32 %v3667, %v3878
    %v3880 = vand.u32 %v3879, 4294901760
    %v3881 = vsub.f32 %v3879, %v3880
    %v3882 = vand.u32 %v3881, 4294901760
    %3883 = vmatpush.xpose.msra.mxu0 %v3882
    %v3884 = vand.u32 %v3665, 4294901760
    %v3885 = vsub.f32 %v3665, %v3884
    %v3886 = vand.u32 %v3885, 4294901760
    %v3887 = vsub.f32 %v3885, %v3886
    %v3888 = vand.u32 %v3887, 4294901760
    %3889 = vmatpush.xpose.msra.mxu0 %v3888
    %v3890 = vand.u32 %v3663, 4294901760
    %v3891 = vsub.f32 %v3663, %v3890
    %v3892 = vand.u32 %v3891, 4294901760
    %v3893 = vsub.f32 %v3891, %v3892
    %v3894 = vand.u32 %v3893, 4294901760
    %3895 = vmatpush.xpose.msra.mxu0 %v3894
    %v3896 = vand.u32 %v3661, 4294901760
    %v3897 = vsub.f32 %v3661, %v3896
    %v3898 = vand.u32 %v3897, 4294901760
    %v3899 = vsub.f32 %v3897, %v3898
    %v3900 = vand.u32 %v3899, 4294901760
    %3901 = vmatpush.xpose.msra.mxu0 %v3900
    %v3902 = vand.u32 %v3659, 4294901760
    %v3903 = vsub.f32 %v3659, %v3902
    %v3904 = vand.u32 %v3903, 4294901760
    %v3905 = vsub.f32 %v3903, %v3904
    %v3906 = vand.u32 %v3905, 4294901760
    %3907 = vmatpush.xpose.msra.mxu0 %v3906
    %v3908 = vand.u32 %v3657, 4294901760
    %v3909 = vsub.f32 %v3657, %v3908
    %v3910 = vand.u32 %v3909, 4294901760
    %v3911 = vsub.f32 %v3909, %v3910
    %v3912 = vand.u32 %v3911, 4294901760
    %3913 = vmatpush.xpose.msra.mxu0 %v3912
    %v3914 = vand.u32 %v3655, 4294901760
    %v3915 = vsub.f32 %v3655, %v3914
    %v3916 = vand.u32 %v3915, 4294901760
    %v3917 = vsub.f32 %v3915, %v3916
    %v3918 = vand.u32 %v3917, 4294901760
    %3919 = vmatpush.xpose.msra.mxu0 %v3918
    %v3920 = vand.u32 %v3653, 4294901760
    %v3921 = vsub.f32 %v3653, %v3920
    %v3922 = vand.u32 %v3921, 4294901760
    %v3923 = vsub.f32 %v3921, %v3922
    %v3924 = vand.u32 %v3923, 4294901760
    %3925 = vmatpush.xpose.msra.mxu0 %v3924
    %v3926 = vand.u32 %v3651, 4294901760
    %v3927 = vsub.f32 %v3651, %v3926
    %v3928 = vand.u32 %v3927, 4294901760
    %v3929 = vsub.f32 %v3927, %v3928
    %v3930 = vand.u32 %v3929, 4294901760
    %3931 = vmatpush.xpose.msra.mxu0 %v3930
    %v3932 = vand.u32 %v3649, 4294901760
    %v3933 = vsub.f32 %v3649, %v3932
    %v3934 = vand.u32 %v3933, 4294901760
    %v3935 = vsub.f32 %v3933, %v3934
    %v3936 = vand.u32 %v3935, 4294901760
    %3937 = vmatpush.xpose.msra.mxu0 %v3936
    %v3938 = vand.u32 %v3617, 4294901760
    %3939 = vmatmul.f32.gmra.mxu0 %v3938
    %v3940 = vpop.f32.mrf.mxu0
    %v3941 = vadd.f32 %v3720, %v3940
    %v3942 = vand.u32 %v3619, 4294901760
    %3943 = vmatmul.f32.gmra.mxu0 %v3942
    %v3944 = vpop.f32.mrf.mxu0
    %v3945 = vadd.f32 %v3728, %v3944
    %v3946 = vand.u32 %v3621, 4294901760
    %3947 = vmatmul.f32.gmra.mxu0 %v3946
    %v3948 = vpop.f32.mrf.mxu0
    %v3949 = vadd.f32 %v3736, %v3948
    %v3950 = vand.u32 %v3623, 4294901760
    %3951 = vmatmul.f32.gmra.mxu0 %v3950
    %v3952 = vpop.f32.mrf.mxu0
    %v3953 = vadd.f32 %v3744, %v3952
    %v3954 = vand.u32 %v3625, 4294901760
    %3955 = vmatmul.f32.gmra.mxu0 %v3954
    %v3956 = vpop.f32.mrf.mxu0
    %v3957 = vadd.f32 %v3752, %v3956
    %v3958 = vand.u32 %v3627, 4294901760
    %3959 = vmatmul.f32.gmra.mxu0 %v3958
    %v3960 = vpop.f32.mrf.mxu0
    %v3961 = vadd.f32 %v3760, %v3960
    %v3962 = vand.u32 %v3629, 4294901760
    %3963 = vmatmul.f32.gmra.mxu0 %v3962
    %v3964 = vpop.f32.mrf.mxu0
    %v3965 = vadd.f32 %v3768, %v3964
    %v3966 = vand.u32 %v3631, 4294901760
    %3967 = vmatmul.f32.gmra.mxu0 %v3966
    %v3968 = vpop.f32.mrf.mxu0
    %v3969 = vadd.f32 %v3776, %v3968
    %v3970 = vand.u32 %v3633, 4294901760
    %3971 = vmatmul.f32.gmra.mxu0 %v3970
    %v3972 = vpop.f32.mrf.mxu0
    %v3973 = vadd.f32 %v3784, %v3972
    %v3974 = vand.u32 %v3635, 4294901760
    %3975 = vmatmul.f32.gmra.mxu0 %v3974
    %v3976 = vpop.f32.mrf.mxu0
    %v3977 = vadd.f32 %v3792, %v3976
    %v3978 = vand.u32 %v3637, 4294901760
    %3979 = vmatmul.f32.gmra.mxu0 %v3978
    %v3980 = vpop.f32.mrf.mxu0
    %v3981 = vadd.f32 %v3800, %v3980
    %v3982 = vand.u32 %v3639, 4294901760
    %3983 = vmatmul.f32.gmra.mxu0 %v3982
    %v3984 = vpop.f32.mrf.mxu0
    %v3985 = vadd.f32 %v3808, %v3984
    %v3986 = vand.u32 %v3641, 4294901760
    %3987 = vmatmul.f32.gmra.mxu0 %v3986
    %v3988 = vpop.f32.mrf.mxu0
    %v3989 = vadd.f32 %v3816, %v3988
    %v3990 = vand.u32 %v3643, 4294901760
    %3991 = vmatmul.f32.gmra.mxu0 %v3990
    %v3992 = vpop.f32.mrf.mxu0
    %v3993 = vadd.f32 %v3824, %v3992
    %v3994 = vand.u32 %v3645, 4294901760
    %3995 = vmatmul.f32.gmra.mxu0 %v3994
    %v3996 = vpop.f32.mrf.mxu0
    %v3997 = vadd.f32 %v3832, %v3996
    %v3998 = vand.u32 %v3647, 4294901760
    %3999 = vmatmul.f32.gmra.mxu0 %v3998
    %v4000 = vpop.f32.mrf.mxu0
    %v4001 = vadd.f32 %v3840, %v4000
    %4002 = vdwg.mxu0
    %v4003 = vand.u32 %v3679, 4294901760
    %v4004 = vsub.f32 %v3679, %v4003
    %4005 = vmatpush.xpose.msra.mxu0 %v4004
    %v4006 = vand.u32 %v3677, 4294901760
    %v4007 = vsub.f32 %v3677, %v4006
    %4008 = vmatpush.xpose.msra.mxu0 %v4007
    %v4009 = vand.u32 %v3675, 4294901760
    %v4010 = vsub.f32 %v3675, %v4009
    %4011 = vmatpush.xpose.msra.mxu0 %v4010
    %v4012 = vand.u32 %v3673, 4294901760
    %v4013 = vsub.f32 %v3673, %v4012
    %4014 = vmatpush.xpose.msra.mxu0 %v4013
    %v4015 = vand.u32 %v3671, 4294901760
    %v4016 = vsub.f32 %v3671, %v4015
    %4017 = vmatpush.xpose.msra.mxu0 %v4016
    %v4018 = vand.u32 %v3669, 4294901760
    %v4019 = vsub.f32 %v3669, %v4018
    %4020 = vmatpush.xpose.msra.mxu0 %v4019
    %v4021 = vand.u32 %v3667, 4294901760
    %v4022 = vsub.f32 %v3667, %v4021
    %4023 = vmatpush.xpose.msra.mxu0 %v4022
    %v4024 = vand.u32 %v3665, 4294901760
    %v4025 = vsub.f32 %v3665, %v4024
    %4026 = vmatpush.xpose.msra.mxu0 %v4025
    %v4027 = vand.u32 %v3663, 4294901760
    %v4028 = vsub.f32 %v3663, %v4027
    %4029 = vmatpush.xpose.msra.mxu0 %v4028
    %v4030 = vand.u32 %v3661, 4294901760
    %v4031 = vsub.f32 %v3661, %v4030
    %4032 = vmatpush.xpose.msra.mxu0 %v4031
    %v4033 = vand.u32 %v3659, 4294901760
    %v4034 = vsub.f32 %v3659, %v4033
    %4035 = vmatpush.xpose.msra.mxu0 %v4034
    %v4036 = vand.u32 %v3657, 4294901760
    %v4037 = vsub.f32 %v3657, %v4036
    %4038 = vmatpush.xpose.msra.mxu0 %v4037
    %v4039 = vand.u32 %v3655, 4294901760
    %v4040 = vsub.f32 %v3655, %v4039
    %4041 = vmatpush.xpose.msra.mxu0 %v4040
    %v4042 = vand.u32 %v3653, 4294901760
    %v4043 = vsub.f32 %v3653, %v4042
    %4044 = vmatpush.xpose.msra.mxu0 %v4043
    %v4045 = vand.u32 %v3651, 4294901760
    %v4046 = vsub.f32 %v3651, %v4045
    %4047 = vmatpush.xpose.msra.mxu0 %v4046
    %v4048 = vand.u32 %v3649, 4294901760
    %v4049 = vsub.f32 %v3649, %v4048
    %4050 = vmatpush.xpose.msra.mxu0 %v4049
    %v4051 = vand.u32 %v3617, 4294901760
    %v4052 = vsub.f32 %v3617, %v4051
    %4053 = vmatmul.f32.gmra.mxu0 %v4052
    %v4054 = vpop.f32.mrf.mxu0
    %v4055 = vadd.f32 %v3941, %v4054
    %v4056 = vand.u32 %v3619, 4294901760
    %v4057 = vsub.f32 %v3619, %v4056
    %4058 = vmatmul.f32.gmra.mxu0 %v4057
    %v4059 = vpop.f32.mrf.mxu0
    %v4060 = vadd.f32 %v3945, %v4059
    %v4061 = vand.u32 %v3621, 4294901760
    %v4062 = vsub.f32 %v3621, %v4061
    %4063 = vmatmul.f32.gmra.mxu0 %v4062
    %v4064 = vpop.f32.mrf.mxu0
    %v4065 = vadd.f32 %v3949, %v4064
    %v4066 = vand.u32 %v3623, 4294901760
    %v4067 = vsub.f32 %v3623, %v4066
    %4068 = vmatmul.f32.gmra.mxu0 %v4067
    %v4069 = vpop.f32.mrf.mxu0
    %v4070 = vadd.f32 %v3953, %v4069
    %v4071 = vand.u32 %v3625, 4294901760
    %v4072 = vsub.f32 %v3625, %v4071
    %4073 = vmatmul.f32.gmra.mxu0 %v4072
    %v4074 = vpop.f32.mrf.mxu0
    %v4075 = vadd.f32 %v3957, %v4074
    %v4076 = vand.u32 %v3627, 4294901760
    %v4077 = vsub.f32 %v3627, %v4076
    %4078 = vmatmul.f32.gmra.mxu0 %v4077
    %v4079 = vpop.f32.mrf.mxu0
    %v4080 = vadd.f32 %v3961, %v4079
    %v4081 = vand.u32 %v3629, 4294901760
    %v4082 = vsub.f32 %v3629, %v4081
    %4083 = vmatmul.f32.gmra.mxu0 %v4082
    %v4084 = vpop.f32.mrf.mxu0
    %v4085 = vadd.f32 %v3965, %v4084
    %v4086 = vand.u32 %v3631, 4294901760
    %v4087 = vsub.f32 %v3631, %v4086
    %4088 = vmatmul.f32.gmra.mxu0 %v4087
    %v4089 = vpop.f32.mrf.mxu0
    %v4090 = vadd.f32 %v3969, %v4089
    %v4091 = vand.u32 %v3633, 4294901760
    %v4092 = vsub.f32 %v3633, %v4091
    %4093 = vmatmul.f32.gmra.mxu0 %v4092
    %v4094 = vpop.f32.mrf.mxu0
    %v4095 = vadd.f32 %v3973, %v4094
    %v4096 = vand.u32 %v3635, 4294901760
    %v4097 = vsub.f32 %v3635, %v4096
    %4098 = vmatmul.f32.gmra.mxu0 %v4097
    %v4099 = vpop.f32.mrf.mxu0
    %v4100 = vadd.f32 %v3977, %v4099
    %v4101 = vand.u32 %v3637, 4294901760
    %v4102 = vsub.f32 %v3637, %v4101
    %4103 = vmatmul.f32.gmra.mxu0 %v4102
    %v4104 = vpop.f32.mrf.mxu0
    %v4105 = vadd.f32 %v3981, %v4104
    %v4106 = vand.u32 %v3639, 4294901760
    %v4107 = vsub.f32 %v3639, %v4106
    %4108 = vmatmul.f32.gmra.mxu0 %v4107
    %v4109 = vpop.f32.mrf.mxu0
    %v4110 = vadd.f32 %v3985, %v4109
    %v4111 = vand.u32 %v3641, 4294901760
    %v4112 = vsub.f32 %v3641, %v4111
    %4113 = vmatmul.f32.gmra.mxu0 %v4112
    %v4114 = vpop.f32.mrf.mxu0
    %v4115 = vadd.f32 %v3989, %v4114
    %v4116 = vand.u32 %v3643, 4294901760
    %v4117 = vsub.f32 %v3643, %v4116
    %4118 = vmatmul.f32.gmra.mxu0 %v4117
    %v4119 = vpop.f32.mrf.mxu0
    %v4120 = vadd.f32 %v3993, %v4119
    %v4121 = vand.u32 %v3645, 4294901760
    %v4122 = vsub.f32 %v3645, %v4121
    %4123 = vmatmul.f32.gmra.mxu0 %v4122
    %v4124 = vpop.f32.mrf.mxu0
    %v4125 = vadd.f32 %v3997, %v4124
    %v4126 = vand.u32 %v3647, 4294901760
    %v4127 = vsub.f32 %v3647, %v4126
    %4128 = vmatmul.f32.gmra.mxu0 %v4127
    %v4129 = vpop.f32.mrf.mxu0
    %v4130 = vadd.f32 %v4001, %v4129
    %4131 = vdwg.mxu0
    %v4132 = vand.u32 %v3679, 4294901760
    %4133 = vmatpush.xpose.msra.mxu0 %v4132
    %v4134 = vand.u32 %v3677, 4294901760
    %4135 = vmatpush.xpose.msra.mxu0 %v4134
    %v4136 = vand.u32 %v3675, 4294901760
    %4137 = vmatpush.xpose.msra.mxu0 %v4136
    %v4138 = vand.u32 %v3673, 4294901760
    %4139 = vmatpush.xpose.msra.mxu0 %v4138
    %v4140 = vand.u32 %v3671, 4294901760
    %4141 = vmatpush.xpose.msra.mxu0 %v4140
    %v4142 = vand.u32 %v3669, 4294901760
    %4143 = vmatpush.xpose.msra.mxu0 %v4142
    %v4144 = vand.u32 %v3667, 4294901760
    %4145 = vmatpush.xpose.msra.mxu0 %v4144
    %v4146 = vand.u32 %v3665, 4294901760
    %4147 = vmatpush.xpose.msra.mxu0 %v4146
    %v4148 = vand.u32 %v3663, 4294901760
    %4149 = vmatpush.xpose.msra.mxu0 %v4148
    %v4150 = vand.u32 %v3661, 4294901760
    %4151 = vmatpush.xpose.msra.mxu0 %v4150
    %v4152 = vand.u32 %v3659, 4294901760
    %4153 = vmatpush.xpose.msra.mxu0 %v4152
    %v4154 = vand.u32 %v3657, 4294901760
    %4155 = vmatpush.xpose.msra.mxu0 %v4154
    %v4156 = vand.u32 %v3655, 4294901760
    %4157 = vmatpush.xpose.msra.mxu0 %v4156
    %v4158 = vand.u32 %v3653, 4294901760
    %4159 = vmatpush.xpose.msra.mxu0 %v4158
    %v4160 = vand.u32 %v3651, 4294901760
    %4161 = vmatpush.xpose.msra.mxu0 %v4160
    %v4162 = vand.u32 %v3649, 4294901760
    %4163 = vmatpush.xpose.msra.mxu0 %v4162
    %v4164 = vand.u32 %v3617, 4294901760
    %v4165 = vsub.f32 %v3617, %v4164
    %v4166 = vand.u32 %v4165, 4294901760
    %4167 = vmatmul.f32.gmra.mxu0 %v4166
    %v4168 = vpop.f32.mrf.mxu0
    %v4169 = vadd.f32 %v4055, %v4168
    %v4170 = vand.u32 %v3619, 4294901760
    %v4171 = vsub.f32 %v3619, %v4170
    %v4172 = vand.u32 %v4171, 4294901760
    %4173 = vmatmul.f32.gmra.mxu0 %v4172
    %v4174 = vpop.f32.mrf.mxu0
    %v4175 = vadd.f32 %v4060, %v4174
    %v4176 = vand.u32 %v3621, 4294901760
    %v4177 = vsub.f32 %v3621, %v4176
    %v4178 = vand.u32 %v4177, 4294901760
    %4179 = vmatmul.f32.gmra.mxu0 %v4178
    %v4180 = vpop.f32.mrf.mxu0
    %v4181 = vadd.f32 %v4065, %v4180
    %v4182 = vand.u32 %v3623, 4294901760
    %v4183 = vsub.f32 %v3623, %v4182
    %v4184 = vand.u32 %v4183, 4294901760
    %4185 = vmatmul.f32.gmra.mxu0 %v4184
    %v4186 = vpop.f32.mrf.mxu0
    %v4187 = vadd.f32 %v4070, %v4186
    %v4188 = vand.u32 %v3625, 4294901760
    %v4189 = vsub.f32 %v3625, %v4188
    %v4190 = vand.u32 %v4189, 4294901760
    %4191 = vmatmul.f32.gmra.mxu0 %v4190
    %v4192 = vpop.f32.mrf.mxu0
    %v4193 = vadd.f32 %v4075, %v4192
    %v4194 = vand.u32 %v3627, 4294901760
    %v4195 = vsub.f32 %v3627, %v4194
    %v4196 = vand.u32 %v4195, 4294901760
    %4197 = vmatmul.f32.gmra.mxu0 %v4196
    %v4198 = vpop.f32.mrf.mxu0
    %v4199 = vadd.f32 %v4080, %v4198
    %v4200 = vand.u32 %v3629, 4294901760
    %v4201 = vsub.f32 %v3629, %v4200
    %v4202 = vand.u32 %v4201, 4294901760
    %4203 = vmatmul.f32.gmra.mxu0 %v4202
    %v4204 = vpop.f32.mrf.mxu0
    %v4205 = vadd.f32 %v4085, %v4204
    %v4206 = vand.u32 %v3631, 4294901760
    %v4207 = vsub.f32 %v3631, %v4206
    %v4208 = vand.u32 %v4207, 4294901760
    %4209 = vmatmul.f32.gmra.mxu0 %v4208
    %v4210 = vpop.f32.mrf.mxu0
    %v4211 = vadd.f32 %v4090, %v4210
    %v4212 = vand.u32 %v3633, 4294901760
    %v4213 = vsub.f32 %v3633, %v4212
    %v4214 = vand.u32 %v4213, 4294901760
    %4215 = vmatmul.f32.gmra.mxu0 %v4214
    %v4216 = vpop.f32.mrf.mxu0
    %v4217 = vadd.f32 %v4095, %v4216
    %v4218 = vand.u32 %v3635, 4294901760
    %v4219 = vsub.f32 %v3635, %v4218
    %v4220 = vand.u32 %v4219, 4294901760
    %4221 = vmatmul.f32.gmra.mxu0 %v4220
    %v4222 = vpop.f32.mrf.mxu0
    %v4223 = vadd.f32 %v4100, %v4222
    %v4224 = vand.u32 %v3637, 4294901760
    %v4225 = vsub.f32 %v3637, %v4224
    %v4226 = vand.u32 %v4225, 4294901760
    %4227 = vmatmul.f32.gmra.mxu0 %v4226
    %v4228 = vpop.f32.mrf.mxu0
    %v4229 = vadd.f32 %v4105, %v4228
    %v4230 = vand.u32 %v3639, 4294901760
    %v4231 = vsub.f32 %v3639, %v4230
    %v4232 = vand.u32 %v4231, 4294901760
    %4233 = vmatmul.f32.gmra.mxu0 %v4232
    %v4234 = vpop.f32.mrf.mxu0
    %v4235 = vadd.f32 %v4110, %v4234
    %v4236 = vand.u32 %v3641, 4294901760
    %v4237 = vsub.f32 %v3641, %v4236
    %v4238 = vand.u32 %v4237, 4294901760
    %4239 = vmatmul.f32.gmra.mxu0 %v4238
    %v4240 = vpop.f32.mrf.mxu0
    %v4241 = vadd.f32 %v4115, %v4240
    %v4242 = vand.u32 %v3643, 4294901760
    %v4243 = vsub.f32 %v3643, %v4242
    %v4244 = vand.u32 %v4243, 4294901760
    %4245 = vmatmul.f32.gmra.mxu0 %v4244
    %v4246 = vpop.f32.mrf.mxu0
    %v4247 = vadd.f32 %v4120, %v4246
    %v4248 = vand.u32 %v3645, 4294901760
    %v4249 = vsub.f32 %v3645, %v4248
    %v4250 = vand.u32 %v4249, 4294901760
    %4251 = vmatmul.f32.gmra.mxu0 %v4250
    %v4252 = vpop.f32.mrf.mxu0
    %v4253 = vadd.f32 %v4125, %v4252
    %v4254 = vand.u32 %v3647, 4294901760
    %v4255 = vsub.f32 %v3647, %v4254
    %v4256 = vand.u32 %v4255, 4294901760
    %4257 = vmatmul.f32.gmra.mxu0 %v4256
    %v4258 = vpop.f32.mrf.mxu0
    %v4259 = vadd.f32 %v4130, %v4258
    %4260 = vdwg.mxu0
    %v4261 = vand.u32 %v3679, 4294901760
    %v4262 = vsub.f32 %v3679, %v4261
    %v4263 = vand.u32 %v4262, 4294901760
    %4264 = vmatpush.xpose.msra.mxu0 %v4263
    %v4265 = vand.u32 %v3677, 4294901760
    %v4266 = vsub.f32 %v3677, %v4265
    %v4267 = vand.u32 %v4266, 4294901760
    %4268 = vmatpush.xpose.msra.mxu0 %v4267
    %v4269 = vand.u32 %v3675, 4294901760
    %v4270 = vsub.f32 %v3675, %v4269
    %v4271 = vand.u32 %v4270, 4294901760
    %4272 = vmatpush.xpose.msra.mxu0 %v4271
    %v4273 = vand.u32 %v3673, 4294901760
    %v4274 = vsub.f32 %v3673, %v4273
    %v4275 = vand.u32 %v4274, 4294901760
    %4276 = vmatpush.xpose.msra.mxu0 %v4275
    %v4277 = vand.u32 %v3671, 4294901760
    %v4278 = vsub.f32 %v3671, %v4277
    %v4279 = vand.u32 %v4278, 4294901760
    %4280 = vmatpush.xpose.msra.mxu0 %v4279
    %v4281 = vand.u32 %v3669, 4294901760
    %v4282 = vsub.f32 %v3669, %v4281
    %v4283 = vand.u32 %v4282, 4294901760
    %4284 = vmatpush.xpose.msra.mxu0 %v4283
    %v4285 = vand.u32 %v3667, 4294901760
    %v4286 = vsub.f32 %v3667, %v4285
    %v4287 = vand.u32 %v4286, 4294901760
    %4288 = vmatpush.xpose.msra.mxu0 %v4287
    %v4289 = vand.u32 %v3665, 4294901760
    %v4290 = vsub.f32 %v3665, %v4289
    %v4291 = vand.u32 %v4290, 4294901760
    %4292 = vmatpush.xpose.msra.mxu0 %v4291
    %v4293 = vand.u32 %v3663, 4294901760
    %v4294 = vsub.f32 %v3663, %v4293
    %v4295 = vand.u32 %v4294, 4294901760
    %4296 = vmatpush.xpose.msra.mxu0 %v4295
    %v4297 = vand.u32 %v3661, 4294901760
    %v4298 = vsub.f32 %v3661, %v4297
    %v4299 = vand.u32 %v4298, 4294901760
    %4300 = vmatpush.xpose.msra.mxu0 %v4299
    %v4301 = vand.u32 %v3659, 4294901760
    %v4302 = vsub.f32 %v3659, %v4301
    %v4303 = vand.u32 %v4302, 4294901760
    %4304 = vmatpush.xpose.msra.mxu0 %v4303
    %v4305 = vand.u32 %v3657, 4294901760
    %v4306 = vsub.f32 %v3657, %v4305
    %v4307 = vand.u32 %v4306, 4294901760
    %4308 = vmatpush.xpose.msra.mxu0 %v4307
    %v4309 = vand.u32 %v3655, 4294901760
    %v4310 = vsub.f32 %v3655, %v4309
    %v4311 = vand.u32 %v4310, 4294901760
    %4312 = vmatpush.xpose.msra.mxu0 %v4311
    %v4313 = vand.u32 %v3653, 4294901760
    %v4314 = vsub.f32 %v3653, %v4313
    %v4315 = vand.u32 %v4314, 4294901760
    %4316 = vmatpush.xpose.msra.mxu0 %v4315
    %v4317 = vand.u32 %v3651, 4294901760
    %v4318 = vsub.f32 %v3651, %v4317
    %v4319 = vand.u32 %v4318, 4294901760
    %4320 = vmatpush.xpose.msra.mxu0 %v4319
    %v4321 = vand.u32 %v3649, 4294901760
    %v4322 = vsub.f32 %v3649, %v4321
    %v4323 = vand.u32 %v4322, 4294901760
    %4324 = vmatpush.xpose.msra.mxu0 %v4323
    %v4325 = vand.u32 %v3617, 4294901760
    %4326 = vmatmul.f32.gmra.mxu0 %v4325
    %v4327 = vpop.f32.mrf.mxu0
    %v4328 = vadd.f32 %v4169, %v4327
    %v4329 = vand.u32 %v3619, 4294901760
    %4330 = vmatmul.f32.gmra.mxu0 %v4329
    %v4331 = vpop.f32.mrf.mxu0
    %v4332 = vadd.f32 %v4175, %v4331
    %v4333 = vand.u32 %v3621, 4294901760
    %4334 = vmatmul.f32.gmra.mxu0 %v4333
    %v4335 = vpop.f32.mrf.mxu0
    %v4336 = vadd.f32 %v4181, %v4335
    %v4337 = vand.u32 %v3623, 4294901760
    %4338 = vmatmul.f32.gmra.mxu0 %v4337
    %v4339 = vpop.f32.mrf.mxu0
    %v4340 = vadd.f32 %v4187, %v4339
    %v4341 = vand.u32 %v3625, 4294901760
    %4342 = vmatmul.f32.gmra.mxu0 %v4341
    %v4343 = vpop.f32.mrf.mxu0
    %v4344 = vadd.f32 %v4193, %v4343
    %v4345 = vand.u32 %v3627, 4294901760
    %4346 = vmatmul.f32.gmra.mxu0 %v4345
    %v4347 = vpop.f32.mrf.mxu0
    %v4348 = vadd.f32 %v4199, %v4347
    %v4349 = vand.u32 %v3629, 4294901760
    %4350 = vmatmul.f32.gmra.mxu0 %v4349
    %v4351 = vpop.f32.mrf.mxu0
    %v4352 = vadd.f32 %v4205, %v4351
    %v4353 = vand.u32 %v3631, 4294901760
    %4354 = vmatmul.f32.gmra.mxu0 %v4353
    %v4355 = vpop.f32.mrf.mxu0
    %v4356 = vadd.f32 %v4211, %v4355
    %v4357 = vand.u32 %v3633, 4294901760
    %4358 = vmatmul.f32.gmra.mxu0 %v4357
    %v4359 = vpop.f32.mrf.mxu0
    %v4360 = vadd.f32 %v4217, %v4359
    %v4361 = vand.u32 %v3635, 4294901760
    %4362 = vmatmul.f32.gmra.mxu0 %v4361
    %v4363 = vpop.f32.mrf.mxu0
    %v4364 = vadd.f32 %v4223, %v4363
    %v4365 = vand.u32 %v3637, 4294901760
    %4366 = vmatmul.f32.gmra.mxu0 %v4365
    %v4367 = vpop.f32.mrf.mxu0
    %v4368 = vadd.f32 %v4229, %v4367
    %v4369 = vand.u32 %v3639, 4294901760
    %4370 = vmatmul.f32.gmra.mxu0 %v4369
    %v4371 = vpop.f32.mrf.mxu0
    %v4372 = vadd.f32 %v4235, %v4371
    %v4373 = vand.u32 %v3641, 4294901760
    %4374 = vmatmul.f32.gmra.mxu0 %v4373
    %v4375 = vpop.f32.mrf.mxu0
    %v4376 = vadd.f32 %v4241, %v4375
    %v4377 = vand.u32 %v3643, 4294901760
    %4378 = vmatmul.f32.gmra.mxu0 %v4377
    %v4379 = vpop.f32.mrf.mxu0
    %v4380 = vadd.f32 %v4247, %v4379
    %v4381 = vand.u32 %v3645, 4294901760
    %4382 = vmatmul.f32.gmra.mxu0 %v4381
    %v4383 = vpop.f32.mrf.mxu0
    %v4384 = vadd.f32 %v4253, %v4383
    %v4385 = vand.u32 %v3647, 4294901760
    %4386 = vmatmul.f32.gmra.mxu0 %v4385
    %v4387 = vpop.f32.mrf.mxu0
    %v4388 = vadd.f32 %v4259, %v4387
    %4389 = vdwg.mxu0
    %v4390 = vand.u32 %v3679, 4294901760
    %4391 = vmatpush.xpose.msra.mxu0 %v4390
    %v4392 = vand.u32 %v3677, 4294901760
    %4393 = vmatpush.xpose.msra.mxu0 %v4392
    %v4394 = vand.u32 %v3675, 4294901760
    %4395 = vmatpush.xpose.msra.mxu0 %v4394
    %v4396 = vand.u32 %v3673, 4294901760
    %4397 = vmatpush.xpose.msra.mxu0 %v4396
    %v4398 = vand.u32 %v3671, 4294901760
    %4399 = vmatpush.xpose.msra.mxu0 %v4398
    %v4400 = vand.u32 %v3669, 4294901760
    %4401 = vmatpush.xpose.msra.mxu0 %v4400
    %v4402 = vand.u32 %v3667, 4294901760
    %4403 = vmatpush.xpose.msra.mxu0 %v4402
    %v4404 = vand.u32 %v3665, 4294901760
    %4405 = vmatpush.xpose.msra.mxu0 %v4404
    %v4406 = vand.u32 %v3663, 4294901760
    %4407 = vmatpush.xpose.msra.mxu0 %v4406
    %v4408 = vand.u32 %v3661, 4294901760
    %4409 = vmatpush.xpose.msra.mxu0 %v4408
    %v4410 = vand.u32 %v3659, 4294901760
    %4411 = vmatpush.xpose.msra.mxu0 %v4410
    %v4412 = vand.u32 %v3657, 4294901760
    %4413 = vmatpush.xpose.msra.mxu0 %v4412
    %v4414 = vand.u32 %v3655, 4294901760
    %4415 = vmatpush.xpose.msra.mxu0 %v4414
    %v4416 = vand.u32 %v3653, 4294901760
    %4417 = vmatpush.xpose.msra.mxu0 %v4416
    %v4418 = vand.u32 %v3651, 4294901760
    %4419 = vmatpush.xpose.msra.mxu0 %v4418
    %v4420 = vand.u32 %v3649, 4294901760
    %4421 = vmatpush.xpose.msra.mxu0 %v4420
    %v4422 = vand.u32 %v3617, 4294901760
    %4423 = vmatmul.f32.gmra.mxu0 %v4422
    %v4424 = vpop.f32.mrf.mxu0
    %v4425 = vadd.f32 %v4328, %v4424
    %v4426 = vand.u32 %v3619, 4294901760
    %4427 = vmatmul.f32.gmra.mxu0 %v4426
    %v4428 = vpop.f32.mrf.mxu0
    %v4429 = vadd.f32 %v4332, %v4428
    %v4430 = vand.u32 %v3621, 4294901760
    %4431 = vmatmul.f32.gmra.mxu0 %v4430
    %v4432 = vpop.f32.mrf.mxu0
    %v4433 = vadd.f32 %v4336, %v4432
    %v4434 = vand.u32 %v3623, 4294901760
    %4435 = vmatmul.f32.gmra.mxu0 %v4434
    %v4436 = vpop.f32.mrf.mxu0
    %v4437 = vadd.f32 %v4340, %v4436
    %v4438 = vand.u32 %v3625, 4294901760
    %4439 = vmatmul.f32.gmra.mxu0 %v4438
    %v4440 = vpop.f32.mrf.mxu0
    %v4441 = vadd.f32 %v4344, %v4440
    %v4442 = vand.u32 %v3627, 4294901760
    %4443 = vmatmul.f32.gmra.mxu0 %v4442
    %v4444 = vpop.f32.mrf.mxu0
    %v4445 = vadd.f32 %v4348, %v4444
    %v4446 = vand.u32 %v3629, 4294901760
    %4447 = vmatmul.f32.gmra.mxu0 %v4446
    %v4448 = vpop.f32.mrf.mxu0
    %v4449 = vadd.f32 %v4352, %v4448
    %v4450 = vand.u32 %v3631, 4294901760
    %4451 = vmatmul.f32.gmra.mxu0 %v4450
    %v4452 = vpop.f32.mrf.mxu0
    %v4453 = vadd.f32 %v4356, %v4452
    %v4454 = vand.u32 %v3633, 4294901760
    %4455 = vmatmul.f32.gmra.mxu0 %v4454
    %v4456 = vpop.f32.mrf.mxu0
    %v4457 = vadd.f32 %v4360, %v4456
    %v4458 = vand.u32 %v3635, 4294901760
    %4459 = vmatmul.f32.gmra.mxu0 %v4458
    %v4460 = vpop.f32.mrf.mxu0
    %v4461 = vadd.f32 %v4364, %v4460
    %v4462 = vand.u32 %v3637, 4294901760
    %4463 = vmatmul.f32.gmra.mxu0 %v4462
    %v4464 = vpop.f32.mrf.mxu0
    %v4465 = vadd.f32 %v4368, %v4464
    %v4466 = vand.u32 %v3639, 4294901760
    %4467 = vmatmul.f32.gmra.mxu0 %v4466
    %v4468 = vpop.f32.mrf.mxu0
    %v4469 = vadd.f32 %v4372, %v4468
    %v4470 = vand.u32 %v3641, 4294901760
    %4471 = vmatmul.f32.gmra.mxu0 %v4470
    %v4472 = vpop.f32.mrf.mxu0
    %v4473 = vadd.f32 %v4376, %v4472
    %v4474 = vand.u32 %v3643, 4294901760
    %4475 = vmatmul.f32.gmra.mxu0 %v4474
    %v4476 = vpop.f32.mrf.mxu0
    %v4477 = vadd.f32 %v4380, %v4476
    %v4478 = vand.u32 %v3645, 4294901760
    %4479 = vmatmul.f32.gmra.mxu0 %v4478
    %v4480 = vpop.f32.mrf.mxu0
    %v4481 = vadd.f32 %v4384, %v4480
    %v4482 = vand.u32 %v3647, 4294901760
    %4483 = vmatmul.f32.gmra.mxu0 %v4482
    %v4484 = vpop.f32.mrf.mxu0
    %v4485 = vadd.f32 %v4388, %v4484
    %4486 = vdwg.mxu0
    %v4487 = vsel %vm2315, %v4425, -1e+30
    %v4488 = vsel %vm2316, %v4429, -1e+30
    %v4489 = vsel %vm2317, %v4433, -1e+30
    %v4490 = vsel %vm2318, %v4437, -1e+30
    %v4491 = vsel %vm2319, %v4441, -1e+30
    %v4492 = vsel %vm2320, %v4445, -1e+30
    %v4493 = vsel %vm2321, %v4449, -1e+30
    %v4494 = vsel %vm2322, %v4453, -1e+30
    %v4495 = vsel %vm2323, %v4457, -1e+30
    %v4496 = vsel %vm2324, %v4461, -1e+30
    %v4497 = vsel %vm2325, %v4465, -1e+30
    %v4498 = vsel %vm2326, %v4469, -1e+30
    %v4499 = vsel %vm2327, %v4473, -1e+30
    %v4500 = vsel %vm2328, %v4477, -1e+30
    %v4501 = vsel %vm2329, %v4481, -1e+30
    %v4502 = vsel %vm2330, %v4485, -1e+30
    %4503 = vmax.xlane.f32.xlu0 %v4487
    %v4504 = vpop.xlane.xlu0 %4503
    %4505 = vmax.xlane.f32.xlu0 %v4488
    %v4506 = vpop.xlane.xlu0 %4505
    %4507 = vmax.xlane.f32.xlu0 %v4489
    %v4508 = vpop.xlane.xlu0 %4507
    %4509 = vmax.xlane.f32.xlu0 %v4490
    %v4510 = vpop.xlane.xlu0 %4509
    %4511 = vmax.xlane.f32.xlu0 %v4491
    %v4512 = vpop.xlane.xlu0 %4511
    %4513 = vmax.xlane.f32.xlu0 %v4492
    %v4514 = vpop.xlane.xlu0 %4513
    %4515 = vmax.xlane.f32.xlu0 %v4493
    %v4516 = vpop.xlane.xlu0 %4515
    %4517 = vmax.xlane.f32.xlu0 %v4494
    %v4518 = vpop.xlane.xlu0 %4517
    %4519 = vmax.xlane.f32.xlu0 %v4495
    %v4520 = vpop.xlane.xlu0 %4519
    %4521 = vmax.xlane.f32.xlu0 %v4496
    %v4522 = vpop.xlane.xlu0 %4521
    %4523 = vmax.xlane.f32.xlu0 %v4497
    %v4524 = vpop.xlane.xlu0 %4523
    %4525 = vmax.xlane.f32.xlu0 %v4498
    %v4526 = vpop.xlane.xlu0 %4525
    %4527 = vmax.xlane.f32.xlu0 %v4499
    %v4528 = vpop.xlane.xlu0 %4527
    %4529 = vmax.xlane.f32.xlu0 %v4500
    %v4530 = vpop.xlane.xlu0 %4529
    %4531 = vmax.xlane.f32.xlu0 %v4501
    %v4532 = vpop.xlane.xlu0 %4531
    %4533 = vmax.xlane.f32.xlu0 %v4502
    %v4534 = vpop.xlane.xlu0 %4533
    %v4535 = vsub.f32 %v4487, %v4504
    %v4536 = vsub.f32 %v4488, %v4506
    %v4537 = vsub.f32 %v4489, %v4508
    %v4538 = vsub.f32 %v4490, %v4510
    %v4539 = vsub.f32 %v4491, %v4512
    %v4540 = vsub.f32 %v4492, %v4514
    %v4541 = vsub.f32 %v4493, %v4516
    %v4542 = vsub.f32 %v4494, %v4518
    %v4543 = vsub.f32 %v4495, %v4520
    %v4544 = vsub.f32 %v4496, %v4522
    %v4545 = vsub.f32 %v4497, %v4524
    %v4546 = vsub.f32 %v4498, %v4526
    %v4547 = vsub.f32 %v4499, %v4528
    %v4548 = vsub.f32 %v4500, %v4530
    %v4549 = vsub.f32 %v4501, %v4532
    %v4550 = vsub.f32 %v4502, %v4534
    %v4551 = vmul.f32 %v4535, 1.442695
    %v4552 = vpow.pop %v4551
    %v4553 = vmul.f32 %v4536, 1.442695
    %v4554 = vpow.pop %v4553
    %v4555 = vmul.f32 %v4537, 1.442695
    %v4556 = vpow.pop %v4555
    %v4557 = vmul.f32 %v4538, 1.442695
    %v4558 = vpow.pop %v4557
    %v4559 = vmul.f32 %v4539, 1.442695
    %v4560 = vpow.pop %v4559
    %v4561 = vmul.f32 %v4540, 1.442695
    %v4562 = vpow.pop %v4561
    %v4563 = vmul.f32 %v4541, 1.442695
    %v4564 = vpow.pop %v4563
    %v4565 = vmul.f32 %v4542, 1.442695
    %v4566 = vpow.pop %v4565
    %v4567 = vmul.f32 %v4543, 1.442695
    %v4568 = vpow.pop %v4567
    %v4569 = vmul.f32 %v4544, 1.442695
    %v4570 = vpow.pop %v4569
    %v4571 = vmul.f32 %v4545, 1.442695
    %v4572 = vpow.pop %v4571
    %v4573 = vmul.f32 %v4546, 1.442695
    %v4574 = vpow.pop %v4573
    %v4575 = vmul.f32 %v4547, 1.442695
    %v4576 = vpow.pop %v4575
    %v4577 = vmul.f32 %v4548, 1.442695
    %v4578 = vpow.pop %v4577
    %v4579 = vmul.f32 %v4549, 1.442695
    %v4580 = vpow.pop %v4579
    %v4581 = vmul.f32 %v4550, 1.442695
    %v4582 = vpow.pop %v4581
    %4583 = vadd.xlane.f32.xlu0 %v4552
    %v4584 = vpop.xlane.xlu0 %4583
    %4585 = vadd.xlane.f32.xlu0 %v4554
    %v4586 = vpop.xlane.xlu0 %4585
    %4587 = vadd.xlane.f32.xlu0 %v4556
    %v4588 = vpop.xlane.xlu0 %4587
    %4589 = vadd.xlane.f32.xlu0 %v4558
    %v4590 = vpop.xlane.xlu0 %4589
    %4591 = vadd.xlane.f32.xlu0 %v4560
    %v4592 = vpop.xlane.xlu0 %4591
    %4593 = vadd.xlane.f32.xlu0 %v4562
    %v4594 = vpop.xlane.xlu0 %4593
    %4595 = vadd.xlane.f32.xlu0 %v4564
    %v4596 = vpop.xlane.xlu0 %4595
    %4597 = vadd.xlane.f32.xlu0 %v4566
    %v4598 = vpop.xlane.xlu0 %4597
    %4599 = vadd.xlane.f32.xlu0 %v4568
    %v4600 = vpop.xlane.xlu0 %4599
    %4601 = vadd.xlane.f32.xlu0 %v4570
    %v4602 = vpop.xlane.xlu0 %4601
    %4603 = vadd.xlane.f32.xlu0 %v4572
    %v4604 = vpop.xlane.xlu0 %4603
    %4605 = vadd.xlane.f32.xlu0 %v4574
    %v4606 = vpop.xlane.xlu0 %4605
    %4607 = vadd.xlane.f32.xlu0 %v4576
    %v4608 = vpop.xlane.xlu0 %4607
    %4609 = vadd.xlane.f32.xlu0 %v4578
    %v4610 = vpop.xlane.xlu0 %4609
    %4611 = vadd.xlane.f32.xlu0 %v4580
    %v4612 = vpop.xlane.xlu0 %4611
    %4613 = vadd.xlane.f32.xlu0 %v4582
    %v4614 = vpop.xlane.xlu0 %4613
    %4615 = vrot.lane.b32.xlu0 %v1315, 64
    %v4616 = vpop.permute.xlu0 %4615
    %4617 = vrot.lane.b32.xlu0 %v1319, 64
    %v4618 = vpop.permute.xlu0 %4617
    %4619 = vrot.lane.b32.xlu0 %v1323, 64
    %v4620 = vpop.permute.xlu0 %4619
    %4621 = vrot.lane.b32.xlu0 %v1327, 64
    %v4622 = vpop.permute.xlu0 %4621
    %4623 = vrot.lane.b32.xlu0 %v1331, 64
    %v4624 = vpop.permute.xlu0 %4623
    %4625 = vrot.lane.b32.xlu0 %v1335, 64
    %v4626 = vpop.permute.xlu0 %4625
    %4627 = vrot.lane.b32.xlu0 %v1339, 64
    %v4628 = vpop.permute.xlu0 %4627
    %4629 = vrot.lane.b32.xlu0 %v1343, 64
    %v4630 = vpop.permute.xlu0 %4629
    %4631 = vrot.lane.b32.xlu0 %v1347, 64
    %v4632 = vpop.permute.xlu0 %4631
    %4633 = vrot.lane.b32.xlu0 %v1351, 64
    %v4634 = vpop.permute.xlu0 %4633
    %4635 = vrot.lane.b32.xlu0 %v1355, 64
    %v4636 = vpop.permute.xlu0 %4635
    %4637 = vrot.lane.b32.xlu0 %v1359, 64
    %v4638 = vpop.permute.xlu0 %4637
    %4639 = vrot.lane.b32.xlu0 %v1363, 64
    %v4640 = vpop.permute.xlu0 %4639
    %4641 = vrot.lane.b32.xlu0 %v1367, 64
    %v4642 = vpop.permute.xlu0 %4641
    %4643 = vrot.lane.b32.xlu0 %v1371, 64
    %v4644 = vpop.permute.xlu0 %4643
    %4645 = vrot.lane.b32.xlu0 %v1375, 64
    %v4646 = vpop.permute.xlu0 %4645
    %v4663 = vand.u32 %v4646, 4294901760
    %4664 = vmatpush.msra.mxu0 %v4663
    %v4665 = vand.u32 %v4644, 4294901760
    %4666 = vmatpush.msra.mxu0 %v4665
    %v4667 = vand.u32 %v4642, 4294901760
    %4668 = vmatpush.msra.mxu0 %v4667
    %v4669 = vand.u32 %v4640, 4294901760
    %4670 = vmatpush.msra.mxu0 %v4669
    %v4671 = vand.u32 %v4638, 4294901760
    %4672 = vmatpush.msra.mxu0 %v4671
    %v4673 = vand.u32 %v4636, 4294901760
    %4674 = vmatpush.msra.mxu0 %v4673
    %v4675 = vand.u32 %v4634, 4294901760
    %4676 = vmatpush.msra.mxu0 %v4675
    %v4677 = vand.u32 %v4632, 4294901760
    %4678 = vmatpush.msra.mxu0 %v4677
    %v4679 = vand.u32 %v4630, 4294901760
    %4680 = vmatpush.msra.mxu0 %v4679
    %v4681 = vand.u32 %v4628, 4294901760
    %4682 = vmatpush.msra.mxu0 %v4681
    %v4683 = vand.u32 %v4626, 4294901760
    %4684 = vmatpush.msra.mxu0 %v4683
    %v4685 = vand.u32 %v4624, 4294901760
    %4686 = vmatpush.msra.mxu0 %v4685
    %v4687 = vand.u32 %v4622, 4294901760
    %4688 = vmatpush.msra.mxu0 %v4687
    %v4689 = vand.u32 %v4620, 4294901760
    %4690 = vmatpush.msra.mxu0 %v4689
    %v4691 = vand.u32 %v4618, 4294901760
    %4692 = vmatpush.msra.mxu0 %v4691
    %v4693 = vand.u32 %v4616, 4294901760
    %4694 = vmatpush.msra.mxu0 %v4693
    %v4695 = vand.u32 %v4552, 4294901760
    %v4696 = vsub.f32 %v4552, %v4695
    %v4697 = vand.u32 %v4696, 4294901760
    %v4698 = vsub.f32 %v4696, %v4697
    %v4699 = vand.u32 %v4698, 4294901760
    %4700 = vmatmul.f32.gmra.mxu0 %v4699
    %v4701 = vpop.f32.mrf.mxu0
    %v4702 = vadd.f32 0.0, %v4701
    %v4703 = vand.u32 %v4554, 4294901760
    %v4704 = vsub.f32 %v4554, %v4703
    %v4705 = vand.u32 %v4704, 4294901760
    %v4706 = vsub.f32 %v4704, %v4705
    %v4707 = vand.u32 %v4706, 4294901760
    %4708 = vmatmul.f32.gmra.mxu0 %v4707
    %v4709 = vpop.f32.mrf.mxu0
    %v4710 = vadd.f32 0.0, %v4709
    %v4711 = vand.u32 %v4556, 4294901760
    %v4712 = vsub.f32 %v4556, %v4711
    %v4713 = vand.u32 %v4712, 4294901760
    %v4714 = vsub.f32 %v4712, %v4713
    %v4715 = vand.u32 %v4714, 4294901760
    %4716 = vmatmul.f32.gmra.mxu0 %v4715
    %v4717 = vpop.f32.mrf.mxu0
    %v4718 = vadd.f32 0.0, %v4717
    %v4719 = vand.u32 %v4558, 4294901760
    %v4720 = vsub.f32 %v4558, %v4719
    %v4721 = vand.u32 %v4720, 4294901760
    %v4722 = vsub.f32 %v4720, %v4721
    %v4723 = vand.u32 %v4722, 4294901760
    %4724 = vmatmul.f32.gmra.mxu0 %v4723
    %v4725 = vpop.f32.mrf.mxu0
    %v4726 = vadd.f32 0.0, %v4725
    %v4727 = vand.u32 %v4560, 4294901760
    %v4728 = vsub.f32 %v4560, %v4727
    %v4729 = vand.u32 %v4728, 4294901760
    %v4730 = vsub.f32 %v4728, %v4729
    %v4731 = vand.u32 %v4730, 4294901760
    %4732 = vmatmul.f32.gmra.mxu0 %v4731
    %v4733 = vpop.f32.mrf.mxu0
    %v4734 = vadd.f32 0.0, %v4733
    %v4735 = vand.u32 %v4562, 4294901760
    %v4736 = vsub.f32 %v4562, %v4735
    %v4737 = vand.u32 %v4736, 4294901760
    %v4738 = vsub.f32 %v4736, %v4737
    %v4739 = vand.u32 %v4738, 4294901760
    %4740 = vmatmul.f32.gmra.mxu0 %v4739
    %v4741 = vpop.f32.mrf.mxu0
    %v4742 = vadd.f32 0.0, %v4741
    %v4743 = vand.u32 %v4564, 4294901760
    %v4744 = vsub.f32 %v4564, %v4743
    %v4745 = vand.u32 %v4744, 4294901760
    %v4746 = vsub.f32 %v4744, %v4745
    %v4747 = vand.u32 %v4746, 4294901760
    %4748 = vmatmul.f32.gmra.mxu0 %v4747
    %v4749 = vpop.f32.mrf.mxu0
    %v4750 = vadd.f32 0.0, %v4749
    %v4751 = vand.u32 %v4566, 4294901760
    %v4752 = vsub.f32 %v4566, %v4751
    %v4753 = vand.u32 %v4752, 4294901760
    %v4754 = vsub.f32 %v4752, %v4753
    %v4755 = vand.u32 %v4754, 4294901760
    %4756 = vmatmul.f32.gmra.mxu0 %v4755
    %v4757 = vpop.f32.mrf.mxu0
    %v4758 = vadd.f32 0.0, %v4757
    %v4759 = vand.u32 %v4568, 4294901760
    %v4760 = vsub.f32 %v4568, %v4759
    %v4761 = vand.u32 %v4760, 4294901760
    %v4762 = vsub.f32 %v4760, %v4761
    %v4763 = vand.u32 %v4762, 4294901760
    %4764 = vmatmul.f32.gmra.mxu0 %v4763
    %v4765 = vpop.f32.mrf.mxu0
    %v4766 = vadd.f32 0.0, %v4765
    %v4767 = vand.u32 %v4570, 4294901760
    %v4768 = vsub.f32 %v4570, %v4767
    %v4769 = vand.u32 %v4768, 4294901760
    %v4770 = vsub.f32 %v4768, %v4769
    %v4771 = vand.u32 %v4770, 4294901760
    %4772 = vmatmul.f32.gmra.mxu0 %v4771
    %v4773 = vpop.f32.mrf.mxu0
    %v4774 = vadd.f32 0.0, %v4773
    %v4775 = vand.u32 %v4572, 4294901760
    %v4776 = vsub.f32 %v4572, %v4775
    %v4777 = vand.u32 %v4776, 4294901760
    %v4778 = vsub.f32 %v4776, %v4777
    %v4779 = vand.u32 %v4778, 4294901760
    %4780 = vmatmul.f32.gmra.mxu0 %v4779
    %v4781 = vpop.f32.mrf.mxu0
    %v4782 = vadd.f32 0.0, %v4781
    %v4783 = vand.u32 %v4574, 4294901760
    %v4784 = vsub.f32 %v4574, %v4783
    %v4785 = vand.u32 %v4784, 4294901760
    %v4786 = vsub.f32 %v4784, %v4785
    %v4787 = vand.u32 %v4786, 4294901760
    %4788 = vmatmul.f32.gmra.mxu0 %v4787
    %v4789 = vpop.f32.mrf.mxu0
    %v4790 = vadd.f32 0.0, %v4789
    %v4791 = vand.u32 %v4576, 4294901760
    %v4792 = vsub.f32 %v4576, %v4791
    %v4793 = vand.u32 %v4792, 4294901760
    %v4794 = vsub.f32 %v4792, %v4793
    %v4795 = vand.u32 %v4794, 4294901760
    %4796 = vmatmul.f32.gmra.mxu0 %v4795
    %v4797 = vpop.f32.mrf.mxu0
    %v4798 = vadd.f32 0.0, %v4797
    %v4799 = vand.u32 %v4578, 4294901760
    %v4800 = vsub.f32 %v4578, %v4799
    %v4801 = vand.u32 %v4800, 4294901760
    %v4802 = vsub.f32 %v4800, %v4801
    %v4803 = vand.u32 %v4802, 4294901760
    %4804 = vmatmul.f32.gmra.mxu0 %v4803
    %v4805 = vpop.f32.mrf.mxu0
    %v4806 = vadd.f32 0.0, %v4805
    %v4807 = vand.u32 %v4580, 4294901760
    %v4808 = vsub.f32 %v4580, %v4807
    %v4809 = vand.u32 %v4808, 4294901760
    %v4810 = vsub.f32 %v4808, %v4809
    %v4811 = vand.u32 %v4810, 4294901760
    %4812 = vmatmul.f32.gmra.mxu0 %v4811
    %v4813 = vpop.f32.mrf.mxu0
    %v4814 = vadd.f32 0.0, %v4813
    %v4815 = vand.u32 %v4582, 4294901760
    %v4816 = vsub.f32 %v4582, %v4815
    %v4817 = vand.u32 %v4816, 4294901760
    %v4818 = vsub.f32 %v4816, %v4817
    %v4819 = vand.u32 %v4818, 4294901760
    %4820 = vmatmul.f32.gmra.mxu0 %v4819
    %v4821 = vpop.f32.mrf.mxu0
    %v4822 = vadd.f32 0.0, %v4821
    %4823 = vdwg.mxu0
    %v4824 = vand.u32 %v4646, 4294901760
    %v4825 = vsub.f32 %v4646, %v4824
    %v4826 = vand.u32 %v4825, 4294901760
    %v4827 = vsub.f32 %v4825, %v4826
    %v4828 = vand.u32 %v4827, 4294901760
    %4829 = vmatpush.msra.mxu0 %v4828
    %v4830 = vand.u32 %v4644, 4294901760
    %v4831 = vsub.f32 %v4644, %v4830
    %v4832 = vand.u32 %v4831, 4294901760
    %v4833 = vsub.f32 %v4831, %v4832
    %v4834 = vand.u32 %v4833, 4294901760
    %4835 = vmatpush.msra.mxu0 %v4834
    %v4836 = vand.u32 %v4642, 4294901760
    %v4837 = vsub.f32 %v4642, %v4836
    %v4838 = vand.u32 %v4837, 4294901760
    %v4839 = vsub.f32 %v4837, %v4838
    %v4840 = vand.u32 %v4839, 4294901760
    %4841 = vmatpush.msra.mxu0 %v4840
    %v4842 = vand.u32 %v4640, 4294901760
    %v4843 = vsub.f32 %v4640, %v4842
    %v4844 = vand.u32 %v4843, 4294901760
    %v4845 = vsub.f32 %v4843, %v4844
    %v4846 = vand.u32 %v4845, 4294901760
    %4847 = vmatpush.msra.mxu0 %v4846
    %v4848 = vand.u32 %v4638, 4294901760
    %v4849 = vsub.f32 %v4638, %v4848
    %v4850 = vand.u32 %v4849, 4294901760
    %v4851 = vsub.f32 %v4849, %v4850
    %v4852 = vand.u32 %v4851, 4294901760
    %4853 = vmatpush.msra.mxu0 %v4852
    %v4854 = vand.u32 %v4636, 4294901760
    %v4855 = vsub.f32 %v4636, %v4854
    %v4856 = vand.u32 %v4855, 4294901760
    %v4857 = vsub.f32 %v4855, %v4856
    %v4858 = vand.u32 %v4857, 4294901760
    %4859 = vmatpush.msra.mxu0 %v4858
    %v4860 = vand.u32 %v4634, 4294901760
    %v4861 = vsub.f32 %v4634, %v4860
    %v4862 = vand.u32 %v4861, 4294901760
    %v4863 = vsub.f32 %v4861, %v4862
    %v4864 = vand.u32 %v4863, 4294901760
    %4865 = vmatpush.msra.mxu0 %v4864
    %v4866 = vand.u32 %v4632, 4294901760
    %v4867 = vsub.f32 %v4632, %v4866
    %v4868 = vand.u32 %v4867, 4294901760
    %v4869 = vsub.f32 %v4867, %v4868
    %v4870 = vand.u32 %v4869, 4294901760
    %4871 = vmatpush.msra.mxu0 %v4870
    %v4872 = vand.u32 %v4630, 4294901760
    %v4873 = vsub.f32 %v4630, %v4872
    %v4874 = vand.u32 %v4873, 4294901760
    %v4875 = vsub.f32 %v4873, %v4874
    %v4876 = vand.u32 %v4875, 4294901760
    %4877 = vmatpush.msra.mxu0 %v4876
    %v4878 = vand.u32 %v4628, 4294901760
    %v4879 = vsub.f32 %v4628, %v4878
    %v4880 = vand.u32 %v4879, 4294901760
    %v4881 = vsub.f32 %v4879, %v4880
    %v4882 = vand.u32 %v4881, 4294901760
    %4883 = vmatpush.msra.mxu0 %v4882
    %v4884 = vand.u32 %v4626, 4294901760
    %v4885 = vsub.f32 %v4626, %v4884
    %v4886 = vand.u32 %v4885, 4294901760
    %v4887 = vsub.f32 %v4885, %v4886
    %v4888 = vand.u32 %v4887, 4294901760
    %4889 = vmatpush.msra.mxu0 %v4888
    %v4890 = vand.u32 %v4624, 4294901760
    %v4891 = vsub.f32 %v4624, %v4890
    %v4892 = vand.u32 %v4891, 4294901760
    %v4893 = vsub.f32 %v4891, %v4892
    %v4894 = vand.u32 %v4893, 4294901760
    %4895 = vmatpush.msra.mxu0 %v4894
    %v4896 = vand.u32 %v4622, 4294901760
    %v4897 = vsub.f32 %v4622, %v4896
    %v4898 = vand.u32 %v4897, 4294901760
    %v4899 = vsub.f32 %v4897, %v4898
    %v4900 = vand.u32 %v4899, 4294901760
    %4901 = vmatpush.msra.mxu0 %v4900
    %v4902 = vand.u32 %v4620, 4294901760
    %v4903 = vsub.f32 %v4620, %v4902
    %v4904 = vand.u32 %v4903, 4294901760
    %v4905 = vsub.f32 %v4903, %v4904
    %v4906 = vand.u32 %v4905, 4294901760
    %4907 = vmatpush.msra.mxu0 %v4906
    %v4908 = vand.u32 %v4618, 4294901760
    %v4909 = vsub.f32 %v4618, %v4908
    %v4910 = vand.u32 %v4909, 4294901760
    %v4911 = vsub.f32 %v4909, %v4910
    %v4912 = vand.u32 %v4911, 4294901760
    %4913 = vmatpush.msra.mxu0 %v4912
    %v4914 = vand.u32 %v4616, 4294901760
    %v4915 = vsub.f32 %v4616, %v4914
    %v4916 = vand.u32 %v4915, 4294901760
    %v4917 = vsub.f32 %v4915, %v4916
    %v4918 = vand.u32 %v4917, 4294901760
    %4919 = vmatpush.msra.mxu0 %v4918
    %v4920 = vand.u32 %v4552, 4294901760
    %4921 = vmatmul.f32.gmra.mxu0 %v4920
    %v4922 = vpop.f32.mrf.mxu0
    %v4923 = vadd.f32 %v4702, %v4922
    %v4924 = vand.u32 %v4554, 4294901760
    %4925 = vmatmul.f32.gmra.mxu0 %v4924
    %v4926 = vpop.f32.mrf.mxu0
    %v4927 = vadd.f32 %v4710, %v4926
    %v4928 = vand.u32 %v4556, 4294901760
    %4929 = vmatmul.f32.gmra.mxu0 %v4928
    %v4930 = vpop.f32.mrf.mxu0
    %v4931 = vadd.f32 %v4718, %v4930
    %v4932 = vand.u32 %v4558, 4294901760
    %4933 = vmatmul.f32.gmra.mxu0 %v4932
    %v4934 = vpop.f32.mrf.mxu0
    %v4935 = vadd.f32 %v4726, %v4934
    %v4936 = vand.u32 %v4560, 4294901760
    %4937 = vmatmul.f32.gmra.mxu0 %v4936
    %v4938 = vpop.f32.mrf.mxu0
    %v4939 = vadd.f32 %v4734, %v4938
    %v4940 = vand.u32 %v4562, 4294901760
    %4941 = vmatmul.f32.gmra.mxu0 %v4940
    %v4942 = vpop.f32.mrf.mxu0
    %v4943 = vadd.f32 %v4742, %v4942
    %v4944 = vand.u32 %v4564, 4294901760
    %4945 = vmatmul.f32.gmra.mxu0 %v4944
    %v4946 = vpop.f32.mrf.mxu0
    %v4947 = vadd.f32 %v4750, %v4946
    %v4948 = vand.u32 %v4566, 4294901760
    %4949 = vmatmul.f32.gmra.mxu0 %v4948
    %v4950 = vpop.f32.mrf.mxu0
    %v4951 = vadd.f32 %v4758, %v4950
    %v4952 = vand.u32 %v4568, 4294901760
    %4953 = vmatmul.f32.gmra.mxu0 %v4952
    %v4954 = vpop.f32.mrf.mxu0
    %v4955 = vadd.f32 %v4766, %v4954
    %v4956 = vand.u32 %v4570, 4294901760
    %4957 = vmatmul.f32.gmra.mxu0 %v4956
    %v4958 = vpop.f32.mrf.mxu0
    %v4959 = vadd.f32 %v4774, %v4958
    %v4960 = vand.u32 %v4572, 4294901760
    %4961 = vmatmul.f32.gmra.mxu0 %v4960
    %v4962 = vpop.f32.mrf.mxu0
    %v4963 = vadd.f32 %v4782, %v4962
    %v4964 = vand.u32 %v4574, 4294901760
    %4965 = vmatmul.f32.gmra.mxu0 %v4964
    %v4966 = vpop.f32.mrf.mxu0
    %v4967 = vadd.f32 %v4790, %v4966
    %v4968 = vand.u32 %v4576, 4294901760
    %4969 = vmatmul.f32.gmra.mxu0 %v4968
    %v4970 = vpop.f32.mrf.mxu0
    %v4971 = vadd.f32 %v4798, %v4970
    %v4972 = vand.u32 %v4578, 4294901760
    %4973 = vmatmul.f32.gmra.mxu0 %v4972
    %v4974 = vpop.f32.mrf.mxu0
    %v4975 = vadd.f32 %v4806, %v4974
    %v4976 = vand.u32 %v4580, 4294901760
    %4977 = vmatmul.f32.gmra.mxu0 %v4976
    %v4978 = vpop.f32.mrf.mxu0
    %v4979 = vadd.f32 %v4814, %v4978
    %v4980 = vand.u32 %v4582, 4294901760
    %4981 = vmatmul.f32.gmra.mxu0 %v4980
    %v4982 = vpop.f32.mrf.mxu0
    %v4983 = vadd.f32 %v4822, %v4982
    %4984 = vdwg.mxu0
    %v4985 = vand.u32 %v4646, 4294901760
    %v4986 = vsub.f32 %v4646, %v4985
    %4987 = vmatpush.msra.mxu0 %v4986
    %v4988 = vand.u32 %v4644, 4294901760
    %v4989 = vsub.f32 %v4644, %v4988
    %4990 = vmatpush.msra.mxu0 %v4989
    %v4991 = vand.u32 %v4642, 4294901760
    %v4992 = vsub.f32 %v4642, %v4991
    %4993 = vmatpush.msra.mxu0 %v4992
    %v4994 = vand.u32 %v4640, 4294901760
    %v4995 = vsub.f32 %v4640, %v4994
    %4996 = vmatpush.msra.mxu0 %v4995
    %v4997 = vand.u32 %v4638, 4294901760
    %v4998 = vsub.f32 %v4638, %v4997
    %4999 = vmatpush.msra.mxu0 %v4998
    %v5000 = vand.u32 %v4636, 4294901760
    %v5001 = vsub.f32 %v4636, %v5000
    %5002 = vmatpush.msra.mxu0 %v5001
    %v5003 = vand.u32 %v4634, 4294901760
    %v5004 = vsub.f32 %v4634, %v5003
    %5005 = vmatpush.msra.mxu0 %v5004
    %v5006 = vand.u32 %v4632, 4294901760
    %v5007 = vsub.f32 %v4632, %v5006
    %5008 = vmatpush.msra.mxu0 %v5007
    %v5009 = vand.u32 %v4630, 4294901760
    %v5010 = vsub.f32 %v4630, %v5009
    %5011 = vmatpush.msra.mxu0 %v5010
    %v5012 = vand.u32 %v4628, 4294901760
    %v5013 = vsub.f32 %v4628, %v5012
    %5014 = vmatpush.msra.mxu0 %v5013
    %v5015 = vand.u32 %v4626, 4294901760
    %v5016 = vsub.f32 %v4626, %v5015
    %5017 = vmatpush.msra.mxu0 %v5016
    %v5018 = vand.u32 %v4624, 4294901760
    %v5019 = vsub.f32 %v4624, %v5018
    %5020 = vmatpush.msra.mxu0 %v5019
    %v5021 = vand.u32 %v4622, 4294901760
    %v5022 = vsub.f32 %v4622, %v5021
    %5023 = vmatpush.msra.mxu0 %v5022
    %v5024 = vand.u32 %v4620, 4294901760
    %v5025 = vsub.f32 %v4620, %v5024
    %5026 = vmatpush.msra.mxu0 %v5025
    %v5027 = vand.u32 %v4618, 4294901760
    %v5028 = vsub.f32 %v4618, %v5027
    %5029 = vmatpush.msra.mxu0 %v5028
    %v5030 = vand.u32 %v4616, 4294901760
    %v5031 = vsub.f32 %v4616, %v5030
    %5032 = vmatpush.msra.mxu0 %v5031
    %v5033 = vand.u32 %v4552, 4294901760
    %v5034 = vsub.f32 %v4552, %v5033
    %5035 = vmatmul.f32.gmra.mxu0 %v5034
    %v5036 = vpop.f32.mrf.mxu0
    %v5037 = vadd.f32 %v4923, %v5036
    %v5038 = vand.u32 %v4554, 4294901760
    %v5039 = vsub.f32 %v4554, %v5038
    %5040 = vmatmul.f32.gmra.mxu0 %v5039
    %v5041 = vpop.f32.mrf.mxu0
    %v5042 = vadd.f32 %v4927, %v5041
    %v5043 = vand.u32 %v4556, 4294901760
    %v5044 = vsub.f32 %v4556, %v5043
    %5045 = vmatmul.f32.gmra.mxu0 %v5044
    %v5046 = vpop.f32.mrf.mxu0
    %v5047 = vadd.f32 %v4931, %v5046
    %v5048 = vand.u32 %v4558, 4294901760
    %v5049 = vsub.f32 %v4558, %v5048
    %5050 = vmatmul.f32.gmra.mxu0 %v5049
    %v5051 = vpop.f32.mrf.mxu0
    %v5052 = vadd.f32 %v4935, %v5051
    %v5053 = vand.u32 %v4560, 4294901760
    %v5054 = vsub.f32 %v4560, %v5053
    %5055 = vmatmul.f32.gmra.mxu0 %v5054
    %v5056 = vpop.f32.mrf.mxu0
    %v5057 = vadd.f32 %v4939, %v5056
    %v5058 = vand.u32 %v4562, 4294901760
    %v5059 = vsub.f32 %v4562, %v5058
    %5060 = vmatmul.f32.gmra.mxu0 %v5059
    %v5061 = vpop.f32.mrf.mxu0
    %v5062 = vadd.f32 %v4943, %v5061
    %v5063 = vand.u32 %v4564, 4294901760
    %v5064 = vsub.f32 %v4564, %v5063
    %5065 = vmatmul.f32.gmra.mxu0 %v5064
    %v5066 = vpop.f32.mrf.mxu0
    %v5067 = vadd.f32 %v4947, %v5066
    %v5068 = vand.u32 %v4566, 4294901760
    %v5069 = vsub.f32 %v4566, %v5068
    %5070 = vmatmul.f32.gmra.mxu0 %v5069
    %v5071 = vpop.f32.mrf.mxu0
    %v5072 = vadd.f32 %v4951, %v5071
    %v5073 = vand.u32 %v4568, 4294901760
    %v5074 = vsub.f32 %v4568, %v5073
    %5075 = vmatmul.f32.gmra.mxu0 %v5074
    %v5076 = vpop.f32.mrf.mxu0
    %v5077 = vadd.f32 %v4955, %v5076
    %v5078 = vand.u32 %v4570, 4294901760
    %v5079 = vsub.f32 %v4570, %v5078
    %5080 = vmatmul.f32.gmra.mxu0 %v5079
    %v5081 = vpop.f32.mrf.mxu0
    %v5082 = vadd.f32 %v4959, %v5081
    %v5083 = vand.u32 %v4572, 4294901760
    %v5084 = vsub.f32 %v4572, %v5083
    %5085 = vmatmul.f32.gmra.mxu0 %v5084
    %v5086 = vpop.f32.mrf.mxu0
    %v5087 = vadd.f32 %v4963, %v5086
    %v5088 = vand.u32 %v4574, 4294901760
    %v5089 = vsub.f32 %v4574, %v5088
    %5090 = vmatmul.f32.gmra.mxu0 %v5089
    %v5091 = vpop.f32.mrf.mxu0
    %v5092 = vadd.f32 %v4967, %v5091
    %v5093 = vand.u32 %v4576, 4294901760
    %v5094 = vsub.f32 %v4576, %v5093
    %5095 = vmatmul.f32.gmra.mxu0 %v5094
    %v5096 = vpop.f32.mrf.mxu0
    %v5097 = vadd.f32 %v4971, %v5096
    %v5098 = vand.u32 %v4578, 4294901760
    %v5099 = vsub.f32 %v4578, %v5098
    %5100 = vmatmul.f32.gmra.mxu0 %v5099
    %v5101 = vpop.f32.mrf.mxu0
    %v5102 = vadd.f32 %v4975, %v5101
    %v5103 = vand.u32 %v4580, 4294901760
    %v5104 = vsub.f32 %v4580, %v5103
    %5105 = vmatmul.f32.gmra.mxu0 %v5104
    %v5106 = vpop.f32.mrf.mxu0
    %v5107 = vadd.f32 %v4979, %v5106
    %v5108 = vand.u32 %v4582, 4294901760
    %v5109 = vsub.f32 %v4582, %v5108
    %5110 = vmatmul.f32.gmra.mxu0 %v5109
    %v5111 = vpop.f32.mrf.mxu0
    %v5112 = vadd.f32 %v4983, %v5111
    %5113 = vdwg.mxu0
    %v5114 = vand.u32 %v4646, 4294901760
    %5115 = vmatpush.msra.mxu0 %v5114
    %v5116 = vand.u32 %v4644, 4294901760
    %5117 = vmatpush.msra.mxu0 %v5116
    %v5118 = vand.u32 %v4642, 4294901760
    %5119 = vmatpush.msra.mxu0 %v5118
    %v5120 = vand.u32 %v4640, 4294901760
    %5121 = vmatpush.msra.mxu0 %v5120
    %v5122 = vand.u32 %v4638, 4294901760
    %5123 = vmatpush.msra.mxu0 %v5122
    %v5124 = vand.u32 %v4636, 4294901760
    %5125 = vmatpush.msra.mxu0 %v5124
    %v5126 = vand.u32 %v4634, 4294901760
    %5127 = vmatpush.msra.mxu0 %v5126
    %v5128 = vand.u32 %v4632, 4294901760
    %5129 = vmatpush.msra.mxu0 %v5128
    %v5130 = vand.u32 %v4630, 4294901760
    %5131 = vmatpush.msra.mxu0 %v5130
    %v5132 = vand.u32 %v4628, 4294901760
    %5133 = vmatpush.msra.mxu0 %v5132
    %v5134 = vand.u32 %v4626, 4294901760
    %5135 = vmatpush.msra.mxu0 %v5134
    %v5136 = vand.u32 %v4624, 4294901760
    %5137 = vmatpush.msra.mxu0 %v5136
    %v5138 = vand.u32 %v4622, 4294901760
    %5139 = vmatpush.msra.mxu0 %v5138
    %v5140 = vand.u32 %v4620, 4294901760
    %5141 = vmatpush.msra.mxu0 %v5140
    %v5142 = vand.u32 %v4618, 4294901760
    %5143 = vmatpush.msra.mxu0 %v5142
    %v5144 = vand.u32 %v4616, 4294901760
    %5145 = vmatpush.msra.mxu0 %v5144
    %v5146 = vand.u32 %v4552, 4294901760
    %v5147 = vsub.f32 %v4552, %v5146
    %v5148 = vand.u32 %v5147, 4294901760
    %5149 = vmatmul.f32.gmra.mxu0 %v5148
    %v5150 = vpop.f32.mrf.mxu0
    %v5151 = vadd.f32 %v5037, %v5150
    %v5152 = vand.u32 %v4554, 4294901760
    %v5153 = vsub.f32 %v4554, %v5152
    %v5154 = vand.u32 %v5153, 4294901760
    %5155 = vmatmul.f32.gmra.mxu0 %v5154
    %v5156 = vpop.f32.mrf.mxu0
    %v5157 = vadd.f32 %v5042, %v5156
    %v5158 = vand.u32 %v4556, 4294901760
    %v5159 = vsub.f32 %v4556, %v5158
    %v5160 = vand.u32 %v5159, 4294901760
    %5161 = vmatmul.f32.gmra.mxu0 %v5160
    %v5162 = vpop.f32.mrf.mxu0
    %v5163 = vadd.f32 %v5047, %v5162
    %v5164 = vand.u32 %v4558, 4294901760
    %v5165 = vsub.f32 %v4558, %v5164
    %v5166 = vand.u32 %v5165, 4294901760
    %5167 = vmatmul.f32.gmra.mxu0 %v5166
    %v5168 = vpop.f32.mrf.mxu0
    %v5169 = vadd.f32 %v5052, %v5168
    %v5170 = vand.u32 %v4560, 4294901760
    %v5171 = vsub.f32 %v4560, %v5170
    %v5172 = vand.u32 %v5171, 4294901760
    %5173 = vmatmul.f32.gmra.mxu0 %v5172
    %v5174 = vpop.f32.mrf.mxu0
    %v5175 = vadd.f32 %v5057, %v5174
    %v5176 = vand.u32 %v4562, 4294901760
    %v5177 = vsub.f32 %v4562, %v5176
    %v5178 = vand.u32 %v5177, 4294901760
    %5179 = vmatmul.f32.gmra.mxu0 %v5178
    %v5180 = vpop.f32.mrf.mxu0
    %v5181 = vadd.f32 %v5062, %v5180
    %v5182 = vand.u32 %v4564, 4294901760
    %v5183 = vsub.f32 %v4564, %v5182
    %v5184 = vand.u32 %v5183, 4294901760
    %5185 = vmatmul.f32.gmra.mxu0 %v5184
    %v5186 = vpop.f32.mrf.mxu0
    %v5187 = vadd.f32 %v5067, %v5186
    %v5188 = vand.u32 %v4566, 4294901760
    %v5189 = vsub.f32 %v4566, %v5188
    %v5190 = vand.u32 %v5189, 4294901760
    %5191 = vmatmul.f32.gmra.mxu0 %v5190
    %v5192 = vpop.f32.mrf.mxu0
    %v5193 = vadd.f32 %v5072, %v5192
    %v5194 = vand.u32 %v4568, 4294901760
    %v5195 = vsub.f32 %v4568, %v5194
    %v5196 = vand.u32 %v5195, 4294901760
    %5197 = vmatmul.f32.gmra.mxu0 %v5196
    %v5198 = vpop.f32.mrf.mxu0
    %v5199 = vadd.f32 %v5077, %v5198
    %v5200 = vand.u32 %v4570, 4294901760
    %v5201 = vsub.f32 %v4570, %v5200
    %v5202 = vand.u32 %v5201, 4294901760
    %5203 = vmatmul.f32.gmra.mxu0 %v5202
    %v5204 = vpop.f32.mrf.mxu0
    %v5205 = vadd.f32 %v5082, %v5204
    %v5206 = vand.u32 %v4572, 4294901760
    %v5207 = vsub.f32 %v4572, %v5206
    %v5208 = vand.u32 %v5207, 4294901760
    %5209 = vmatmul.f32.gmra.mxu0 %v5208
    %v5210 = vpop.f32.mrf.mxu0
    %v5211 = vadd.f32 %v5087, %v5210
    %v5212 = vand.u32 %v4574, 4294901760
    %v5213 = vsub.f32 %v4574, %v5212
    %v5214 = vand.u32 %v5213, 4294901760
    %5215 = vmatmul.f32.gmra.mxu0 %v5214
    %v5216 = vpop.f32.mrf.mxu0
    %v5217 = vadd.f32 %v5092, %v5216
    %v5218 = vand.u32 %v4576, 4294901760
    %v5219 = vsub.f32 %v4576, %v5218
    %v5220 = vand.u32 %v5219, 4294901760
    %5221 = vmatmul.f32.gmra.mxu0 %v5220
    %v5222 = vpop.f32.mrf.mxu0
    %v5223 = vadd.f32 %v5097, %v5222
    %v5224 = vand.u32 %v4578, 4294901760
    %v5225 = vsub.f32 %v4578, %v5224
    %v5226 = vand.u32 %v5225, 4294901760
    %5227 = vmatmul.f32.gmra.mxu0 %v5226
    %v5228 = vpop.f32.mrf.mxu0
    %v5229 = vadd.f32 %v5102, %v5228
    %v5230 = vand.u32 %v4580, 4294901760
    %v5231 = vsub.f32 %v4580, %v5230
    %v5232 = vand.u32 %v5231, 4294901760
    %5233 = vmatmul.f32.gmra.mxu0 %v5232
    %v5234 = vpop.f32.mrf.mxu0
    %v5235 = vadd.f32 %v5107, %v5234
    %v5236 = vand.u32 %v4582, 4294901760
    %v5237 = vsub.f32 %v4582, %v5236
    %v5238 = vand.u32 %v5237, 4294901760
    %5239 = vmatmul.f32.gmra.mxu0 %v5238
    %v5240 = vpop.f32.mrf.mxu0
    %v5241 = vadd.f32 %v5112, %v5240
    %5242 = vdwg.mxu0
    %v5243 = vand.u32 %v4646, 4294901760
    %v5244 = vsub.f32 %v4646, %v5243
    %v5245 = vand.u32 %v5244, 4294901760
    %5246 = vmatpush.msra.mxu0 %v5245
    %v5247 = vand.u32 %v4644, 4294901760
    %v5248 = vsub.f32 %v4644, %v5247
    %v5249 = vand.u32 %v5248, 4294901760
    %5250 = vmatpush.msra.mxu0 %v5249
    %v5251 = vand.u32 %v4642, 4294901760
    %v5252 = vsub.f32 %v4642, %v5251
    %v5253 = vand.u32 %v5252, 4294901760
    %5254 = vmatpush.msra.mxu0 %v5253
    %v5255 = vand.u32 %v4640, 4294901760
    %v5256 = vsub.f32 %v4640, %v5255
    %v5257 = vand.u32 %v5256, 4294901760
    %5258 = vmatpush.msra.mxu0 %v5257
    %v5259 = vand.u32 %v4638, 4294901760
    %v5260 = vsub.f32 %v4638, %v5259
    %v5261 = vand.u32 %v5260, 4294901760
    %5262 = vmatpush.msra.mxu0 %v5261
    %v5263 = vand.u32 %v4636, 4294901760
    %v5264 = vsub.f32 %v4636, %v5263
    %v5265 = vand.u32 %v5264, 4294901760
    %5266 = vmatpush.msra.mxu0 %v5265
    %v5267 = vand.u32 %v4634, 4294901760
    %v5268 = vsub.f32 %v4634, %v5267
    %v5269 = vand.u32 %v5268, 4294901760
    %5270 = vmatpush.msra.mxu0 %v5269
    %v5271 = vand.u32 %v4632, 4294901760
    %v5272 = vsub.f32 %v4632, %v5271
    %v5273 = vand.u32 %v5272, 4294901760
    %5274 = vmatpush.msra.mxu0 %v5273
    %v5275 = vand.u32 %v4630, 4294901760
    %v5276 = vsub.f32 %v4630, %v5275
    %v5277 = vand.u32 %v5276, 4294901760
    %5278 = vmatpush.msra.mxu0 %v5277
    %v5279 = vand.u32 %v4628, 4294901760
    %v5280 = vsub.f32 %v4628, %v5279
    %v5281 = vand.u32 %v5280, 4294901760
    %5282 = vmatpush.msra.mxu0 %v5281
    %v5283 = vand.u32 %v4626, 4294901760
    %v5284 = vsub.f32 %v4626, %v5283
    %v5285 = vand.u32 %v5284, 4294901760
    %5286 = vmatpush.msra.mxu0 %v5285
    %v5287 = vand.u32 %v4624, 4294901760
    %v5288 = vsub.f32 %v4624, %v5287
    %v5289 = vand.u32 %v5288, 4294901760
    %5290 = vmatpush.msra.mxu0 %v5289
    %v5291 = vand.u32 %v4622, 4294901760
    %v5292 = vsub.f32 %v4622, %v5291
    %v5293 = vand.u32 %v5292, 4294901760
    %5294 = vmatpush.msra.mxu0 %v5293
    %v5295 = vand.u32 %v4620, 4294901760
    %v5296 = vsub.f32 %v4620, %v5295
    %v5297 = vand.u32 %v5296, 4294901760
    %5298 = vmatpush.msra.mxu0 %v5297
    %v5299 = vand.u32 %v4618, 4294901760
    %v5300 = vsub.f32 %v4618, %v5299
    %v5301 = vand.u32 %v5300, 4294901760
    %5302 = vmatpush.msra.mxu0 %v5301
    %v5303 = vand.u32 %v4616, 4294901760
    %v5304 = vsub.f32 %v4616, %v5303
    %v5305 = vand.u32 %v5304, 4294901760
    %5306 = vmatpush.msra.mxu0 %v5305
    %v5307 = vand.u32 %v4552, 4294901760
    %5308 = vmatmul.f32.gmra.mxu0 %v5307
    %v5309 = vpop.f32.mrf.mxu0
    %v5310 = vadd.f32 %v5151, %v5309
    %v5311 = vand.u32 %v4554, 4294901760
    %5312 = vmatmul.f32.gmra.mxu0 %v5311
    %v5313 = vpop.f32.mrf.mxu0
    %v5314 = vadd.f32 %v5157, %v5313
    %v5315 = vand.u32 %v4556, 4294901760
    %5316 = vmatmul.f32.gmra.mxu0 %v5315
    %v5317 = vpop.f32.mrf.mxu0
    %v5318 = vadd.f32 %v5163, %v5317
    %v5319 = vand.u32 %v4558, 4294901760
    %5320 = vmatmul.f32.gmra.mxu0 %v5319
    %v5321 = vpop.f32.mrf.mxu0
    %v5322 = vadd.f32 %v5169, %v5321
    %v5323 = vand.u32 %v4560, 4294901760
    %5324 = vmatmul.f32.gmra.mxu0 %v5323
    %v5325 = vpop.f32.mrf.mxu0
    %v5326 = vadd.f32 %v5175, %v5325
    %v5327 = vand.u32 %v4562, 4294901760
    %5328 = vmatmul.f32.gmra.mxu0 %v5327
    %v5329 = vpop.f32.mrf.mxu0
    %v5330 = vadd.f32 %v5181, %v5329
    %v5331 = vand.u32 %v4564, 4294901760
    %5332 = vmatmul.f32.gmra.mxu0 %v5331
    %v5333 = vpop.f32.mrf.mxu0
    %v5334 = vadd.f32 %v5187, %v5333
    %v5335 = vand.u32 %v4566, 4294901760
    %5336 = vmatmul.f32.gmra.mxu0 %v5335
    %v5337 = vpop.f32.mrf.mxu0
    %v5338 = vadd.f32 %v5193, %v5337
    %v5339 = vand.u32 %v4568, 4294901760
    %5340 = vmatmul.f32.gmra.mxu0 %v5339
    %v5341 = vpop.f32.mrf.mxu0
    %v5342 = vadd.f32 %v5199, %v5341
    %v5343 = vand.u32 %v4570, 4294901760
    %5344 = vmatmul.f32.gmra.mxu0 %v5343
    %v5345 = vpop.f32.mrf.mxu0
    %v5346 = vadd.f32 %v5205, %v5345
    %v5347 = vand.u32 %v4572, 4294901760
    %5348 = vmatmul.f32.gmra.mxu0 %v5347
    %v5349 = vpop.f32.mrf.mxu0
    %v5350 = vadd.f32 %v5211, %v5349
    %v5351 = vand.u32 %v4574, 4294901760
    %5352 = vmatmul.f32.gmra.mxu0 %v5351
    %v5353 = vpop.f32.mrf.mxu0
    %v5354 = vadd.f32 %v5217, %v5353
    %v5355 = vand.u32 %v4576, 4294901760
    %5356 = vmatmul.f32.gmra.mxu0 %v5355
    %v5357 = vpop.f32.mrf.mxu0
    %v5358 = vadd.f32 %v5223, %v5357
    %v5359 = vand.u32 %v4578, 4294901760
    %5360 = vmatmul.f32.gmra.mxu0 %v5359
    %v5361 = vpop.f32.mrf.mxu0
    %v5362 = vadd.f32 %v5229, %v5361
    %v5363 = vand.u32 %v4580, 4294901760
    %5364 = vmatmul.f32.gmra.mxu0 %v5363
    %v5365 = vpop.f32.mrf.mxu0
    %v5366 = vadd.f32 %v5235, %v5365
    %v5367 = vand.u32 %v4582, 4294901760
    %5368 = vmatmul.f32.gmra.mxu0 %v5367
    %v5369 = vpop.f32.mrf.mxu0
    %v5370 = vadd.f32 %v5241, %v5369
    %5371 = vdwg.mxu0
    %v5372 = vand.u32 %v4646, 4294901760
    %5373 = vmatpush.msra.mxu0 %v5372
    %v5374 = vand.u32 %v4644, 4294901760
    %5375 = vmatpush.msra.mxu0 %v5374
    %v5376 = vand.u32 %v4642, 4294901760
    %5377 = vmatpush.msra.mxu0 %v5376
    %v5378 = vand.u32 %v4640, 4294901760
    %5379 = vmatpush.msra.mxu0 %v5378
    %v5380 = vand.u32 %v4638, 4294901760
    %5381 = vmatpush.msra.mxu0 %v5380
    %v5382 = vand.u32 %v4636, 4294901760
    %5383 = vmatpush.msra.mxu0 %v5382
    %v5384 = vand.u32 %v4634, 4294901760
    %5385 = vmatpush.msra.mxu0 %v5384
    %v5386 = vand.u32 %v4632, 4294901760
    %5387 = vmatpush.msra.mxu0 %v5386
    %v5388 = vand.u32 %v4630, 4294901760
    %5389 = vmatpush.msra.mxu0 %v5388
    %v5390 = vand.u32 %v4628, 4294901760
    %5391 = vmatpush.msra.mxu0 %v5390
    %v5392 = vand.u32 %v4626, 4294901760
    %5393 = vmatpush.msra.mxu0 %v5392
    %v5394 = vand.u32 %v4624, 4294901760
    %5395 = vmatpush.msra.mxu0 %v5394
    %v5396 = vand.u32 %v4622, 4294901760
    %5397 = vmatpush.msra.mxu0 %v5396
    %v5398 = vand.u32 %v4620, 4294901760
    %5399 = vmatpush.msra.mxu0 %v5398
    %v5400 = vand.u32 %v4618, 4294901760
    %5401 = vmatpush.msra.mxu0 %v5400
    %v5402 = vand.u32 %v4616, 4294901760
    %5403 = vmatpush.msra.mxu0 %v5402
    %v5404 = vand.u32 %v4552, 4294901760
    %5405 = vmatmul.f32.gmra.mxu0 %v5404
    %v5406 = vpop.f32.mrf.mxu0
    %v5407 = vadd.f32 %v5310, %v5406
    %v5408 = vand.u32 %v4554, 4294901760
    %5409 = vmatmul.f32.gmra.mxu0 %v5408
    %v5410 = vpop.f32.mrf.mxu0
    %v5411 = vadd.f32 %v5314, %v5410
    %v5412 = vand.u32 %v4556, 4294901760
    %5413 = vmatmul.f32.gmra.mxu0 %v5412
    %v5414 = vpop.f32.mrf.mxu0
    %v5415 = vadd.f32 %v5318, %v5414
    %v5416 = vand.u32 %v4558, 4294901760
    %5417 = vmatmul.f32.gmra.mxu0 %v5416
    %v5418 = vpop.f32.mrf.mxu0
    %v5419 = vadd.f32 %v5322, %v5418
    %v5420 = vand.u32 %v4560, 4294901760
    %5421 = vmatmul.f32.gmra.mxu0 %v5420
    %v5422 = vpop.f32.mrf.mxu0
    %v5423 = vadd.f32 %v5326, %v5422
    %v5424 = vand.u32 %v4562, 4294901760
    %5425 = vmatmul.f32.gmra.mxu0 %v5424
    %v5426 = vpop.f32.mrf.mxu0
    %v5427 = vadd.f32 %v5330, %v5426
    %v5428 = vand.u32 %v4564, 4294901760
    %5429 = vmatmul.f32.gmra.mxu0 %v5428
    %v5430 = vpop.f32.mrf.mxu0
    %v5431 = vadd.f32 %v5334, %v5430
    %v5432 = vand.u32 %v4566, 4294901760
    %5433 = vmatmul.f32.gmra.mxu0 %v5432
    %v5434 = vpop.f32.mrf.mxu0
    %v5435 = vadd.f32 %v5338, %v5434
    %v5436 = vand.u32 %v4568, 4294901760
    %5437 = vmatmul.f32.gmra.mxu0 %v5436
    %v5438 = vpop.f32.mrf.mxu0
    %v5439 = vadd.f32 %v5342, %v5438
    %v5440 = vand.u32 %v4570, 4294901760
    %5441 = vmatmul.f32.gmra.mxu0 %v5440
    %v5442 = vpop.f32.mrf.mxu0
    %v5443 = vadd.f32 %v5346, %v5442
    %v5444 = vand.u32 %v4572, 4294901760
    %5445 = vmatmul.f32.gmra.mxu0 %v5444
    %v5446 = vpop.f32.mrf.mxu0
    %v5447 = vadd.f32 %v5350, %v5446
    %v5448 = vand.u32 %v4574, 4294901760
    %5449 = vmatmul.f32.gmra.mxu0 %v5448
    %v5450 = vpop.f32.mrf.mxu0
    %v5451 = vadd.f32 %v5354, %v5450
    %v5452 = vand.u32 %v4576, 4294901760
    %5453 = vmatmul.f32.gmra.mxu0 %v5452
    %v5454 = vpop.f32.mrf.mxu0
    %v5455 = vadd.f32 %v5358, %v5454
    %v5456 = vand.u32 %v4578, 4294901760
    %5457 = vmatmul.f32.gmra.mxu0 %v5456
    %v5458 = vpop.f32.mrf.mxu0
    %v5459 = vadd.f32 %v5362, %v5458
    %v5460 = vand.u32 %v4580, 4294901760
    %5461 = vmatmul.f32.gmra.mxu0 %v5460
    %v5462 = vpop.f32.mrf.mxu0
    %v5463 = vadd.f32 %v5366, %v5462
    %v5464 = vand.u32 %v4582, 4294901760
    %5465 = vmatmul.f32.gmra.mxu0 %v5464
    %v5466 = vpop.f32.mrf.mxu0
    %v5467 = vadd.f32 %v5370, %v5466
    %5468 = vdwg.mxu0
    %v5469 = vrcp.pop %v4584
    %v5470 = vmul.f32 %v4584, %v5469
    %v5471 = vsub.f32 1.0, %v5470
    %v5472 = vmul.f32 %v5469, %v5471
    %v5473 = vadd.f32 %v5469, %v5472
    %vm5474 = vweird.f32 %v4584
    %vm5475 = vweird.f32 %v5469
    %vm5476 = vmor %vm5474, %vm5475
    %v5477 = vsel %vm5476, %v5469, %v5473
    %v5478 = vand.u32 2147483647, %v4584
    %vm5479 = vcmp.eq.f32.partialorder %v5478, 8.507059e+37
    %v5480 = vand.u32 %v4584, 2147483648
    %v5481 = vor.u32 1.1754944e-38, %v5480
    %v5482 = vsel %vm5479, %v5481, %v5477
    %v5483 = vmul.f32 %v5407, %v5482
    %v5484 = vrcp.pop %v4586
    %v5485 = vmul.f32 %v4586, %v5484
    %v5486 = vsub.f32 1.0, %v5485
    %v5487 = vmul.f32 %v5484, %v5486
    %v5488 = vadd.f32 %v5484, %v5487
    %vm5489 = vweird.f32 %v4586
    %vm5490 = vweird.f32 %v5484
    %vm5491 = vmor %vm5489, %vm5490
    %v5492 = vsel %vm5491, %v5484, %v5488
    %v5493 = vand.u32 2147483647, %v4586
    %vm5494 = vcmp.eq.f32.partialorder %v5493, 8.507059e+37
    %v5495 = vand.u32 %v4586, 2147483648
    %v5496 = vor.u32 1.1754944e-38, %v5495
    %v5497 = vsel %vm5494, %v5496, %v5492
    %v5498 = vmul.f32 %v5411, %v5497
    %v5499 = vrcp.pop %v4588
    %v5500 = vmul.f32 %v4588, %v5499
    %v5501 = vsub.f32 1.0, %v5500
    %v5502 = vmul.f32 %v5499, %v5501
    %v5503 = vadd.f32 %v5499, %v5502
    %vm5504 = vweird.f32 %v4588
    %vm5505 = vweird.f32 %v5499
    %vm5506 = vmor %vm5504, %vm5505
    %v5507 = vsel %vm5506, %v5499, %v5503
    %v5508 = vand.u32 2147483647, %v4588
    %vm5509 = vcmp.eq.f32.partialorder %v5508, 8.507059e+37
    %v5510 = vand.u32 %v4588, 2147483648
    %v5511 = vor.u32 1.1754944e-38, %v5510
    %v5512 = vsel %vm5509, %v5511, %v5507
    %v5513 = vmul.f32 %v5415, %v5512
    %v5514 = vrcp.pop %v4590
    %v5515 = vmul.f32 %v4590, %v5514
    %v5516 = vsub.f32 1.0, %v5515
    %v5517 = vmul.f32 %v5514, %v5516
    %v5518 = vadd.f32 %v5514, %v5517
    %vm5519 = vweird.f32 %v4590
    %vm5520 = vweird.f32 %v5514
    %vm5521 = vmor %vm5519, %vm5520
    %v5522 = vsel %vm5521, %v5514, %v5518
    %v5523 = vand.u32 2147483647, %v4590
    %vm5524 = vcmp.eq.f32.partialorder %v5523, 8.507059e+37
    %v5525 = vand.u32 %v4590, 2147483648
    %v5526 = vor.u32 1.1754944e-38, %v5525
    %v5527 = vsel %vm5524, %v5526, %v5522
    %v5528 = vmul.f32 %v5419, %v5527
    %v5529 = vrcp.pop %v4592
    %v5530 = vmul.f32 %v4592, %v5529
    %v5531 = vsub.f32 1.0, %v5530
    %v5532 = vmul.f32 %v5529, %v5531
    %v5533 = vadd.f32 %v5529, %v5532
    %vm5534 = vweird.f32 %v4592
    %vm5535 = vweird.f32 %v5529
    %vm5536 = vmor %vm5534, %vm5535
    %v5537 = vsel %vm5536, %v5529, %v5533
    %v5538 = vand.u32 2147483647, %v4592
    %vm5539 = vcmp.eq.f32.partialorder %v5538, 8.507059e+37
    %v5540 = vand.u32 %v4592, 2147483648
    %v5541 = vor.u32 1.1754944e-38, %v5540
    %v5542 = vsel %vm5539, %v5541, %v5537
    %v5543 = vmul.f32 %v5423, %v5542
    %v5544 = vrcp.pop %v4594
    %v5545 = vmul.f32 %v4594, %v5544
    %v5546 = vsub.f32 1.0, %v5545
    %v5547 = vmul.f32 %v5544, %v5546
    %v5548 = vadd.f32 %v5544, %v5547
    %vm5549 = vweird.f32 %v4594
    %vm5550 = vweird.f32 %v5544
    %vm5551 = vmor %vm5549, %vm5550
    %v5552 = vsel %vm5551, %v5544, %v5548
    %v5553 = vand.u32 2147483647, %v4594
    %vm5554 = vcmp.eq.f32.partialorder %v5553, 8.507059e+37
    %v5555 = vand.u32 %v4594, 2147483648
    %v5556 = vor.u32 1.1754944e-38, %v5555
    %v5557 = vsel %vm5554, %v5556, %v5552
    %v5558 = vmul.f32 %v5427, %v5557
    %v5559 = vrcp.pop %v4596
    %v5560 = vmul.f32 %v4596, %v5559
    %v5561 = vsub.f32 1.0, %v5560
    %v5562 = vmul.f32 %v5559, %v5561
    %v5563 = vadd.f32 %v5559, %v5562
    %vm5564 = vweird.f32 %v4596
    %vm5565 = vweird.f32 %v5559
    %vm5566 = vmor %vm5564, %vm5565
    %v5567 = vsel %vm5566, %v5559, %v5563
    %v5568 = vand.u32 2147483647, %v4596
    %vm5569 = vcmp.eq.f32.partialorder %v5568, 8.507059e+37
    %v5570 = vand.u32 %v4596, 2147483648
    %v5571 = vor.u32 1.1754944e-38, %v5570
    %v5572 = vsel %vm5569, %v5571, %v5567
    %v5573 = vmul.f32 %v5431, %v5572
    %v5574 = vrcp.pop %v4598
    %v5575 = vmul.f32 %v4598, %v5574
    %v5576 = vsub.f32 1.0, %v5575
    %v5577 = vmul.f32 %v5574, %v5576
    %v5578 = vadd.f32 %v5574, %v5577
    %vm5579 = vweird.f32 %v4598
    %vm5580 = vweird.f32 %v5574
    %vm5581 = vmor %vm5579, %vm5580
    %v5582 = vsel %vm5581, %v5574, %v5578
    %v5583 = vand.u32 2147483647, %v4598
    %vm5584 = vcmp.eq.f32.partialorder %v5583, 8.507059e+37
    %v5585 = vand.u32 %v4598, 2147483648
    %v5586 = vor.u32 1.1754944e-38, %v5585
    %v5587 = vsel %vm5584, %v5586, %v5582
    %v5588 = vmul.f32 %v5435, %v5587
    %v5589 = vrcp.pop %v4600
    %v5590 = vmul.f32 %v4600, %v5589
    %v5591 = vsub.f32 1.0, %v5590
    %v5592 = vmul.f32 %v5589, %v5591
    %v5593 = vadd.f32 %v5589, %v5592
    %vm5594 = vweird.f32 %v4600
    %vm5595 = vweird.f32 %v5589
    %vm5596 = vmor %vm5594, %vm5595
    %v5597 = vsel %vm5596, %v5589, %v5593
    %v5598 = vand.u32 2147483647, %v4600
    %vm5599 = vcmp.eq.f32.partialorder %v5598, 8.507059e+37
    %v5600 = vand.u32 %v4600, 2147483648
    %v5601 = vor.u32 1.1754944e-38, %v5600
    %v5602 = vsel %vm5599, %v5601, %v5597
    %v5603 = vmul.f32 %v5439, %v5602
    %v5604 = vrcp.pop %v4602
    %v5605 = vmul.f32 %v4602, %v5604
    %v5606 = vsub.f32 1.0, %v5605
    %v5607 = vmul.f32 %v5604, %v5606
    %v5608 = vadd.f32 %v5604, %v5607
    %vm5609 = vweird.f32 %v4602
    %vm5610 = vweird.f32 %v5604
    %vm5611 = vmor %vm5609, %vm5610
    %v5612 = vsel %vm5611, %v5604, %v5608
    %v5613 = vand.u32 2147483647, %v4602
    %vm5614 = vcmp.eq.f32.partialorder %v5613, 8.507059e+37
    %v5615 = vand.u32 %v4602, 2147483648
    %v5616 = vor.u32 1.1754944e-38, %v5615
    %v5617 = vsel %vm5614, %v5616, %v5612
    %v5618 = vmul.f32 %v5443, %v5617
    %v5619 = vrcp.pop %v4604
    %v5620 = vmul.f32 %v4604, %v5619
    %v5621 = vsub.f32 1.0, %v5620
    %v5622 = vmul.f32 %v5619, %v5621
    %v5623 = vadd.f32 %v5619, %v5622
    %vm5624 = vweird.f32 %v4604
    %vm5625 = vweird.f32 %v5619
    %vm5626 = vmor %vm5624, %vm5625
    %v5627 = vsel %vm5626, %v5619, %v5623
    %v5628 = vand.u32 2147483647, %v4604
    %vm5629 = vcmp.eq.f32.partialorder %v5628, 8.507059e+37
    %v5630 = vand.u32 %v4604, 2147483648
    %v5631 = vor.u32 1.1754944e-38, %v5630
    %v5632 = vsel %vm5629, %v5631, %v5627
    %v5633 = vmul.f32 %v5447, %v5632
    %v5634 = vrcp.pop %v4606
    %v5635 = vmul.f32 %v4606, %v5634
    %v5636 = vsub.f32 1.0, %v5635
    %v5637 = vmul.f32 %v5634, %v5636
    %v5638 = vadd.f32 %v5634, %v5637
    %vm5639 = vweird.f32 %v4606
    %vm5640 = vweird.f32 %v5634
    %vm5641 = vmor %vm5639, %vm5640
    %v5642 = vsel %vm5641, %v5634, %v5638
    %v5643 = vand.u32 2147483647, %v4606
    %vm5644 = vcmp.eq.f32.partialorder %v5643, 8.507059e+37
    %v5645 = vand.u32 %v4606, 2147483648
    %v5646 = vor.u32 1.1754944e-38, %v5645
    %v5647 = vsel %vm5644, %v5646, %v5642
    %v5648 = vmul.f32 %v5451, %v5647
    %v5649 = vrcp.pop %v4608
    %v5650 = vmul.f32 %v4608, %v5649
    %v5651 = vsub.f32 1.0, %v5650
    %v5652 = vmul.f32 %v5649, %v5651
    %v5653 = vadd.f32 %v5649, %v5652
    %vm5654 = vweird.f32 %v4608
    %vm5655 = vweird.f32 %v5649
    %vm5656 = vmor %vm5654, %vm5655
    %v5657 = vsel %vm5656, %v5649, %v5653
    %v5658 = vand.u32 2147483647, %v4608
    %vm5659 = vcmp.eq.f32.partialorder %v5658, 8.507059e+37
    %v5660 = vand.u32 %v4608, 2147483648
    %v5661 = vor.u32 1.1754944e-38, %v5660
    %v5662 = vsel %vm5659, %v5661, %v5657
    %v5663 = vmul.f32 %v5455, %v5662
    %v5664 = vrcp.pop %v4610
    %v5665 = vmul.f32 %v4610, %v5664
    %v5666 = vsub.f32 1.0, %v5665
    %v5667 = vmul.f32 %v5664, %v5666
    %v5668 = vadd.f32 %v5664, %v5667
    %vm5669 = vweird.f32 %v4610
    %vm5670 = vweird.f32 %v5664
    %vm5671 = vmor %vm5669, %vm5670
    %v5672 = vsel %vm5671, %v5664, %v5668
    %v5673 = vand.u32 2147483647, %v4610
    %vm5674 = vcmp.eq.f32.partialorder %v5673, 8.507059e+37
    %v5675 = vand.u32 %v4610, 2147483648
    %v5676 = vor.u32 1.1754944e-38, %v5675
    %v5677 = vsel %vm5674, %v5676, %v5672
    %v5678 = vmul.f32 %v5459, %v5677
    %v5679 = vrcp.pop %v4612
    %v5680 = vmul.f32 %v4612, %v5679
    %v5681 = vsub.f32 1.0, %v5680
    %v5682 = vmul.f32 %v5679, %v5681
    %v5683 = vadd.f32 %v5679, %v5682
    %vm5684 = vweird.f32 %v4612
    %vm5685 = vweird.f32 %v5679
    %vm5686 = vmor %vm5684, %vm5685
    %v5687 = vsel %vm5686, %v5679, %v5683
    %v5688 = vand.u32 2147483647, %v4612
    %vm5689 = vcmp.eq.f32.partialorder %v5688, 8.507059e+37
    %v5690 = vand.u32 %v4612, 2147483648
    %v5691 = vor.u32 1.1754944e-38, %v5690
    %v5692 = vsel %vm5689, %v5691, %v5687
    %v5693 = vmul.f32 %v5463, %v5692
    %v5694 = vrcp.pop %v4614
    %v5695 = vmul.f32 %v4614, %v5694
    %v5696 = vsub.f32 1.0, %v5695
    %v5697 = vmul.f32 %v5694, %v5696
    %v5698 = vadd.f32 %v5694, %v5697
    %vm5699 = vweird.f32 %v4614
    %vm5700 = vweird.f32 %v5694
    %vm5701 = vmor %vm5699, %vm5700
    %v5702 = vsel %vm5701, %v5694, %v5698
    %v5703 = vand.u32 2147483647, %v4614
    %vm5704 = vcmp.eq.f32.partialorder %v5703, 8.507059e+37
    %v5705 = vand.u32 %v4614, 2147483648
    %v5706 = vor.u32 1.1754944e-38, %v5705
    %v5707 = vsel %vm5704, %v5706, %v5702
    %v5708 = vmul.f32 %v5467, %v5707
    %s5709 = scalar_lea.vmem %s2, 128
    %5710 = vst.msk [vmem:[%s5709] sm:$0xff] %vm1425, %v5483
    %5711 = vst.msk [vmem:[%s5709 + $0x8] sm:$0xff] %vm1425, %v5498
    %5712 = vst.msk [vmem:[%s5709 + $0x10] sm:$0xff] %vm1425, %v5513
    %5713 = vst.msk [vmem:[%s5709 + $0x18] sm:$0xff] %vm1425, %v5528
    %5714 = vst.msk [vmem:[%s5709 + $0x20] sm:$0xff] %vm1425, %v5543
    %5715 = vst.msk [vmem:[%s5709 + $0x28] sm:$0xff] %vm1425, %v5558
    %5716 = vst.msk [vmem:[%s5709 + $0x30] sm:$0xff] %vm1425, %v5573
    %5717 = vst.msk [vmem:[%s5709 + $0x38] sm:$0xff] %vm1425, %v5588
    %5718 = vst.msk [vmem:[%s5709 + $0x40] sm:$0xff] %vm1425, %v5603
    %5719 = vst.msk [vmem:[%s5709 + $0x48] sm:$0xff] %vm1425, %v5618
    %5720 = vst.msk [vmem:[%s5709 + $0x50] sm:$0xff] %vm1425, %v5633
    %5721 = vst.msk [vmem:[%s5709 + $0x58] sm:$0xff] %vm1425, %v5648
    %5722 = vst.msk [vmem:[%s5709 + $0x60] sm:$0xff] %vm1425, %v5663
    %5723 = vst.msk [vmem:[%s5709 + $0x68] sm:$0xff] %vm1425, %v5678
    %5724 = vst.msk [vmem:[%s5709 + $0x70] sm:$0xff] %vm1425, %v5693
    %5725 = vst.msk [vmem:[%s5709 + $0x78] sm:$0xff] %vm1425, %v5708
    // Predicated region
    $region14: #{tpu_custom_call.1} parent=1 // pred_check
      _
    $region15: #{tpu_custom_call.1} parent=1 // pred_check_branch
      %5727 = sbr.rel (0) target = $region17
    $region16: #{tpu_custom_call.1} parent=1 // pred_region
      _
    $region17: #{tpu_custom_call.1} parent=1 // pred_fallthru
      _
    // Predicated region
    $region18: #{tpu_custom_call.1} parent=1 // pred_check
      _
    $region19: #{tpu_custom_call.1} parent=1 // pred_check_branch
      %5729 = sbr.rel (0) target = $region21
    $region20: #{tpu_custom_call.1} parent=1 // pred_region
      _
    $region21: #{tpu_custom_call.1} parent=1 // pred_fallthru
      _
    %5730 = vsyncpa [#allocation3], 1

</llo_original>
